<compile_context>
chip_gen: v7x
topology: tpu7x:2x2x1
jax: 0.10.0
libtpu: 0.0.40
codegen_flags: <defaults>
</compile_context>

<pallas_src>
import jax
import jax.numpy as jnp
from jax import lax
from jax.experimental import pallas as pl
from jax.experimental.pallas import tpu as pltpu


def upblock_kernel(x_ref, w_ref, b_ref, idx_ref, out_ref, xpad_ref):
    # x_ref:    (1, H, W, Cin)        input tile (one batch element), compute dtype
    # w_ref:    (3, 3, Cin, Cout)     conv weights (HWIO), compute dtype
    # b_ref:    (1, Cout)             conv bias, f32
    # idx_ref:  (1, H, W, Cout)       max-unpool indices (int32, NHWC)
    # out_ref:  (1, H, 2, W, 2*Cout)  interleaved output, f32:
    #           out_ref[0, i, dh, j, dw*Cout + c] == final[2*i+dh, 2*j+dw, c]
    # xpad_ref: (H+2, W+2, Cin)       VMEM scratch used for in-kernel zero padding
    H, W, Cin = x_ref.shape[1], x_ref.shape[2], x_ref.shape[3]
    Cout = idx_ref.shape[3]

    # ---- in-kernel zero padding (replaces the wrapper-side jnp.pad pass) ----
    xpad_ref[...] = jnp.zeros_like(xpad_ref)
    xpad_ref[1:H + 1, 1:W + 1, :] = x_ref[0]

    # ---- 3x3 conv: 9 clean (H*W, Cin) x (Cin, Cout) MXU matmuls ----
    # kw outer: each sublane-shifted column window is loaded once; the kh
    # slice is on an untiled leading dim of the value (free).
    acc = jnp.zeros((H * W, Cout), jnp.float32)
    for kw in range(3):
        x_kw = xpad_ref[:, kw:kw + W, :]                    # (H+2, W, Cin)
        for kh in range(3):
            patch = x_kw[kh:kh + H].reshape(H * W, Cin)     # (H*W, Cin)
            acc = acc + jnp.dot(patch, w_ref[kh, kw],
                                preferred_element_type=jnp.float32)
    acc = acc + b_ref[...]                                  # bias (1, Cout) broadcast

    # ---- ReLU ----
    y = jnp.maximum(acc, 0.0).reshape(H, W, Cout)

    # ---- MaxUnpool2d(kernel=2, stride=2): per-quadrant masked select, written
    #      directly in interleaved order (no post-kernel permute needed).   ----
    idx = idx_ref[0]                                        # (H, W, Cout)
    row = lax.broadcasted_iota(jnp.int32, (H, W, 1), 0)
    col = lax.broadcasted_iota(jnp.int32, (H, W, 1), 1)
    two_w = 2 * W
    rel = idx - ((2 * row) * two_w + 2 * col)               # in-window offset dh*2W+dw
    for dh in range(2):
        for dw in range(2):
            q = jnp.where(rel == dh * two_w + dw, y, 0.0)   # (H, W, Cout)
            out_ref[0, :, dh, :, dw * Cout:(dw + 1) * Cout] = q


def upblock_forward_nhwc(x_nhwc, w_hwio, bias, idx_nhwc, *,
                         compute_dtype=jnp.bfloat16):
    """NHWC fast path. x: (N, H, W, Cin); w: (3, 3, Cin, Cout); bias: (Cout,);
    idx: (N, H, W, Cout) int32.  Returns (N, 2H, 2W, Cout) f32."""
    N, H, W, Cin = x_nhwc.shape
    Cout = w_hwio.shape[-1]
    assert W % 8 == 0, "W must be a multiple of 8 (sublane tiling)"

    x_c = x_nhwc.astype(compute_dtype)
    w_c = w_hwio.astype(compute_dtype)
    b2d = bias.reshape(1, Cout).astype(jnp.float32)
    idx = idx_nhwc.astype(jnp.int32)

    out_k = pl.pallas_call(
        upblock_kernel,
        out_shape=jax.ShapeDtypeStruct((N, H, 2, W, 2 * Cout), jnp.float32),
        grid_spec=pltpu.PrefetchScalarGridSpec(
            num_scalar_prefetch=0,
            grid=(N,),
            in_specs=[
                pl.BlockSpec((1, H, W, Cin), lambda n: (n, 0, 0, 0)),
                pl.BlockSpec((3, 3, Cin, Cout), lambda n: (0, 0, 0, 0)),
                pl.BlockSpec((1, Cout), lambda n: (0, 0)),
                pl.BlockSpec((1, H, W, Cout), lambda n: (n, 0, 0, 0)),
            ],
            out_specs=pl.BlockSpec((1, H, 2, W, 2 * Cout),
                                   lambda n: (n, 0, 0, 0, 0)),
            scratch_shapes=[pltpu.VMEM((H + 2, W + 2, Cin), compute_dtype)],
        ),
        compiler_params=pltpu.CompilerParams(
            dimension_semantics=("parallel",)),
    )(x_c, w_c, b2d, idx)

    # (N, H, 2, W, 2*Cout) is row-major-identical to (N, 2H, 2W, Cout): the
    # interleave is a contiguous reshape, not a permute.
    return out_k.reshape(N, 2 * H, 2 * W, Cout)


def upblock_forward(x_nchw, weight_oihw, bias, unpool_idx_nchw, *,
                    compute_dtype=jnp.bfloat16):
    """Module-semantics wrapper (NCHW in / NCHW out, like the PyTorch UpBlock).
    x: (N, Cin, H, W) f32; weight: (Cout, Cin, 3, 3); bias: (Cout,);
    unpool_idx: (N, Cout, H, W) int32. Returns (N, Cout, 2H, 2W) f32."""
    x_nhwc = jnp.transpose(x_nchw, (0, 2, 3, 1))
    w_hwio = jnp.transpose(weight_oihw, (2, 3, 1, 0))
    idx_nhwc = jnp.transpose(unpool_idx_nchw, (0, 2, 3, 1))
    out_nhwc = upblock_forward_nhwc(x_nhwc, w_hwio, bias, idx_nhwc,
                                    compute_dtype=compute_dtype)
    # Boundary glue only (PyTorch NCHW convention); drop if downstream is JAX/NHWC.
    return jnp.transpose(out_nhwc, (0, 3, 1, 2))


def reference_forward(x, weight, bias, idx):
    """Pure-JAX reference reproducing the PyTorch semantics (NCHW)."""
    N, Cin, H, W = x.shape
    Cout = weight.shape[0]
    y = lax.conv_general_dilated(
        x, weight, window_strides=(1, 1), padding=((1, 1), (1, 1)),
        dimension_numbers=("NCHW", "OIHW", "NCHW"),
        precision=lax.Precision.HIGHEST) + bias[None, :, None, None]
    y = jnp.maximum(y, 0.0)
    out_flat = jnp.zeros((N, Cout, (2 * H) * (2 * W)), jnp.float32)
    n_i = jnp.arange(N)[:, None, None, None]
    c_i = jnp.arange(Cout)[None, :, None, None]
    out_flat = out_flat.at[n_i, c_i, idx].set(y)
    return out_flat.reshape(N, Cout, 2 * H, 2 * W)


if __name__ == "__main__":
    key = jax.random.PRNGKey(0)
    k_x, k_w, k_b, k_dh, k_dw = jax.random.split(key, 5)

    # Lane-dense demo shapes (Cin = Cout = 128 per the perf review); the
    # kernel itself is shape-generic as long as W is a multiple of 8.
    N, Cin, Cout, H, W = 2, 128, 128, 16, 16      # output spatial = 32x32

    x = jax.random.normal(k_x, (N, Cin, H, W), jnp.float32)
    # Same shapes as nn.Conv2d(inplanes, planes, 3, 1, 1).
    fan_in = Cin * 3 * 3
    weight = jax.random.normal(k_w, (Cout, Cin, 3, 3), jnp.float32) / jnp.sqrt(fan_in)
    bias = jax.random.normal(k_b, (Cout,), jnp.float32) * 0.1

    # Synthetic MaxPool2d(2,2, return_indices=True) indices, as decode.pop()
    # would provide: index within the 2x2 window of the (2H, 2W) output,
    # flattened over the plane.
    i_grid = jnp.arange(H)[None, None, :, None]
    j_grid = jnp.arange(W)[None, None, None, :]
    dh = jax.random.randint(k_dh, (N, Cout, H, W), 0, 2)
    dw = jax.random.randint(k_dw, (N, Cout, H, W), 0, 2)
    unpool_idx = ((2 * i_grid + dh) * (2 * W) + (2 * j_grid + dw)).astype(jnp.int32)

    fwd = jax.jit(upblock_forward)
    out = jax.block_until_ready(fwd(x, weight, bias, unpool_idx))

    # Reference uses the same bf16-rounded x/w so the check isolates kernel
    # correctness from the (intentional, review-requested) bf16 input cast.
    x_q = x.astype(jnp.bfloat16).astype(jnp.float32)
    w_q = weight.astype(jnp.bfloat16).astype(jnp.float32)
    ref = reference_forward(x_q, w_q, bias, unpool_idx)

    assert out.shape == (N, Cout, 2 * H, 2 * W)
    assert out.dtype == jnp.float32
    max_err = float(jnp.max(jnp.abs(out - ref)))
    assert jnp.allclose(out, ref, atol=2e-3, rtol=2e-3), f"mismatch, max err {max_err}"

    print("KERNEL_OK")
</pallas_src>

<mosaic_0001>
module attributes {stable_mosaic.version = 11 : i64} {
  func.func @upblock_kernel(%arg0: i32, %arg1: memref<1x16x16x128xbf16, #tpu.memory_space<vmem>>, %arg2: memref<3x3x128x128xbf16, #tpu.memory_space<vmem>>, %arg3: memref<1x128xf32, #tpu.memory_space<vmem>>, %arg4: memref<1x16x16x128xi32, #tpu.memory_space<vmem>>, %arg5: memref<1x16x2x16x256xf32, #tpu.memory_space<vmem>>, %arg6: memref<18x18x128xbf16, #tpu.memory_space<vmem>>) attributes {dimension_semantics = [#tpu.dimension_semantics<parallel>], iteration_bounds = array<i64: 2>, scalar_prefetch = 0 : i64, scratch_operands = 1 : i64, tpu.core_type = #tpu.core_type<tc>, window_params = [{transform_indices = @transform_0, window_bounds = array<i64: 1, 16, 16, 128>}, {pipeline_mode = #tpu.pipeline_mode<synchronous>, transform_indices = @transform_1, window_bounds = array<i64: 3, 3, 128, 128>}, {pipeline_mode = #tpu.pipeline_mode<synchronous>, transform_indices = @transform_2, window_bounds = array<i64: 1, 128>}, {transform_indices = @transform_3, window_bounds = array<i64: 1, 16, 16, 128>}, {transform_indices = @transform_4, window_bounds = array<i64: 1, 16, 2, 16, 256>}]} {
    %cst = arith.constant 0.000000e+00 : bf16
    %0 = vector.broadcast %cst : bf16 to vector<18x18x128xbf16>
    %c0 = arith.constant 0 : index
    %c0_0 = arith.constant 0 : index
    %c0_1 = arith.constant 0 : index
    %1 = vector.load %arg6[%c0, %c0_0, %c0_1] : memref<18x18x128xbf16, #tpu.memory_space<vmem>>, vector<18x18x128xbf16>
    tpu.vector_store %arg6[%c0, %c0_0, %c0_1], %0 {strides = array<i32>} : memref<18x18x128xbf16, #tpu.memory_space<vmem>>, vector<18x18x128xbf16>,
    %c0_2 = arith.constant 0 : index
    %c0_3 = arith.constant 0 : index
    %c0_4 = arith.constant 0 : index
    %c0_5 = arith.constant 0 : index
    %2 = vector.load %arg1[%c0_2, %c0_3, %c0_4, %c0_5] : memref<1x16x16x128xbf16, #tpu.memory_space<vmem>>, vector<1x16x16x128xbf16>
    %3 = vector.shape_cast %2 : vector<1x16x16x128xbf16> to vector<16x16x128xbf16>
    %c1 = arith.constant 1 : index
    %c1_6 = arith.constant 1 : index
    %c0_7 = arith.constant 0 : index
    %4 = vector.load %arg6[%c1, %c1_6, %c0_7] : memref<18x18x128xbf16, #tpu.memory_space<vmem>>, vector<16x16x128xbf16>
    tpu.vector_store %arg6[%c1, %c1_6, %c0_7], %3 {strides = array<i32>} : memref<18x18x128xbf16, #tpu.memory_space<vmem>>, vector<16x16x128xbf16>,
    %cst_8 = arith.constant 0.000000e+00 : f32
    %5 = vector.broadcast %cst_8 : f32 to vector<256x128xf32>
    %c0_9 = arith.constant 0 : index
    %c0_10 = arith.constant 0 : index
    %c0_11 = arith.constant 0 : index
    %6 = vector.load %arg6[%c0_9, %c0_10, %c0_11] : memref<18x18x128xbf16, #tpu.memory_space<vmem>>, vector<18x16x128xbf16>
    %7 = vector.extract_strided_slice %6 {offsets = [0, 0, 0], sizes = [16, 16, 128], strides = [1, 1, 1]} : vector<18x16x128xbf16> to vector<16x16x128xbf16>
    %8 = vector.shape_cast %7 : vector<16x16x128xbf16> to vector<256x128xbf16>
    %c0_12 = arith.constant 0 : index
    %c0_13 = arith.constant 0 : index
    %c0_14 = arith.constant 0 : index
    %c0_15 = arith.constant 0 : index
    %9 = vector.load %arg2[%c0_12, %c0_13, %c0_14, %c0_15] : memref<3x3x128x128xbf16, #tpu.memory_space<vmem>>, vector<1x1x128x128xbf16>
    %10 = vector.shape_cast %9 : vector<1x1x128x128xbf16> to vector<128x128xbf16>
    %cst_16 = arith.constant dense<0.000000e+00> : vector<256x128xf32>
    %11 = tpu.matmul %8, %10, %cst_16 {dimension_numbers = #tpu.dot_dimension_numbers<[1], [0], [0], [1], [0, 0, 1, 1], [], []>} : vector<256x128xbf16>, vector<128x128xbf16>, vector<256x128xf32> -> vector<256x128xf32>
    %12 = arith.addf %5, %11 : vector<256x128xf32>
    %13 = vector.extract_strided_slice %6 {offsets = [1, 0, 0], sizes = [16, 16, 128], strides = [1, 1, 1]} : vector<18x16x128xbf16> to vector<16x16x128xbf16>
    %14 = vector.shape_cast %13 : vector<16x16x128xbf16> to vector<256x128xbf16>
    %c1_17 = arith.constant 1 : index
    %c0_18 = arith.constant 0 : index
    %c0_19 = arith.constant 0 : index
    %c0_20 = arith.constant 0 : index
    %15 = vector.load %arg2[%c1_17, %c0_18, %c0_19, %c0_20] : memref<3x3x128x128xbf16, #tpu.memory_space<vmem>>, vector<1x1x128x128xbf16>
    %16 = vector.shape_cast %15 : vector<1x1x128x128xbf16> to vector<128x128xbf16>
    %cst_21 = arith.constant dense<0.000000e+00> : vector<256x128xf32>
    %17 = tpu.matmul %14, %16, %cst_21 {dimension_numbers = #tpu.dot_dimension_numbers<[1], [0], [0], [1], [0, 0, 1, 1], [], []>} : vector<256x128xbf16>, vector<128x128xbf16>, vector<256x128xf32> -> vector<256x128xf32>
    %18 = arith.addf %12, %17 : vector<256x128xf32>
    %19 = vector.extract_strided_slice %6 {offsets = [2, 0, 0], sizes = [16, 16, 128], strides = [1, 1, 1]} : vector<18x16x128xbf16> to vector<16x16x128xbf16>
    %20 = vector.shape_cast %19 : vector<16x16x128xbf16> to vector<256x128xbf16>
    %c2 = arith.constant 2 : index
    %c0_22 = arith.constant 0 : index
    %c0_23 = arith.constant 0 : index
    %c0_24 = arith.constant 0 : index
    %21 = vector.load %arg2[%c2, %c0_22, %c0_23, %c0_24] : memref<3x3x128x128xbf16, #tpu.memory_space<vmem>>, vector<1x1x128x128xbf16>
    %22 = vector.shape_cast %21 : vector<1x1x128x128xbf16> to vector<128x128xbf16>
    %cst_25 = arith.constant dense<0.000000e+00> : vector<256x128xf32>
    %23 = tpu.matmul %20, %22, %cst_25 {dimension_numbers = #tpu.dot_dimension_numbers<[1], [0], [0], [1], [0, 0, 1, 1], [], []>} : vector<256x128xbf16>, vector<128x128xbf16>, vector<256x128xf32> -> vector<256x128xf32>
    %24 = arith.addf %18, %23 : vector<256x128xf32>
    %c0_26 = arith.constant 0 : index
    %c1_27 = arith.constant 1 : index
    %c0_28 = arith.constant 0 : index
    %25 = vector.load %arg6[%c0_26, %c1_27, %c0_28] : memref<18x18x128xbf16, #tpu.memory_space<vmem>>, vector<18x16x128xbf16>
    %26 = vector.extract_strided_slice %25 {offsets = [0, 0, 0], sizes = [16, 16, 128], strides = [1, 1, 1]} : vector<18x16x128xbf16> to vector<16x16x128xbf16>
    %27 = vector.shape_cast %26 : vector<16x16x128xbf16> to vector<256x128xbf16>
    %c0_29 = arith.constant 0 : index
    %c1_30 = arith.constant 1 : index
    %c0_31 = arith.constant 0 : index
    %c0_32 = arith.constant 0 : index
    %28 = vector.load %arg2[%c0_29, %c1_30, %c0_31, %c0_32] : memref<3x3x128x128xbf16, #tpu.memory_space<vmem>>, vector<1x1x128x128xbf16>
    %29 = vector.shape_cast %28 : vector<1x1x128x128xbf16> to vector<128x128xbf16>
    %cst_33 = arith.constant dense<0.000000e+00> : vector<256x128xf32>
    %30 = tpu.matmul %27, %29, %cst_33 {dimension_numbers = #tpu.dot_dimension_numbers<[1], [0], [0], [1], [0, 0, 1, 1], [], []>} : vector<256x128xbf16>, vector<128x128xbf16>, vector<256x128xf32> -> vector<256x128xf32>
    %31 = arith.addf %24, %30 : vector<256x128xf32>
    %32 = vector.extract_strided_slice %25 {offsets = [1, 0, 0], sizes = [16, 16, 128], strides = [1, 1, 1]} : vector<18x16x128xbf16> to vector<16x16x128xbf16>
    %33 = vector.shape_cast %32 : vector<16x16x128xbf16> to vector<256x128xbf16>
    %c1_34 = arith.constant 1 : index
    %c1_35 = arith.constant 1 : index
    %c0_36 = arith.constant 0 : index
    %c0_37 = arith.constant 0 : index
    %34 = vector.load %arg2[%c1_34, %c1_35, %c0_36, %c0_37] : memref<3x3x128x128xbf16, #tpu.memory_space<vmem>>, vector<1x1x128x128xbf16>
    %35 = vector.shape_cast %34 : vector<1x1x128x128xbf16> to vector<128x128xbf16>
    %cst_38 = arith.constant dense<0.000000e+00> : vector<256x128xf32>
    %36 = tpu.matmul %33, %35, %cst_38 {dimension_numbers = #tpu.dot_dimension_numbers<[1], [0], [0], [1], [0, 0, 1, 1], [], []>} : vector<256x128xbf16>, vector<128x128xbf16>, vector<256x128xf32> -> vector<256x128xf32>
    %37 = arith.addf %31, %36 : vector<256x128xf32>
    %38 = vector.extract_strided_slice %25 {offsets = [2, 0, 0], sizes = [16, 16, 128], strides = [1, 1, 1]} : vector<18x16x128xbf16> to vector<16x16x128xbf16>
    %39 = vector.shape_cast %38 : vector<16x16x128xbf16> to vector<256x128xbf16>
    %c2_39 = arith.constant 2 : index
    %c1_40 = arith.constant 1 : index
    %c0_41 = arith.constant 0 : index
    %c0_42 = arith.constant 0 : index
    %40 = vector.load %arg2[%c2_39, %c1_40, %c0_41, %c0_42] : memref<3x3x128x128xbf16, #tpu.memory_space<vmem>>, vector<1x1x128x128xbf16>
    %41 = vector.shape_cast %40 : vector<1x1x128x128xbf16> to vector<128x128xbf16>
    %cst_43 = arith.constant dense<0.000000e+00> : vector<256x128xf32>
    %42 = tpu.matmul %39, %41, %cst_43 {dimension_numbers = #tpu.dot_dimension_numbers<[1], [0], [0], [1], [0, 0, 1, 1], [], []>} : vector<256x128xbf16>, vector<128x128xbf16>, vector<256x128xf32> -> vector<256x128xf32>
    %43 = arith.addf %37, %42 : vector<256x128xf32>
    %c0_44 = arith.constant 0 : index
    %c2_45 = arith.constant 2 : index
    %c0_46 = arith.constant 0 : index
    %44 = vector.load %arg6[%c0_44, %c2_45, %c0_46] : memref<18x18x128xbf16, #tpu.memory_space<vmem>>, vector<18x16x128xbf16>
    %45 = vector.extract_strided_slice %44 {offsets = [0, 0, 0], sizes = [16, 16, 128], strides = [1, 1, 1]} : vector<18x16x128xbf16> to vector<16x16x128xbf16>
    %46 = vector.shape_cast %45 : vector<16x16x128xbf16> to vector<256x128xbf16>
    %c0_47 = arith.constant 0 : index
    %c2_48 = arith.constant 2 : index
    %c0_49 = arith.constant 0 : index
    %c0_50 = arith.constant 0 : index
    %47 = vector.load %arg2[%c0_47, %c2_48, %c0_49, %c0_50] : memref<3x3x128x128xbf16, #tpu.memory_space<vmem>>, vector<1x1x128x128xbf16>
    %48 = vector.shape_cast %47 : vector<1x1x128x128xbf16> to vector<128x128xbf16>
    %cst_51 = arith.constant dense<0.000000e+00> : vector<256x128xf32>
    %49 = tpu.matmul %46, %48, %cst_51 {dimension_numbers = #tpu.dot_dimension_numbers<[1], [0], [0], [1], [0, 0, 1, 1], [], []>} : vector<256x128xbf16>, vector<128x128xbf16>, vector<256x128xf32> -> vector<256x128xf32>
    %50 = arith.addf %43, %49 : vector<256x128xf32>
    %51 = vector.extract_strided_slice %44 {offsets = [1, 0, 0], sizes = [16, 16, 128], strides = [1, 1, 1]} : vector<18x16x128xbf16> to vector<16x16x128xbf16>
    %52 = vector.shape_cast %51 : vector<16x16x128xbf16> to vector<256x128xbf16>
    %c1_52 = arith.constant 1 : index
    %c2_53 = arith.constant 2 : index
    %c0_54 = arith.constant 0 : index
    %c0_55 = arith.constant 0 : index
    %53 = vector.load %arg2[%c1_52, %c2_53, %c0_54, %c0_55] : memref<3x3x128x128xbf16, #tpu.memory_space<vmem>>, vector<1x1x128x128xbf16>
    %54 = vector.shape_cast %53 : vector<1x1x128x128xbf16> to vector<128x128xbf16>
    %cst_56 = arith.constant dense<0.000000e+00> : vector<256x128xf32>
    %55 = tpu.matmul %52, %54, %cst_56 {dimension_numbers = #tpu.dot_dimension_numbers<[1], [0], [0], [1], [0, 0, 1, 1], [], []>} : vector<256x128xbf16>, vector<128x128xbf16>, vector<256x128xf32> -> vector<256x128xf32>
    %56 = arith.addf %50, %55 : vector<256x128xf32>
    %57 = vector.extract_strided_slice %44 {offsets = [2, 0, 0], sizes = [16, 16, 128], strides = [1, 1, 1]} : vector<18x16x128xbf16> to vector<16x16x128xbf16>
    %58 = vector.shape_cast %57 : vector<16x16x128xbf16> to vector<256x128xbf16>
    %c2_57 = arith.constant 2 : index
    %c2_58 = arith.constant 2 : index
    %c0_59 = arith.constant 0 : index
    %c0_60 = arith.constant 0 : index
    %59 = vector.load %arg2[%c2_57, %c2_58, %c0_59, %c0_60] : memref<3x3x128x128xbf16, #tpu.memory_space<vmem>>, vector<1x1x128x128xbf16>
    %60 = vector.shape_cast %59 : vector<1x1x128x128xbf16> to vector<128x128xbf16>
    %cst_61 = arith.constant dense<0.000000e+00> : vector<256x128xf32>
    %61 = tpu.matmul %58, %60, %cst_61 {dimension_numbers = #tpu.dot_dimension_numbers<[1], [0], [0], [1], [0, 0, 1, 1], [], []>} : vector<256x128xbf16>, vector<128x128xbf16>, vector<256x128xf32> -> vector<256x128xf32>
    %62 = arith.addf %56, %61 : vector<256x128xf32>
    %c0_62 = arith.constant 0 : index
    %c0_63 = arith.constant 0 : index
    %63 = vector.load %arg3[%c0_62, %c0_63] : memref<1x128xf32, #tpu.memory_space<vmem>>, vector<1x128xf32>
    %64 = vector.broadcast %63 : vector<1x128xf32> to vector<256x128xf32>
    %65 = arith.addf %62, %64 : vector<256x128xf32>
    %cst_64 = arith.constant 0.000000e+00 : f32
    %66 = vector.broadcast %cst_64 : f32 to vector<256x128xf32>
    %67 = arith.maximumf %65, %66 : vector<256x128xf32>
    %68 = vector.shape_cast %67 : vector<256x128xf32> to vector<16x16x128xf32>
    %c0_65 = arith.constant 0 : index
    %c0_66 = arith.constant 0 : index
    %c0_67 = arith.constant 0 : index
    %c0_68 = arith.constant 0 : index
    %69 = vector.load %arg4[%c0_65, %c0_66, %c0_67, %c0_68] : memref<1x16x16x128xi32, #tpu.memory_space<vmem>>, vector<1x16x16x128xi32>
    %70 = vector.shape_cast %69 : vector<1x16x16x128xi32> to vector<16x16x128xi32>
    %71 = tpu.iota {dimensions = array<i32: 0>} : vector<16x16x1xi32>
    %72 = tpu.iota {dimensions = array<i32: 1>} : vector<16x16x1xi32>
    %c2_i32 = arith.constant 2 : i32
    %73 = vector.broadcast %c2_i32 : i32 to vector<16x16x1xi32>
    %74 = arith.muli %73, %71 : vector<16x16x1xi32>
    %c32_i32 = arith.constant 32 : i32
    %75 = vector.broadcast %c32_i32 : i32 to vector<16x16x1xi32>
    %76 = arith.muli %74, %75 : vector<16x16x1xi32>
    %c2_i32_69 = arith.constant 2 : i32
    %77 = vector.broadcast %c2_i32_69 : i32 to vector<16x16x1xi32>
    %78 = arith.muli %77, %72 : vector<16x16x1xi32>
    %79 = arith.addi %76, %78 : vector<16x16x1xi32>
    %80 = vector.broadcast %79 : vector<16x16x1xi32> to vector<16x16x128xi32>
    %81 = arith.subi %70, %80 : vector<16x16x128xi32>
    %c0_i32 = arith.constant 0 : i32
    %82 = vector.broadcast %c0_i32 : i32 to vector<16x16x128xi32>
    %83 = arith.cmpi eq, %81, %82 : vector<16x16x128xi32>
    %cst_70 = arith.constant 0.000000e+00 : f32
    %84 = vector.broadcast %cst_70 : f32 to vector<16x16x128xf32>
    %85 = arith.select %83, %68, %84 : vector<16x16x128xi1>, vector<16x16x128xf32>
    %c0_71 = arith.constant 0 : index
    %c0_72 = arith.constant 0 : index
    %c0_73 = arith.constant 0 : index
    %c0_74 = arith.constant 0 : index
    %c0_75 = arith.constant 0 : index
    %86 = vector.load %arg5[%c0_71, %c0_72, %c0_73, %c0_74, %c0_75] : memref<1x16x2x16x256xf32, #tpu.memory_space<vmem>>, vector<1x16x1x16x128xf32>
    %87 = vector.shape_cast %86 : vector<1x16x1x16x128xf32> to vector<16x16x128xf32>
    %88 = vector.shape_cast %85 : vector<16x16x128xf32> to vector<1x16x1x16x128xf32>
    tpu.vector_store %arg5[%c0_71, %c0_72, %c0_73, %c0_74, %c0_75], %88 {strides = array<i32>} : memref<1x16x2x16x256xf32, #tpu.memory_space<vmem>>, vector<1x16x1x16x128xf32>,
    %c1_i32 = arith.constant 1 : i32
    %89 = vector.broadcast %c1_i32 : i32 to vector<16x16x128xi32>
    %90 = arith.cmpi eq, %81, %89 : vector<16x16x128xi32>
    %cst_76 = arith.constant 0.000000e+00 : f32
    %91 = vector.broadcast %cst_76 : f32 to vector<16x16x128xf32>
    %92 = arith.select %90, %68, %91 : vector<16x16x128xi1>, vector<16x16x128xf32>
    %c0_77 = arith.constant 0 : index
    %c0_78 = arith.constant 0 : index
    %c0_79 = arith.constant 0 : index
    %c0_80 = arith.constant 0 : index
    %c128 = arith.constant 128 : index
    %93 = vector.load %arg5[%c0_77, %c0_78, %c0_79, %c0_80, %c128] : memref<1x16x2x16x256xf32, #tpu.memory_space<vmem>>, vector<1x16x1x16x128xf32>
    %94 = vector.shape_cast %93 : vector<1x16x1x16x128xf32> to vector<16x16x128xf32>
    %95 = vector.shape_cast %92 : vector<16x16x128xf32> to vector<1x16x1x16x128xf32>
    tpu.vector_store %arg5[%c0_77, %c0_78, %c0_79, %c0_80, %c128], %95 {strides = array<i32>} : memref<1x16x2x16x256xf32, #tpu.memory_space<vmem>>, vector<1x16x1x16x128xf32>,
    %c32_i32_81 = arith.constant 32 : i32
    %96 = vector.broadcast %c32_i32_81 : i32 to vector<16x16x128xi32>
    %97 = arith.cmpi eq, %81, %96 : vector<16x16x128xi32>
    %cst_82 = arith.constant 0.000000e+00 : f32
    %98 = vector.broadcast %cst_82 : f32 to vector<16x16x128xf32>
    %99 = arith.select %97, %68, %98 : vector<16x16x128xi1>, vector<16x16x128xf32>
    %c0_83 = arith.constant 0 : index
    %c0_84 = arith.constant 0 : index
    %c1_85 = arith.constant 1 : index
    %c0_86 = arith.constant 0 : index
    %c0_87 = arith.constant 0 : index
    %100 = vector.load %arg5[%c0_83, %c0_84, %c1_85, %c0_86, %c0_87] : memref<1x16x2x16x256xf32, #tpu.memory_space<vmem>>, vector<1x16x1x16x128xf32>
    %101 = vector.shape_cast %100 : vector<1x16x1x16x128xf32> to vector<16x16x128xf32>
    %102 = vector.shape_cast %99 : vector<16x16x128xf32> to vector<1x16x1x16x128xf32>
    tpu.vector_store %arg5[%c0_83, %c0_84, %c1_85, %c0_86, %c0_87], %102 {strides = array<i32>} : memref<1x16x2x16x256xf32, #tpu.memory_space<vmem>>, vector<1x16x1x16x128xf32>,
    %c33_i32 = arith.constant 33 : i32
    %103 = vector.broadcast %c33_i32 : i32 to vector<16x16x128xi32>
    %104 = arith.cmpi eq, %81, %103 : vector<16x16x128xi32>
    %cst_88 = arith.constant 0.000000e+00 : f32
    %105 = vector.broadcast %cst_88 : f32 to vector<16x16x128xf32>
    %106 = arith.select %104, %68, %105 : vector<16x16x128xi1>, vector<16x16x128xf32>
    %c0_89 = arith.constant 0 : index
    %c0_90 = arith.constant 0 : index
    %c1_91 = arith.constant 1 : index
    %c0_92 = arith.constant 0 : index
    %c128_93 = arith.constant 128 : index
    %107 = vector.load %arg5[%c0_89, %c0_90, %c1_91, %c0_92, %c128_93] : memref<1x16x2x16x256xf32, #tpu.memory_space<vmem>>, vector<1x16x1x16x128xf32>
    %108 = vector.shape_cast %107 : vector<1x16x1x16x128xf32> to vector<16x16x128xf32>
    %109 = vector.shape_cast %106 : vector<16x16x128xf32> to vector<1x16x1x16x128xf32>
    tpu.vector_store %arg5[%c0_89, %c0_90, %c1_91, %c0_92, %c128_93], %109 {strides = array<i32>} : memref<1x16x2x16x256xf32, #tpu.memory_space<vmem>>, vector<1x16x1x16x128xf32>,
    return
  }
  func.func @transform_0(%arg0: i32) -> (i32, i32, i32, i32) {
    %c0_i32 = arith.constant 0 : i32
    %c0_i32_0 = arith.constant 0 : i32
    %c0_i32_1 = arith.constant 0 : i32
    %c0_i32_2 = arith.constant 0 : i32
    return %arg0, %c0_i32, %c0_i32_0, %c0_i32_1 : i32, i32, i32, i32
  }
  func.func @transform_1(%arg0: i32) -> (i32, i32, i32, i32) {
    %c0_i32 = arith.constant 0 : i32
    %c0_i32_0 = arith.constant 0 : i32
    %c0_i32_1 = arith.constant 0 : i32
    %c0_i32_2 = arith.constant 0 : i32
    %c0_i32_3 = arith.constant 0 : i32
    return %c0_i32, %c0_i32_0, %c0_i32_1, %c0_i32_2 : i32, i32, i32, i32
  }
  func.func @transform_2(%arg0: i32) -> (i32, i32) {
    %c0_i32 = arith.constant 0 : i32
    %c0_i32_0 = arith.constant 0 : i32
    %c0_i32_1 = arith.constant 0 : i32
    return %c0_i32, %c0_i32_0 : i32, i32
  }
  func.func @transform_3(%arg0: i32) -> (i32, i32, i32, i32) {
    %c0_i32 = arith.constant 0 : i32
    %c0_i32_0 = arith.constant 0 : i32
    %c0_i32_1 = arith.constant 0 : i32
    %c0_i32_2 = arith.constant 0 : i32
    return %arg0, %c0_i32, %c0_i32_0, %c0_i32_1 : i32, i32, i32, i32
  }
  func.func @transform_4(%arg0: i32) -> (i32, i32, i32, i32, i32) {
    %c0_i32 = arith.constant 0 : i32
    %c0_i32_0 = arith.constant 0 : i32
    %c0_i32_1 = arith.constant 0 : i32
    %c0_i32_2 = arith.constant 0 : i32
    %c0_i32_3 = arith.constant 0 : i32
    return %arg0, %c0_i32, %c0_i32_0, %c0_i32_1, %c0_i32_2 : i32, i32, i32, i32, i32
  }
}

</mosaic_0001>

<llo_original>
// kernel: upblock_forward.1
$region0: #{upblock_forward.1}
  #allocation0 [shape = 'u32[]', space=smem, size = 0x4, offset = 0x4, fixed_abs, tag = 'smem constant byte address 0x4 - core index']
  #allocation1 [shape = 'u32[144,128]{1,0:T(1,128)}', space=vmem, size = 0x12000, scoped, tag = 'internal scratch']
  #allocation2 [shape = 'bf16[18,18,128]{2,1,0:T(8,128)(2,1)}', space=vmem, size = 0x1b000, scoped, tag = 'scratch operand']
  %s0 = inlined_call_operand.vmem [shape: bf16[2,16,16,128], index: 0, kind: input, shape index: {}]
  %s1 = inlined_call_operand.vmem [shape: bf16[3,3,128,128], index: 1, kind: input, shape index: {}]
  %s2 = inlined_call_operand.vmem [shape: f32[1,128], index: 2, kind: input, shape index: {}]
  %s3 = inlined_call_operand.vmem [shape: s32[2,16,16,128], index: 3, kind: input, shape index: {}]
  %s4 = inlined_call_operand.vmem [shape: f32[2,16,2,16,256], index: 4, kind: output, shape index: {}]
  %s5 = sld [smem:[#allocation0]]
  $region49: #{upblock_forward.1} parent=0
    _
  %s7 = ssub.s32 1, %s5
  %s8 = scalar_select 0, %s7, %s5
  loop: start=0, step=1, limit=4
  $region2: #{upblock_forward.1} parent=0 // loop_pre_header
    _
  $region3: #{upblock_forward.1} parent=0 // loop_header
    %s10 = sphi 0, %s14
    %p11 = scmp.ge.s32.totalorder %s10, 4
    %s20 = sphi 0, %s22
    %s23 = sphi 0, %s20
    %s24 = sphi 0, %s23
    %s40 = sphi 0, %s24
    %s44 = sphi 0, %s44
    %s46 = sphi 0, %s44
    %s47 = sphi 0, %s46
    %s61 = sphi 0, %s47
    %s65 = sphi 0, %s65
    %s67 = sphi 0, %s65
    %s68 = sphi 0, %s67
    %s82 = sphi 0, %s68
    %s88 = sphi 0, %s90
    %s91 = sphi 0, %s88
    %s92 = sphi 0, %s91
    %s108 = sphi 0, %s92
    %s114 = sphi 0, %s116
    %s117 = sphi 0, %s114
    %s118 = sphi 0, %s117
    %s134 = sphi 0, %s118
  $region4: #{upblock_forward.1} parent=0 // loop_header_branch
    %13 = sbr.rel (%p11) target = $region8
  $region5: #{upblock_forward.1} parent=0 // loop_body
    %s15 = ssub.s32 %s10, 1
    %s16 = ssub.s32 %s10, 2
    %s17 = sadd.s32 %s10, 1
    %s18 = ssub.s32 %s10, %s17
    %p19 = scmp.eq.s32.totalorder %s18, 0
    %s21 = sadd.s32 %s20, 1
    %s22 = scalar_select %p19, %s20, %s21
    %p25 = pneg %p19
    %p26 = scmp.eq.s32.totalorder %s10, 1
    %p27 = por %p25, %p26
    %p28 = scmp.ne.s32.totalorder %s20, %s23
    %p29 = scmp.eq.s32.totalorder %s10, 0
    %p30 = por %p28, %p29
    %p31 = scmp.ne.s32.totalorder %s20, %s23
    %p32 = scmp.eq.s32.totalorder %s15, 1
    %p33 = por %p31, %p32
    %p34 = scmp.ne.s32.totalorder %s23, %s24
    %p35 = scmp.eq.s32.totalorder %s15, 0
    %p36 = por %p34, %p35
    %p37 = scmp.ne.s32.totalorder %s23, %s24
    %p38 = scmp.eq.s32.totalorder %s16, 1
    %p39 = por %p37, %p38
    %p41 = scmp.ne.s32.totalorder %s24, %s40
    %p42 = scmp.eq.s32.totalorder %s16, 0
    %p43 = por %p41, %p42
    %s45 = sadd.s32 %s44, 1
    %p48 = scmp.eq.s32.totalorder %s10, 1
    %p49 = scmp.ne.s32.totalorder %s44, %s46
    %p50 = scmp.eq.s32.totalorder %s10, 0
    %p51 = por %p49, %p50
    %p52 = scmp.ne.s32.totalorder %s44, %s46
    %p53 = scmp.eq.s32.totalorder %s15, 1
    %p54 = por %p52, %p53
    %p55 = scmp.ne.s32.totalorder %s46, %s47
    %p56 = scmp.eq.s32.totalorder %s15, 0
    %p57 = por %p55, %p56
    %p58 = scmp.ne.s32.totalorder %s46, %s47
    %p59 = scmp.eq.s32.totalorder %s16, 1
    %p60 = por %p58, %p59
    %p62 = scmp.ne.s32.totalorder %s47, %s61
    %p63 = scmp.eq.s32.totalorder %s16, 0
    %p64 = por %p62, %p63
    %s66 = sadd.s32 %s65, 1
    %p69 = scmp.eq.s32.totalorder %s10, 1
    %p70 = scmp.ne.s32.totalorder %s65, %s67
    %p71 = scmp.eq.s32.totalorder %s10, 0
    %p72 = por %p70, %p71
    %p73 = scmp.ne.s32.totalorder %s65, %s67
    %p74 = scmp.eq.s32.totalorder %s15, 1
    %p75 = por %p73, %p74
    %p76 = scmp.ne.s32.totalorder %s67, %s68
    %p77 = scmp.eq.s32.totalorder %s15, 0
    %p78 = por %p76, %p77
    %p79 = scmp.ne.s32.totalorder %s67, %s68
    %p80 = scmp.eq.s32.totalorder %s16, 1
    %p81 = por %p79, %p80
    %p83 = scmp.ne.s32.totalorder %s68, %s82
    %p84 = scmp.eq.s32.totalorder %s16, 0
    %p85 = por %p83, %p84
    %s86 = ssub.s32 %s10, %s17
    %p87 = scmp.eq.s32.totalorder %s86, 0
    %s89 = sadd.s32 %s88, 1
    %s90 = scalar_select %p87, %s88, %s89
    %p93 = pneg %p87
    %p94 = scmp.eq.s32.totalorder %s10, 1
    %p95 = por %p93, %p94
    %p96 = scmp.ne.s32.totalorder %s88, %s91
    %p97 = scmp.eq.s32.totalorder %s10, 0
    %p98 = por %p96, %p97
    %p99 = scmp.ne.s32.totalorder %s88, %s91
    %p100 = scmp.eq.s32.totalorder %s15, 1
    %p101 = por %p99, %p100
    %p102 = scmp.ne.s32.totalorder %s91, %s92
    %p103 = scmp.eq.s32.totalorder %s15, 0
    %p104 = por %p102, %p103
    %p105 = scmp.ne.s32.totalorder %s91, %s92
    %p106 = scmp.eq.s32.totalorder %s16, 1
    %p107 = por %p105, %p106
    %p109 = scmp.ne.s32.totalorder %s92, %s108
    %p110 = scmp.eq.s32.totalorder %s16, 0
    %p111 = por %p109, %p110
    %s112 = ssub.s32 %s10, %s17
    %p113 = scmp.eq.s32.totalorder %s112, 0
    %s115 = sadd.s32 %s114, 1
    %s116 = scalar_select %p113, %s114, %s115
    %p119 = pneg %p113
    %p120 = scmp.eq.s32.totalorder %s10, 1
    %p121 = por %p119, %p120
    %p122 = scmp.ne.s32.totalorder %s114, %s117
    %p123 = scmp.eq.s32.totalorder %s10, 0
    %p124 = por %p122, %p123
    %p125 = scmp.ne.s32.totalorder %s114, %s117
    %p126 = scmp.eq.s32.totalorder %s15, 1
    %p127 = por %p125, %p126
    %p128 = scmp.ne.s32.totalorder %s117, %s118
    %p129 = scmp.eq.s32.totalorder %s15, 0
    %p130 = por %p128, %p129
    %p131 = scmp.ne.s32.totalorder %s117, %s118
    %p132 = scmp.eq.s32.totalorder %s16, 1
    %p133 = por %p131, %p132
    %p135 = scmp.ne.s32.totalorder %s118, %s134
    %p136 = scmp.eq.s32.totalorder %s16, 0
    %p137 = por %p135, %p136
    %p138 = scmp.le.s32.totalorder 1, %s10
    %p139 = scmp.lt.s32.totalorder %s10, 3
    %p140 = pnand %p138, %p139
    %p141 = pneg %p140
    // Predicated region
    $region9: #{upblock_forward.1} parent=5 // pred_check
      _
    $region10: #{upblock_forward.1} parent=5 // pred_check_branch
      %143 = sbr.rel (%p140) target = $region12
    $region11: #{upblock_forward.1} parent=5 // pred_region
      %s144 = ssub.s32 %s10, 1
      // Predicated region
      $region13: #{upblock_forward.1} parent=11 // pred_check
        %p145 = pneg %p57
      $region14: #{upblock_forward.1} parent=11 // pred_check_branch
        %147 = sbr.rel (%p145) target = $region16
      $region15: #{upblock_forward.1} parent=11 // pred_region
        _
      $region16: #{upblock_forward.1} parent=11 // pred_fallthru
        _
      // Predicated region
      $region17: #{upblock_forward.1} parent=11 // pred_check
        %p148 = pneg %p78
      $region18: #{upblock_forward.1} parent=11 // pred_check_branch
        %150 = sbr.rel (%p148) target = $region20
      $region19: #{upblock_forward.1} parent=11 // pred_region
        _
      $region20: #{upblock_forward.1} parent=11 // pred_fallthru
        _
    $region12: #{upblock_forward.1} parent=5 // pred_fallthru
      _
    %p151 = scmp.lt.s32.totalorder %s10, 2
    // Predicated region
    $region21: #{upblock_forward.1} parent=5 // pred_check
      %p152 = pneg %p151
    $region22: #{upblock_forward.1} parent=5 // pred_check_branch
      %154 = sbr.rel (%p152) target = $region24
    $region23: #{upblock_forward.1} parent=5 // pred_region
      // Predicated region
      $region25: #{upblock_forward.1} parent=23 // pred_check
        %p155 = pneg %p30
      $region26: #{upblock_forward.1} parent=23 // pred_check_branch
        %157 = sbr.rel (%p155) target = $region28
      $region27: #{upblock_forward.1} parent=23 // pred_region
        %p158 = scmp.lt.s32.totalorder %s10, 1
        %s159 = scalar_select %p158, %s10, 1
        %s160 = smul.addr %s159, 32
        %s161 = smul.addr %s160, 4
        %s162 = scalar_lea.vmem %s0, %s161
      $region28: #{upblock_forward.1} parent=23 // pred_fallthru
        _
      // Predicated region
      $region29: #{upblock_forward.1} parent=23 // pred_check
        %p163 = pneg %p98
      $region30: #{upblock_forward.1} parent=23 // pred_check_branch
        %165 = sbr.rel (%p163) target = $region32
      $region31: #{upblock_forward.1} parent=23 // pred_region
        %p166 = scmp.lt.s32.totalorder %s10, 1
        %s167 = scalar_select %p166, %s10, 1
        %s168 = smul.addr %s167, 32
        %s169 = smul.addr %s168, 8
        %s170 = scalar_lea.vmem %s3, %s169
      $region32: #{upblock_forward.1} parent=23 // pred_fallthru
        _
    $region24: #{upblock_forward.1} parent=5 // pred_fallthru
      _
    %p171 = scmp.le.s32.totalorder 1, %s10
    %p172 = scmp.lt.s32.totalorder %s10, 3
    %p173 = pnand %p171, %p172
    %p174 = pneg %p173
    // Predicated region
    $region33: #{upblock_forward.1} parent=5 // pred_check
      _
    $region34: #{upblock_forward.1} parent=5 // pred_check_branch
      %176 = sbr.rel (%p173) target = $region36
    $region35: #{upblock_forward.1} parent=5 // pred_region
      %s177 = ssub.s32 %s10, 1
      %p178 = scmp.lt.s32.totalorder %s15, 1
      %s179 = scalar_select %p178, %s15, 1
      %s180 = smul.addr %s179, 32
      %s181 = smul.addr %s180, 4
      %s182 = scalar_lea.vmem %s0, %s181
      %p183 = pneg %p36
      %p184 = pneg %p33
      %p185 = pneg %p57
      %p186 = pneg %p54
      %p187 = pneg %p78
      %p188 = pneg %p75
      %p189 = scmp.lt.s32.totalorder %s15, 1
      %s190 = scalar_select %p189, %s15, 1
      %s191 = smul.addr %s190, 32
      %s192 = smul.addr %s191, 8
      %s193 = scalar_lea.vmem %s3, %s192
      %p194 = pneg %p104
      %p195 = pneg %p101
      %p196 = pneg %p130
      %p197 = pneg %p127
      %p198 = scmp.lt.s32.totalorder %s15, 1
      %s199 = scalar_select %p198, %s15, 1
      %s200 = smul.addr %s199, 128
      %s201 = smul.addr %s200, 8
      %s202 = scalar_lea.vmem %s4, %s201
      %p203 = scmp.lt.s32.totalorder %s15, 1
      %s204 = scalar_select %p203, %s15, 1
      %s205 = smul.addr %s204, 32
      %s206 = smul.addr %s205, 4
      %s207 = scalar_lea.vmem %s0, %s206
      %p208 = scmp.lt.s32.totalorder %s15, 1
      %s209 = scalar_select %p208, %s15, 1
      %s210 = smul.addr %s209, 32
      %s211 = smul.addr %s210, 8
      %s212 = scalar_lea.vmem %s3, %s211
      %p213 = scmp.lt.s32.totalorder %s15, 1
      %s214 = scalar_select %p213, %s15, 1
      %s215 = smul.addr %s214, 128
      %s216 = smul.addr %s215, 8
      %s217 = scalar_lea.vmem %s4, %s216
      %219 = vst [vmem:[#allocation2] sm:$0xf] 0
      %220 = vst [vmem:[#allocation2 + $0x4] sm:$0xf] 0
      %221 = vst [vmem:[#allocation2 + $0x8] sm:$0x1] 0
      %222 = vst [vmem:[#allocation2 + $0xc] sm:$0xf] 0
      %223 = vst [vmem:[#allocation2 + $0x10] sm:$0xf] 0
      %224 = vst [vmem:[#allocation2 + $0x14] sm:$0x1] 0
      %225 = vst [vmem:[#allocation2 + $0x18] sm:$0xf] 0
      %226 = vst [vmem:[#allocation2 + $0x1c] sm:$0xf] 0
      %227 = vst [vmem:[#allocation2 + $0x20] sm:$0x1] 0
      %228 = vst [vmem:[#allocation2 + $0x24] sm:$0xf] 0
      %229 = vst [vmem:[#allocation2 + $0x28] sm:$0xf] 0
      %230 = vst [vmem:[#allocation2 + $0x2c] sm:$0x1] 0
      %231 = vst [vmem:[#allocation2 + $0x30] sm:$0xf] 0
      %232 = vst [vmem:[#allocation2 + $0x34] sm:$0xf] 0
      %233 = vst [vmem:[#allocation2 + $0x38] sm:$0x1] 0
      %234 = vst [vmem:[#allocation2 + $0x3c] sm:$0xf] 0
      %235 = vst [vmem:[#allocation2 + $0x40] sm:$0xf] 0
      %236 = vst [vmem:[#allocation2 + $0x44] sm:$0x1] 0
      %237 = vst [vmem:[#allocation2 + $0x48] sm:$0xf] 0
      %238 = vst [vmem:[#allocation2 + $0x4c] sm:$0xf] 0
      %239 = vst [vmem:[#allocation2 + $0x50] sm:$0x1] 0
      %240 = vst [vmem:[#allocation2 + $0x54] sm:$0xf] 0
      %241 = vst [vmem:[#allocation2 + $0x58] sm:$0xf] 0
      %242 = vst [vmem:[#allocation2 + $0x5c] sm:$0x1] 0
      %243 = vst [vmem:[#allocation2 + $0x60] sm:$0xf] 0
      %244 = vst [vmem:[#allocation2 + $0x64] sm:$0xf] 0
      %245 = vst [vmem:[#allocation2 + $0x68] sm:$0x1] 0
      %246 = vst [vmem:[#allocation2 + $0x6c] sm:$0xf] 0
      %247 = vst [vmem:[#allocation2 + $0x70] sm:$0xf] 0
      %248 = vst [vmem:[#allocation2 + $0x74] sm:$0x1] 0
      %249 = vst [vmem:[#allocation2 + $0x78] sm:$0xf] 0
      %250 = vst [vmem:[#allocation2 + $0x7c] sm:$0xf] 0
      %251 = vst [vmem:[#allocation2 + $0x80] sm:$0x1] 0
      %252 = vst [vmem:[#allocation2 + $0x84] sm:$0xf] 0
      %253 = vst [vmem:[#allocation2 + $0x88] sm:$0xf] 0
      %254 = vst [vmem:[#allocation2 + $0x8c] sm:$0x1] 0
      %255 = vst [vmem:[#allocation2 + $0x90] sm:$0xf] 0
      %256 = vst [vmem:[#allocation2 + $0x94] sm:$0xf] 0
      %257 = vst [vmem:[#allocation2 + $0x98] sm:$0x1] 0
      %258 = vst [vmem:[#allocation2 + $0x9c] sm:$0xf] 0
      %259 = vst [vmem:[#allocation2 + $0xa0] sm:$0xf] 0
      %260 = vst [vmem:[#allocation2 + $0xa4] sm:$0x1] 0
      %261 = vst [vmem:[#allocation2 + $0xa8] sm:$0xf] 0
      %262 = vst [vmem:[#allocation2 + $0xac] sm:$0xf] 0
      %263 = vst [vmem:[#allocation2 + $0xb0] sm:$0x1] 0
      %264 = vst [vmem:[#allocation2 + $0xb4] sm:$0xf] 0
      %265 = vst [vmem:[#allocation2 + $0xb8] sm:$0xf] 0
      %266 = vst [vmem:[#allocation2 + $0xbc] sm:$0x1] 0
      %267 = vst [vmem:[#allocation2 + $0xc0] sm:$0xf] 0
      %268 = vst [vmem:[#allocation2 + $0xc4] sm:$0xf] 0
      %269 = vst [vmem:[#allocation2 + $0xc8] sm:$0x1] 0
      %270 = vst [vmem:[#allocation2 + $0xcc] sm:$0xf] 0
      %271 = vst [vmem:[#allocation2 + $0xd0] sm:$0xf] 0
      %272 = vst [vmem:[#allocation2 + $0xd4] sm:$0x1] 0
      %v273 = vld [vmem:[%s207] sm:$0xf]
      %v274 = vld [vmem:[%s207 + $0x4] sm:$0xf]
      %v275 = vld [vmem:[%s207 + $0x8] sm:$0xf]
      %v276 = vld [vmem:[%s207 + $0xc] sm:$0xf]
      %v277 = vld [vmem:[%s207 + $0x10] sm:$0xf]
      %v278 = vld [vmem:[%s207 + $0x14] sm:$0xf]
      %v279 = vld [vmem:[%s207 + $0x18] sm:$0xf]
      %v280 = vld [vmem:[%s207 + $0x1c] sm:$0xf]
      %v281 = vld [vmem:[%s207 + $0x20] sm:$0xf]
      %v282 = vld [vmem:[%s207 + $0x24] sm:$0xf]
      %v283 = vld [vmem:[%s207 + $0x28] sm:$0xf]
      %v284 = vld [vmem:[%s207 + $0x2c] sm:$0xf]
      %v285 = vld [vmem:[%s207 + $0x30] sm:$0xf]
      %v286 = vld [vmem:[%s207 + $0x34] sm:$0xf]
      %v287 = vld [vmem:[%s207 + $0x38] sm:$0xf]
      %v288 = vld [vmem:[%s207 + $0x3c] sm:$0xf]
      %v289 = vld [vmem:[%s207 + $0x40] sm:$0xf]
      %v290 = vld [vmem:[%s207 + $0x44] sm:$0xf]
      %v291 = vld [vmem:[%s207 + $0x48] sm:$0xf]
      %v292 = vld [vmem:[%s207 + $0x4c] sm:$0xf]
      %v293 = vld [vmem:[%s207 + $0x50] sm:$0xf]
      %v294 = vld [vmem:[%s207 + $0x54] sm:$0xf]
      %v295 = vld [vmem:[%s207 + $0x58] sm:$0xf]
      %v296 = vld [vmem:[%s207 + $0x5c] sm:$0xf]
      %v297 = vld [vmem:[%s207 + $0x60] sm:$0xf]
      %v298 = vld [vmem:[%s207 + $0x64] sm:$0xf]
      %v299 = vld [vmem:[%s207 + $0x68] sm:$0xf]
      %v300 = vld [vmem:[%s207 + $0x6c] sm:$0xf]
      %v301 = vld [vmem:[%s207 + $0x70] sm:$0xf]
      %v302 = vld [vmem:[%s207 + $0x74] sm:$0xf]
      %v303 = vld [vmem:[%s207 + $0x78] sm:$0xf]
      %v304 = vld [vmem:[%s207 + $0x7c] sm:$0xf]
      %vm305 = vsmask.f32 256
      %vm306 = vsmask.f32 4368
      %vm307 = vmor %vm305, %vm306
      %v309 = vshrl.u32 %v273, 16
      %v311 = vrot.slane %v309, 7
      %v312 = vshll.u32 %v273, 16
      %v314 = vor.u32 %v311, %v312
      %v315 = vrot.slane %v311, 4
      %v317 = vshrl.u32 %v274, 16
      %v319 = vrot.slane %v317, 7
      %v320 = vshll.u32 %v274, 16
      %v322 = vor.u32 %v319, %v320
      %v323 = vsel %vm307, %v315, %v322
      %v324 = vrot.slane %v319, 4
      %v326 = vshrl.u32 %v275, 16
      %v328 = vrot.slane %v326, 7
      %v329 = vshll.u32 %v275, 16
      %v331 = vor.u32 %v328, %v329
      %v332 = vrot.slane %v328, 4
      %v334 = vshrl.u32 %v276, 16
      %v336 = vrot.slane %v334, 7
      %v337 = vshll.u32 %v276, 16
      %v339 = vor.u32 %v336, %v337
      %v340 = vsel %vm307, %v332, %v339
      %v341 = vrot.slane %v336, 4
      %v343 = vshrl.u32 %v277, 16
      %v345 = vrot.slane %v343, 7
      %v346 = vshll.u32 %v277, 16
      %v348 = vor.u32 %v345, %v346
      %v349 = vrot.slane %v345, 4
      %v351 = vshrl.u32 %v278, 16
      %v353 = vrot.slane %v351, 7
      %v354 = vshll.u32 %v278, 16
      %v356 = vor.u32 %v353, %v354
      %v357 = vsel %vm307, %v349, %v356
      %v358 = vrot.slane %v353, 4
      %v360 = vshrl.u32 %v279, 16
      %v362 = vrot.slane %v360, 7
      %v363 = vshll.u32 %v279, 16
      %v365 = vor.u32 %v362, %v363
      %v366 = vrot.slane %v362, 4
      %v368 = vshrl.u32 %v280, 16
      %v370 = vrot.slane %v368, 7
      %v371 = vshll.u32 %v280, 16
      %v373 = vor.u32 %v370, %v371
      %v374 = vsel %vm307, %v366, %v373
      %v375 = vrot.slane %v370, 4
      %v377 = vshrl.u32 %v281, 16
      %v379 = vrot.slane %v377, 7
      %v380 = vshll.u32 %v281, 16
      %v382 = vor.u32 %v379, %v380
      %v383 = vrot.slane %v379, 4
      %v385 = vshrl.u32 %v282, 16
      %v387 = vrot.slane %v385, 7
      %v388 = vshll.u32 %v282, 16
      %v390 = vor.u32 %v387, %v388
      %v391 = vsel %vm307, %v383, %v390
      %v392 = vrot.slane %v387, 4
      %v394 = vshrl.u32 %v283, 16
      %v396 = vrot.slane %v394, 7
      %v397 = vshll.u32 %v283, 16
      %v399 = vor.u32 %v396, %v397
      %v400 = vrot.slane %v396, 4
      %v402 = vshrl.u32 %v284, 16
      %v404 = vrot.slane %v402, 7
      %v405 = vshll.u32 %v284, 16
      %v407 = vor.u32 %v404, %v405
      %v408 = vsel %vm307, %v400, %v407
      %v409 = vrot.slane %v404, 4
      %v411 = vshrl.u32 %v285, 16
      %v413 = vrot.slane %v411, 7
      %v414 = vshll.u32 %v285, 16
      %v416 = vor.u32 %v413, %v414
      %v417 = vrot.slane %v413, 4
      %v419 = vshrl.u32 %v286, 16
      %v421 = vrot.slane %v419, 7
      %v422 = vshll.u32 %v286, 16
      %v424 = vor.u32 %v421, %v422
      %v425 = vsel %vm307, %v417, %v424
      %v426 = vrot.slane %v421, 4
      %v428 = vshrl.u32 %v287, 16
      %v430 = vrot.slane %v428, 7
      %v431 = vshll.u32 %v287, 16
      %v433 = vor.u32 %v430, %v431
      %v434 = vrot.slane %v430, 4
      %v436 = vshrl.u32 %v288, 16
      %v438 = vrot.slane %v436, 7
      %v439 = vshll.u32 %v288, 16
      %v441 = vor.u32 %v438, %v439
      %v442 = vsel %vm307, %v434, %v441
      %v443 = vrot.slane %v438, 4
      %v445 = vshrl.u32 %v289, 16
      %v447 = vrot.slane %v445, 7
      %v448 = vshll.u32 %v289, 16
      %v450 = vor.u32 %v447, %v448
      %v451 = vrot.slane %v447, 4
      %v453 = vshrl.u32 %v290, 16
      %v455 = vrot.slane %v453, 7
      %v456 = vshll.u32 %v290, 16
      %v458 = vor.u32 %v455, %v456
      %v459 = vsel %vm307, %v451, %v458
      %v460 = vrot.slane %v455, 4
      %v462 = vshrl.u32 %v291, 16
      %v464 = vrot.slane %v462, 7
      %v465 = vshll.u32 %v291, 16
      %v467 = vor.u32 %v464, %v465
      %v468 = vrot.slane %v464, 4
      %v470 = vshrl.u32 %v292, 16
      %v472 = vrot.slane %v470, 7
      %v473 = vshll.u32 %v292, 16
      %v475 = vor.u32 %v472, %v473
      %v476 = vsel %vm307, %v468, %v475
      %v477 = vrot.slane %v472, 4
      %v479 = vshrl.u32 %v293, 16
      %v481 = vrot.slane %v479, 7
      %v482 = vshll.u32 %v293, 16
      %v484 = vor.u32 %v481, %v482
      %v485 = vrot.slane %v481, 4
      %v487 = vshrl.u32 %v294, 16
      %v489 = vrot.slane %v487, 7
      %v490 = vshll.u32 %v294, 16
      %v492 = vor.u32 %v489, %v490
      %v493 = vsel %vm307, %v485, %v492
      %v494 = vrot.slane %v489, 4
      %v496 = vshrl.u32 %v295, 16
      %v498 = vrot.slane %v496, 7
      %v499 = vshll.u32 %v295, 16
      %v501 = vor.u32 %v498, %v499
      %v502 = vrot.slane %v498, 4
      %v504 = vshrl.u32 %v296, 16
      %v506 = vrot.slane %v504, 7
      %v507 = vshll.u32 %v296, 16
      %v509 = vor.u32 %v506, %v507
      %v510 = vsel %vm307, %v502, %v509
      %v511 = vrot.slane %v506, 4
      %v513 = vshrl.u32 %v297, 16
      %v515 = vrot.slane %v513, 7
      %v516 = vshll.u32 %v297, 16
      %v518 = vor.u32 %v515, %v516
      %v519 = vrot.slane %v515, 4
      %v521 = vshrl.u32 %v298, 16
      %v523 = vrot.slane %v521, 7
      %v524 = vshll.u32 %v298, 16
      %v526 = vor.u32 %v523, %v524
      %v527 = vsel %vm307, %v519, %v526
      %v528 = vrot.slane %v523, 4
      %v530 = vshrl.u32 %v299, 16
      %v532 = vrot.slane %v530, 7
      %v533 = vshll.u32 %v299, 16
      %v535 = vor.u32 %v532, %v533
      %v536 = vrot.slane %v532, 4
      %v538 = vshrl.u32 %v300, 16
      %v540 = vrot.slane %v538, 7
      %v541 = vshll.u32 %v300, 16
      %v543 = vor.u32 %v540, %v541
      %v544 = vsel %vm307, %v536, %v543
      %v545 = vrot.slane %v540, 4
      %v547 = vshrl.u32 %v301, 16
      %v549 = vrot.slane %v547, 7
      %v550 = vshll.u32 %v301, 16
      %v552 = vor.u32 %v549, %v550
      %v553 = vrot.slane %v549, 4
      %v555 = vshrl.u32 %v302, 16
      %v557 = vrot.slane %v555, 7
      %v558 = vshll.u32 %v302, 16
      %v560 = vor.u32 %v557, %v558
      %v561 = vsel %vm307, %v553, %v560
      %v562 = vrot.slane %v557, 4
      %v564 = vshrl.u32 %v303, 16
      %v566 = vrot.slane %v564, 7
      %v567 = vshll.u32 %v303, 16
      %v569 = vor.u32 %v566, %v567
      %v570 = vrot.slane %v566, 4
      %v572 = vshrl.u32 %v304, 16
      %v574 = vrot.slane %v572, 7
      %v575 = vshll.u32 %v304, 16
      %v577 = vor.u32 %v574, %v575
      %v578 = vsel %vm307, %v570, %v577
      %v579 = vrot.slane %v574, 4
      %s628 = scalar_lea.vmem [#allocation2], 12
      %vm629 = vcmask 1043456
      %vm630 = vsmask.f32 7938
      %vm631 = vmand %vm629, %vm630
      %v632 = vld [vmem:[%s628] sm:$0xf]
      %v633 = vsel %vm631, %v314, %v632
      %634 = vst [vmem:[%s628] sm:$0xf] %v633
      %635 = vst [vmem:[%s628 + $0x4] sm:$0xf] %v323
      %vm636 = vcmask 1040384
      %vm637 = vmand %vm636, %vm305
      %v638 = vld [vmem:[%s628 + $0x8] sm:$0x1]
      %v639 = vsel %vm637, %v324, %v638
      %640 = vst [vmem:[%s628 + $0x8] sm:$0x1] %v639
      %v641 = vld [vmem:[%s628 + $0xc] sm:$0xf]
      %v642 = vsel %vm631, %v331, %v641
      %643 = vst [vmem:[%s628 + $0xc] sm:$0xf] %v642
      %644 = vst [vmem:[%s628 + $0x10] sm:$0xf] %v340
      %v645 = vld [vmem:[%s628 + $0x14] sm:$0x1]
      %v646 = vsel %vm637, %v341, %v645
      %647 = vst [vmem:[%s628 + $0x14] sm:$0x1] %v646
      %v648 = vld [vmem:[%s628 + $0x18] sm:$0xf]
      %v649 = vsel %vm631, %v348, %v648
      %650 = vst [vmem:[%s628 + $0x18] sm:$0xf] %v649
      %651 = vst [vmem:[%s628 + $0x1c] sm:$0xf] %v357
      %v652 = vld [vmem:[%s628 + $0x20] sm:$0x1]
      %v653 = vsel %vm637, %v358, %v652
      %654 = vst [vmem:[%s628 + $0x20] sm:$0x1] %v653
      %v655 = vld [vmem:[%s628 + $0x24] sm:$0xf]
      %v656 = vsel %vm631, %v365, %v655
      %657 = vst [vmem:[%s628 + $0x24] sm:$0xf] %v656
      %658 = vst [vmem:[%s628 + $0x28] sm:$0xf] %v374
      %v659 = vld [vmem:[%s628 + $0x2c] sm:$0x1]
      %v660 = vsel %vm637, %v375, %v659
      %661 = vst [vmem:[%s628 + $0x2c] sm:$0x1] %v660
      %v662 = vld [vmem:[%s628 + $0x30] sm:$0xf]
      %v663 = vsel %vm631, %v382, %v662
      %664 = vst [vmem:[%s628 + $0x30] sm:$0xf] %v663
      %665 = vst [vmem:[%s628 + $0x34] sm:$0xf] %v391
      %v666 = vld [vmem:[%s628 + $0x38] sm:$0x1]
      %v667 = vsel %vm637, %v392, %v666
      %668 = vst [vmem:[%s628 + $0x38] sm:$0x1] %v667
      %v669 = vld [vmem:[%s628 + $0x3c] sm:$0xf]
      %v670 = vsel %vm631, %v399, %v669
      %671 = vst [vmem:[%s628 + $0x3c] sm:$0xf] %v670
      %672 = vst [vmem:[%s628 + $0x40] sm:$0xf] %v408
      %v673 = vld [vmem:[%s628 + $0x44] sm:$0x1]
      %v674 = vsel %vm637, %v409, %v673
      %675 = vst [vmem:[%s628 + $0x44] sm:$0x1] %v674
      %v676 = vld [vmem:[%s628 + $0x48] sm:$0xf]
      %v677 = vsel %vm631, %v416, %v676
      %678 = vst [vmem:[%s628 + $0x48] sm:$0xf] %v677
      %679 = vst [vmem:[%s628 + $0x4c] sm:$0xf] %v425
      %v680 = vld [vmem:[%s628 + $0x50] sm:$0x1]
      %v681 = vsel %vm637, %v426, %v680
      %682 = vst [vmem:[%s628 + $0x50] sm:$0x1] %v681
      %v683 = vld [vmem:[%s628 + $0x54] sm:$0xf]
      %v684 = vsel %vm631, %v433, %v683
      %685 = vst [vmem:[%s628 + $0x54] sm:$0xf] %v684
      %686 = vst [vmem:[%s628 + $0x58] sm:$0xf] %v442
      %v687 = vld [vmem:[%s628 + $0x5c] sm:$0x1]
      %v688 = vsel %vm637, %v443, %v687
      %689 = vst [vmem:[%s628 + $0x5c] sm:$0x1] %v688
      %v690 = vld [vmem:[%s628 + $0x60] sm:$0xf]
      %v691 = vsel %vm631, %v450, %v690
      %692 = vst [vmem:[%s628 + $0x60] sm:$0xf] %v691
      %693 = vst [vmem:[%s628 + $0x64] sm:$0xf] %v459
      %v694 = vld [vmem:[%s628 + $0x68] sm:$0x1]
      %v695 = vsel %vm637, %v460, %v694
      %696 = vst [vmem:[%s628 + $0x68] sm:$0x1] %v695
      %v697 = vld [vmem:[%s628 + $0x6c] sm:$0xf]
      %v698 = vsel %vm631, %v467, %v697
      %699 = vst [vmem:[%s628 + $0x6c] sm:$0xf] %v698
      %700 = vst [vmem:[%s628 + $0x70] sm:$0xf] %v476
      %v701 = vld [vmem:[%s628 + $0x74] sm:$0x1]
      %v702 = vsel %vm637, %v477, %v701
      %703 = vst [vmem:[%s628 + $0x74] sm:$0x1] %v702
      %v704 = vld [vmem:[%s628 + $0x78] sm:$0xf]
      %v705 = vsel %vm631, %v484, %v704
      %706 = vst [vmem:[%s628 + $0x78] sm:$0xf] %v705
      %707 = vst [vmem:[%s628 + $0x7c] sm:$0xf] %v493
      %v708 = vld [vmem:[%s628 + $0x80] sm:$0x1]
      %v709 = vsel %vm637, %v494, %v708
      %710 = vst [vmem:[%s628 + $0x80] sm:$0x1] %v709
      %v711 = vld [vmem:[%s628 + $0x84] sm:$0xf]
      %v712 = vsel %vm631, %v501, %v711
      %713 = vst [vmem:[%s628 + $0x84] sm:$0xf] %v712
      %714 = vst [vmem:[%s628 + $0x88] sm:$0xf] %v510
      %v715 = vld [vmem:[%s628 + $0x8c] sm:$0x1]
      %v716 = vsel %vm637, %v511, %v715
      %717 = vst [vmem:[%s628 + $0x8c] sm:$0x1] %v716
      %v718 = vld [vmem:[%s628 + $0x90] sm:$0xf]
      %v719 = vsel %vm631, %v518, %v718
      %720 = vst [vmem:[%s628 + $0x90] sm:$0xf] %v719
      %721 = vst [vmem:[%s628 + $0x94] sm:$0xf] %v527
      %v722 = vld [vmem:[%s628 + $0x98] sm:$0x1]
      %v723 = vsel %vm637, %v528, %v722
      %724 = vst [vmem:[%s628 + $0x98] sm:$0x1] %v723
      %v725 = vld [vmem:[%s628 + $0x9c] sm:$0xf]
      %v726 = vsel %vm631, %v535, %v725
      %727 = vst [vmem:[%s628 + $0x9c] sm:$0xf] %v726
      %728 = vst [vmem:[%s628 + $0xa0] sm:$0xf] %v544
      %v729 = vld [vmem:[%s628 + $0xa4] sm:$0x1]
      %v730 = vsel %vm637, %v545, %v729
      %731 = vst [vmem:[%s628 + $0xa4] sm:$0x1] %v730
      %v732 = vld [vmem:[%s628 + $0xa8] sm:$0xf]
      %v733 = vsel %vm631, %v552, %v732
      %734 = vst [vmem:[%s628 + $0xa8] sm:$0xf] %v733
      %735 = vst [vmem:[%s628 + $0xac] sm:$0xf] %v561
      %v736 = vld [vmem:[%s628 + $0xb0] sm:$0x1]
      %v737 = vsel %vm637, %v562, %v736
      %738 = vst [vmem:[%s628 + $0xb0] sm:$0x1] %v737
      %v739 = vld [vmem:[%s628 + $0xb4] sm:$0xf]
      %v740 = vsel %vm631, %v569, %v739
      %741 = vst [vmem:[%s628 + $0xb4] sm:$0xf] %v740
      %742 = vst [vmem:[%s628 + $0xb8] sm:$0xf] %v578
      %v743 = vld [vmem:[%s628 + $0xbc] sm:$0x1]
      %v744 = vsel %vm637, %v579, %v743
      %745 = vst [vmem:[%s628 + $0xbc] sm:$0x1] %v744
      %v746 = vld [vmem:[#allocation2] sm:$0xf]
      %v747 = vld [vmem:[#allocation2 + $0x4] sm:$0xf]
      %v748 = vld [vmem:[#allocation2 + $0xc] sm:$0xf]
      %v749 = vld [vmem:[#allocation2 + $0x10] sm:$0xf]
      %v750 = vld [vmem:[#allocation2 + $0x18] sm:$0xf]
      %v751 = vld [vmem:[#allocation2 + $0x1c] sm:$0xf]
      %v752 = vld [vmem:[#allocation2 + $0x24] sm:$0xf]
      %v753 = vld [vmem:[#allocation2 + $0x28] sm:$0xf]
      %v754 = vld [vmem:[#allocation2 + $0x30] sm:$0xf]
      %v755 = vld [vmem:[#allocation2 + $0x34] sm:$0xf]
      %v756 = vld [vmem:[#allocation2 + $0x3c] sm:$0xf]
      %v757 = vld [vmem:[#allocation2 + $0x40] sm:$0xf]
      %v758 = vld [vmem:[#allocation2 + $0x48] sm:$0xf]
      %v759 = vld [vmem:[#allocation2 + $0x4c] sm:$0xf]
      %v760 = vld [vmem:[#allocation2 + $0x54] sm:$0xf]
      %v761 = vld [vmem:[#allocation2 + $0x58] sm:$0xf]
      %v762 = vld [vmem:[#allocation2 + $0x60] sm:$0xf]
      %v763 = vld [vmem:[#allocation2 + $0x64] sm:$0xf]
      %v764 = vld [vmem:[#allocation2 + $0x6c] sm:$0xf]
      %v765 = vld [vmem:[#allocation2 + $0x70] sm:$0xf]
      %v766 = vld [vmem:[#allocation2 + $0x78] sm:$0xf]
      %v767 = vld [vmem:[#allocation2 + $0x7c] sm:$0xf]
      %v768 = vld [vmem:[#allocation2 + $0x84] sm:$0xf]
      %v769 = vld [vmem:[#allocation2 + $0x88] sm:$0xf]
      %v770 = vld [vmem:[#allocation2 + $0x90] sm:$0xf]
      %v771 = vld [vmem:[#allocation2 + $0x94] sm:$0xf]
      %v772 = vld [vmem:[#allocation2 + $0x9c] sm:$0xf]
      %v773 = vld [vmem:[#allocation2 + $0xa0] sm:$0xf]
      %v774 = vld [vmem:[#allocation2 + $0xa8] sm:$0xf]
      %v775 = vld [vmem:[#allocation2 + $0xac] sm:$0xf]
      %v776 = vld [vmem:[#allocation2 + $0xb4] sm:$0xf]
      %v777 = vld [vmem:[#allocation2 + $0xb8] sm:$0xf]
      %v778 = vld [vmem:[#allocation2 + $0xc0] sm:$0xf]
      %v779 = vld [vmem:[#allocation2 + $0xc4] sm:$0xf]
      %v780 = vld [vmem:[#allocation2 + $0xcc] sm:$0xf]
      %v781 = vld [vmem:[#allocation2 + $0xd0] sm:$0xf]
      %v782 = vld [vmem:[%s1] sm:$0xf]
      %v783 = vld [vmem:[%s1 + $0x4] sm:$0xf]
      %v784 = vld [vmem:[%s1 + $0x8] sm:$0xf]
      %v785 = vld [vmem:[%s1 + $0xc] sm:$0xf]
      %v786 = vld [vmem:[%s1 + $0x10] sm:$0xf]
      %v787 = vld [vmem:[%s1 + $0x14] sm:$0xf]
      %v788 = vld [vmem:[%s1 + $0x18] sm:$0xf]
      %v789 = vld [vmem:[%s1 + $0x1c] sm:$0xf]
      %v790 = vld [vmem:[%s1 + $0x20] sm:$0xf]
      %v791 = vld [vmem:[%s1 + $0x24] sm:$0xf]
      %v792 = vld [vmem:[%s1 + $0x28] sm:$0xf]
      %v793 = vld [vmem:[%s1 + $0x2c] sm:$0xf]
      %v794 = vld [vmem:[%s1 + $0x30] sm:$0xf]
      %v795 = vld [vmem:[%s1 + $0x34] sm:$0xf]
      %v796 = vld [vmem:[%s1 + $0x38] sm:$0xf]
      %v797 = vld [vmem:[%s1 + $0x3c] sm:$0xf]
      %s798 = scalar_lea.vmem %s1, 192
      %v799 = vld [vmem:[%s798] sm:$0xf]
      %v800 = vld [vmem:[%s798 + $0x4] sm:$0xf]
      %v801 = vld [vmem:[%s798 + $0x8] sm:$0xf]
      %v802 = vld [vmem:[%s798 + $0xc] sm:$0xf]
      %v803 = vld [vmem:[%s798 + $0x10] sm:$0xf]
      %v804 = vld [vmem:[%s798 + $0x14] sm:$0xf]
      %v805 = vld [vmem:[%s798 + $0x18] sm:$0xf]
      %v806 = vld [vmem:[%s798 + $0x1c] sm:$0xf]
      %v807 = vld [vmem:[%s798 + $0x20] sm:$0xf]
      %v808 = vld [vmem:[%s798 + $0x24] sm:$0xf]
      %v809 = vld [vmem:[%s798 + $0x28] sm:$0xf]
      %v810 = vld [vmem:[%s798 + $0x2c] sm:$0xf]
      %v811 = vld [vmem:[%s798 + $0x30] sm:$0xf]
      %v812 = vld [vmem:[%s798 + $0x34] sm:$0xf]
      %v813 = vld [vmem:[%s798 + $0x38] sm:$0xf]
      %v814 = vld [vmem:[%s798 + $0x3c] sm:$0xf]
      %v847 = vunpack.c.l.b16 %v748
      %v848 = vunpack.c.l.b16 %v749
      %v849 = vunpack.c.l.b16 %v750
      %v850 = vunpack.c.l.b16 %v751
      %v851 = vunpack.c.l.b16 %v752
      %v852 = vunpack.c.l.b16 %v753
      %v853 = vunpack.c.l.b16 %v754
      %v854 = vunpack.c.l.b16 %v755
      %v855 = vunpack.c.l.b16 %v756
      %v856 = vunpack.c.l.b16 %v757
      %v857 = vunpack.c.l.b16 %v758
      %v858 = vunpack.c.l.b16 %v759
      %v859 = vunpack.c.l.b16 %v760
      %v860 = vunpack.c.l.b16 %v761
      %v861 = vunpack.c.l.b16 %v762
      %v862 = vunpack.c.l.b16 %v763
      %v863 = vunpack.c.l.b16 %v764
      %v864 = vunpack.c.l.b16 %v765
      %v865 = vunpack.c.l.b16 %v766
      %v866 = vunpack.c.l.b16 %v767
      %v867 = vunpack.c.l.b16 %v768
      %v868 = vunpack.c.l.b16 %v769
      %v869 = vunpack.c.l.b16 %v770
      %v870 = vunpack.c.l.b16 %v771
      %v871 = vunpack.c.l.b16 %v772
      %v872 = vunpack.c.l.b16 %v773
      %v873 = vunpack.c.l.b16 %v774
      %v874 = vunpack.c.l.b16 %v775
      %v875 = vunpack.c.l.b16 %v776
      %v876 = vunpack.c.l.b16 %v777
      %v877 = vunpack.c.l.b16 %v778
      %v878 = vunpack.c.l.b16 %v779
      %v879 = vpack.c.b16 %v848, %v847
      %v880 = vpack.c.b16 %v850, %v849
      %v881 = vpack.c.b16 %v852, %v851
      %v882 = vpack.c.b16 %v854, %v853
      %v883 = vpack.c.b16 %v856, %v855
      %v884 = vpack.c.b16 %v858, %v857
      %v885 = vpack.c.b16 %v860, %v859
      %v886 = vpack.c.b16 %v862, %v861
      %v887 = vpack.c.b16 %v864, %v863
      %v888 = vpack.c.b16 %v866, %v865
      %v889 = vpack.c.b16 %v868, %v867
      %v890 = vpack.c.b16 %v870, %v869
      %v891 = vpack.c.b16 %v872, %v871
      %v892 = vpack.c.b16 %v874, %v873
      %v893 = vpack.c.b16 %v876, %v875
      %v894 = vpack.c.b16 %v878, %v877
      %v927 = vunpack.c.l.b16 %v799
      %v928 = vunpack.c.l.b16 %v800
      %v929 = vunpack.c.l.b16 %v801
      %v930 = vunpack.c.l.b16 %v802
      %v931 = vunpack.c.l.b16 %v803
      %v932 = vunpack.c.l.b16 %v804
      %v933 = vunpack.c.l.b16 %v805
      %v934 = vunpack.c.l.b16 %v806
      %v935 = vunpack.c.l.b16 %v807
      %v936 = vunpack.c.l.b16 %v808
      %v937 = vunpack.c.l.b16 %v809
      %v938 = vunpack.c.l.b16 %v810
      %v939 = vunpack.c.l.b16 %v811
      %v940 = vunpack.c.l.b16 %v812
      %v941 = vunpack.c.l.b16 %v813
      %v942 = vunpack.c.l.b16 %v814
      %v943 = vpack.c.b16 %v928, %v927
      %v944 = vpack.c.b16 %v930, %v929
      %v945 = vpack.c.b16 %v932, %v931
      %v946 = vpack.c.b16 %v934, %v933
      %v947 = vpack.c.b16 %v936, %v935
      %v948 = vpack.c.b16 %v938, %v937
      %v949 = vpack.c.b16 %v940, %v939
      %v950 = vpack.c.b16 %v942, %v941
      %959 = vmatprep.subr.bf16.mxu0 0
      %960 = vmatpush1.bf16.msra.mxu0 %v943
      %961 = vmatprep.subr.bf16.mxu0 0
      %962 = vmatpush1.bf16.msra.mxu0 %v944
      %963 = vmatprep.subr.bf16.mxu0 0
      %964 = vmatpush1.bf16.msra.mxu0 %v945
      %965 = vmatprep.subr.bf16.mxu0 0
      %966 = vmatpush1.bf16.msra.mxu0 %v946
      %967 = vmatprep.subr.bf16.mxu0 0
      %968 = vmatpush1.bf16.msra.mxu0 %v947
      %969 = vmatprep.subr.bf16.mxu0 0
      %970 = vmatpush1.bf16.msra.mxu0 %v948
      %971 = vmatprep.subr.bf16.mxu0 0
      %972 = vmatpush1.bf16.msra.mxu0 %v949
      %973 = vmatprep.subr.bf16.mxu0 0
      %974 = vmatpush1.bf16.msra.mxu0 %v950
      %975 = vmatprep.subr.bf16.mxu0 0
      %976 = vmatpush1.bf16.msra.mxu0 0
      %977 = vmatprep.subr.bf16.mxu0 0
      %978 = vmatpush1.bf16.msra.mxu0 0
      %979 = vmatprep.subr.bf16.mxu0 0
      %980 = vmatpush1.bf16.msra.mxu0 0
      %981 = vmatprep.subr.bf16.mxu0 0
      %982 = vmatpush1.bf16.msra.mxu0 0
      %983 = vmatprep.subr.bf16.mxu0 0
      %984 = vmatpush1.bf16.msra.mxu0 0
      %985 = vmatprep.subr.bf16.mxu0 0
      %986 = vmatpush1.bf16.msra.mxu0 0
      %987 = vmatprep.subr.bf16.mxu0 0
      %988 = vmatpush1.bf16.msra.mxu0 0
      %989 = vmatprep.subr.bf16.mxu0 0
      %990 = vmatpush1.bf16.msra.mxu0 0
      %991 = vmatprep.mubr.bf16.mxu0 0
      %992 = vmatmul.mubr.bf16.gmra.mrb[0].mxu0 %v879
      %v993 = vpop.f32.mrb[0].mxu0
      %v994 = vadd.f32 0.0, %v993
      %v995 = vpop.f32.mrb[0].mxu0
      %v996 = vpop.f32.mrb[0].mxu0
      %v997 = vadd.f32 0.0, %v996
      %v998 = vpop.f32.mrb[0].mxu0
      %999 = vmatprep.mubr.bf16.mxu0 0
      %1000 = vmatmul.mubr.bf16.gmra.mrb[0].mxu0 %v880
      %v1001 = vpop.f32.mrb[0].mxu0
      %v1002 = vadd.f32 0.0, %v1001
      %v1003 = vpop.f32.mrb[0].mxu0
      %v1004 = vpop.f32.mrb[0].mxu0
      %v1005 = vadd.f32 0.0, %v1004
      %v1006 = vpop.f32.mrb[0].mxu0
      %1007 = vmatprep.mubr.bf16.mxu0 0
      %1008 = vmatmul.mubr.bf16.gmra.mrb[0].mxu0 %v881
      %v1009 = vpop.f32.mrb[0].mxu0
      %v1010 = vadd.f32 0.0, %v1009
      %v1011 = vpop.f32.mrb[0].mxu0
      %v1012 = vpop.f32.mrb[0].mxu0
      %v1013 = vadd.f32 0.0, %v1012
      %v1014 = vpop.f32.mrb[0].mxu0
      %1015 = vmatprep.mubr.bf16.mxu0 0
      %1016 = vmatmul.mubr.bf16.gmra.mrb[0].mxu0 %v882
      %v1017 = vpop.f32.mrb[0].mxu0
      %v1018 = vadd.f32 0.0, %v1017
      %v1019 = vpop.f32.mrb[0].mxu0
      %v1020 = vpop.f32.mrb[0].mxu0
      %v1021 = vadd.f32 0.0, %v1020
      %v1022 = vpop.f32.mrb[0].mxu0
      %1023 = vmatprep.mubr.bf16.mxu0 0
      %1024 = vmatmul.mubr.bf16.gmra.mrb[0].mxu0 %v883
      %v1025 = vpop.f32.mrb[0].mxu0
      %v1026 = vadd.f32 0.0, %v1025
      %v1027 = vpop.f32.mrb[0].mxu0
      %v1028 = vpop.f32.mrb[0].mxu0
      %v1029 = vadd.f32 0.0, %v1028
      %v1030 = vpop.f32.mrb[0].mxu0
      %1031 = vmatprep.mubr.bf16.mxu0 0
      %1032 = vmatmul.mubr.bf16.gmra.mrb[0].mxu0 %v884
      %v1033 = vpop.f32.mrb[0].mxu0
      %v1034 = vadd.f32 0.0, %v1033
      %v1035 = vpop.f32.mrb[0].mxu0
      %v1036 = vpop.f32.mrb[0].mxu0
      %v1037 = vadd.f32 0.0, %v1036
      %v1038 = vpop.f32.mrb[0].mxu0
      %1039 = vmatprep.mubr.bf16.mxu0 0
      %1040 = vmatmul.mubr.bf16.gmra.mrb[0].mxu0 %v885
      %v1041 = vpop.f32.mrb[0].mxu0
      %v1042 = vadd.f32 0.0, %v1041
      %v1043 = vpop.f32.mrb[0].mxu0
      %v1044 = vpop.f32.mrb[0].mxu0
      %v1045 = vadd.f32 0.0, %v1044
      %v1046 = vpop.f32.mrb[0].mxu0
      %1047 = vmatprep.mubr.bf16.mxu0 0
      %1048 = vmatmul.mubr.bf16.gmra.mrb[0].mxu0 %v886
      %v1049 = vpop.f32.mrb[0].mxu0
      %v1050 = vadd.f32 0.0, %v1049
      %v1051 = vpop.f32.mrb[0].mxu0
      %v1052 = vpop.f32.mrb[0].mxu0
      %v1053 = vadd.f32 0.0, %v1052
      %v1054 = vpop.f32.mrb[0].mxu0
      %1055 = vmatprep.mubr.bf16.mxu0 0
      %1056 = vmatmul.mubr.bf16.gmra.mrb[0].mxu0 %v887
      %v1057 = vpop.f32.mrb[0].mxu0
      %v1058 = vadd.f32 0.0, %v1057
      %v1059 = vpop.f32.mrb[0].mxu0
      %v1060 = vpop.f32.mrb[0].mxu0
      %v1061 = vadd.f32 0.0, %v1060
      %v1062 = vpop.f32.mrb[0].mxu0
      %1063 = vmatprep.mubr.bf16.mxu0 0
      %1064 = vmatmul.mubr.bf16.gmra.mrb[0].mxu0 %v888
      %v1065 = vpop.f32.mrb[0].mxu0
      %v1066 = vadd.f32 0.0, %v1065
      %v1067 = vpop.f32.mrb[0].mxu0
      %v1068 = vpop.f32.mrb[0].mxu0
      %v1069 = vadd.f32 0.0, %v1068
      %v1070 = vpop.f32.mrb[0].mxu0
      %1071 = vmatprep.mubr.bf16.mxu0 0
      %1072 = vmatmul.mubr.bf16.gmra.mrb[0].mxu0 %v889
      %v1073 = vpop.f32.mrb[0].mxu0
      %v1074 = vadd.f32 0.0, %v1073
      %v1075 = vpop.f32.mrb[0].mxu0
      %v1076 = vpop.f32.mrb[0].mxu0
      %v1077 = vadd.f32 0.0, %v1076
      %v1078 = vpop.f32.mrb[0].mxu0
      %1079 = vmatprep.mubr.bf16.mxu0 0
      %1080 = vmatmul.mubr.bf16.gmra.mrb[0].mxu0 %v890
      %v1081 = vpop.f32.mrb[0].mxu0
      %v1082 = vadd.f32 0.0, %v1081
      %v1083 = vpop.f32.mrb[0].mxu0
      %v1084 = vpop.f32.mrb[0].mxu0
      %v1085 = vadd.f32 0.0, %v1084
      %v1086 = vpop.f32.mrb[0].mxu0
      %1087 = vmatprep.mubr.bf16.mxu0 0
      %1088 = vmatmul.mubr.bf16.gmra.mrb[0].mxu0 %v891
      %v1089 = vpop.f32.mrb[0].mxu0
      %v1090 = vadd.f32 0.0, %v1089
      %v1091 = vpop.f32.mrb[0].mxu0
      %v1092 = vpop.f32.mrb[0].mxu0
      %v1093 = vadd.f32 0.0, %v1092
      %v1094 = vpop.f32.mrb[0].mxu0
      %1095 = vmatprep.mubr.bf16.mxu0 0
      %1096 = vmatmul.mubr.bf16.gmra.mrb[0].mxu0 %v892
      %v1097 = vpop.f32.mrb[0].mxu0
      %v1098 = vadd.f32 0.0, %v1097
      %v1099 = vpop.f32.mrb[0].mxu0
      %v1100 = vpop.f32.mrb[0].mxu0
      %v1101 = vadd.f32 0.0, %v1100
      %v1102 = vpop.f32.mrb[0].mxu0
      %1103 = vmatprep.mubr.bf16.mxu0 0
      %1104 = vmatmul.mubr.bf16.gmra.mrb[0].mxu0 %v893
      %v1105 = vpop.f32.mrb[0].mxu0
      %v1106 = vadd.f32 0.0, %v1105
      %v1107 = vpop.f32.mrb[0].mxu0
      %v1108 = vpop.f32.mrb[0].mxu0
      %v1109 = vadd.f32 0.0, %v1108
      %v1110 = vpop.f32.mrb[0].mxu0
      %1111 = vmatprep.mubr.bf16.mxu0 0
      %1112 = vmatmul.mubr.bf16.gmra.mrb[0].mxu0 %v894
      %v1113 = vpop.f32.mrb[0].mxu0
      %v1114 = vadd.f32 0.0, %v1113
      %v1115 = vpop.f32.mrb[0].mxu0
      %v1116 = vpop.f32.mrb[0].mxu0
      %v1117 = vadd.f32 0.0, %v1116
      %v1118 = vpop.f32.mrb[0].mxu0
      %1119 = vdwg.mxu0
      %v1122 = vunpack.c.l.b16 %v746
      %v1123 = vunpack.c.l.b16 %v747
      %v1124 = vpack.c.b16 %v1123, %v1122
      %v1142 = vunpack.c.l.b16 %v782
      %v1143 = vunpack.c.l.b16 %v783
      %v1144 = vunpack.c.l.b16 %v784
      %v1145 = vunpack.c.l.b16 %v785
      %v1146 = vunpack.c.l.b16 %v786
      %v1147 = vunpack.c.l.b16 %v787
      %v1148 = vunpack.c.l.b16 %v788
      %v1149 = vunpack.c.l.b16 %v789
      %v1150 = vunpack.c.l.b16 %v790
      %v1151 = vunpack.c.l.b16 %v791
      %v1152 = vunpack.c.l.b16 %v792
      %v1153 = vunpack.c.l.b16 %v793
      %v1154 = vunpack.c.l.b16 %v794
      %v1155 = vunpack.c.l.b16 %v795
      %v1156 = vunpack.c.l.b16 %v796
      %v1157 = vunpack.c.l.b16 %v797
      %v1158 = vpack.c.b16 %v1143, %v1142
      %v1159 = vpack.c.b16 %v1145, %v1144
      %v1160 = vpack.c.b16 %v1147, %v1146
      %v1161 = vpack.c.b16 %v1149, %v1148
      %v1162 = vpack.c.b16 %v1151, %v1150
      %v1163 = vpack.c.b16 %v1153, %v1152
      %v1164 = vpack.c.b16 %v1155, %v1154
      %v1165 = vpack.c.b16 %v1157, %v1156
      %1174 = vmatprep.subr.bf16.mxu0 0
      %1175 = vmatpush1.bf16.msra.mxu0 %v1158
      %1176 = vmatprep.subr.bf16.mxu0 0
      %1177 = vmatpush1.bf16.msra.mxu0 %v1159
      %1178 = vmatprep.subr.bf16.mxu0 0
      %1179 = vmatpush1.bf16.msra.mxu0 %v1160
      %1180 = vmatprep.subr.bf16.mxu0 0
      %1181 = vmatpush1.bf16.msra.mxu0 %v1161
      %1182 = vmatprep.subr.bf16.mxu0 0
      %1183 = vmatpush1.bf16.msra.mxu0 %v1162
      %1184 = vmatprep.subr.bf16.mxu0 0
      %1185 = vmatpush1.bf16.msra.mxu0 %v1163
      %1186 = vmatprep.subr.bf16.mxu0 0
      %1187 = vmatpush1.bf16.msra.mxu0 %v1164
      %1188 = vmatprep.subr.bf16.mxu0 0
      %1189 = vmatpush1.bf16.msra.mxu0 %v1165
      %1190 = vmatprep.subr.bf16.mxu0 0
      %1191 = vmatpush1.bf16.msra.mxu0 0
      %1192 = vmatprep.subr.bf16.mxu0 0
      %1193 = vmatpush1.bf16.msra.mxu0 0
      %1194 = vmatprep.subr.bf16.mxu0 0
      %1195 = vmatpush1.bf16.msra.mxu0 0
      %1196 = vmatprep.subr.bf16.mxu0 0
      %1197 = vmatpush1.bf16.msra.mxu0 0
      %1198 = vmatprep.subr.bf16.mxu0 0
      %1199 = vmatpush1.bf16.msra.mxu0 0
      %1200 = vmatprep.subr.bf16.mxu0 0
      %1201 = vmatpush1.bf16.msra.mxu0 0
      %1202 = vmatprep.subr.bf16.mxu0 0
      %1203 = vmatpush1.bf16.msra.mxu0 0
      %1204 = vmatprep.subr.bf16.mxu0 0
      %1205 = vmatpush1.bf16.msra.mxu0 0
      %1206 = vmatprep.mubr.bf16.mxu0 0
      %1207 = vmatmul.mubr.bf16.gmra.mrb[0].mxu0 %v1124
      %v1208 = vpop.f32.mrb[0].mxu0
      %v1209 = vadd.f32 %v994, %v1208
      %v1210 = vpop.f32.mrb[0].mxu0
      %v1211 = vpop.f32.mrb[0].mxu0
      %v1212 = vadd.f32 %v997, %v1211
      %v1213 = vpop.f32.mrb[0].mxu0
      %1214 = vmatprep.mubr.bf16.mxu0 0
      %1215 = vmatmul.mubr.bf16.gmra.mrb[0].mxu0 %v879
      %v1216 = vpop.f32.mrb[0].mxu0
      %v1217 = vadd.f32 %v1002, %v1216
      %v1218 = vpop.f32.mrb[0].mxu0
      %v1219 = vpop.f32.mrb[0].mxu0
      %v1220 = vadd.f32 %v1005, %v1219
      %v1221 = vpop.f32.mrb[0].mxu0
      %1222 = vmatprep.mubr.bf16.mxu0 0
      %1223 = vmatmul.mubr.bf16.gmra.mrb[0].mxu0 %v880
      %v1224 = vpop.f32.mrb[0].mxu0
      %v1225 = vadd.f32 %v1010, %v1224
      %v1226 = vpop.f32.mrb[0].mxu0
      %v1227 = vpop.f32.mrb[0].mxu0
      %v1228 = vadd.f32 %v1013, %v1227
      %v1229 = vpop.f32.mrb[0].mxu0
      %1230 = vmatprep.mubr.bf16.mxu0 0
      %1231 = vmatmul.mubr.bf16.gmra.mrb[0].mxu0 %v881
      %v1232 = vpop.f32.mrb[0].mxu0
      %v1233 = vadd.f32 %v1018, %v1232
      %v1234 = vpop.f32.mrb[0].mxu0
      %v1235 = vpop.f32.mrb[0].mxu0
      %v1236 = vadd.f32 %v1021, %v1235
      %v1237 = vpop.f32.mrb[0].mxu0
      %1238 = vmatprep.mubr.bf16.mxu0 0
      %1239 = vmatmul.mubr.bf16.gmra.mrb[0].mxu0 %v882
      %v1240 = vpop.f32.mrb[0].mxu0
      %v1241 = vadd.f32 %v1026, %v1240
      %v1242 = vpop.f32.mrb[0].mxu0
      %v1243 = vpop.f32.mrb[0].mxu0
      %v1244 = vadd.f32 %v1029, %v1243
      %v1245 = vpop.f32.mrb[0].mxu0
      %1246 = vmatprep.mubr.bf16.mxu0 0
      %1247 = vmatmul.mubr.bf16.gmra.mrb[0].mxu0 %v883
      %v1248 = vpop.f32.mrb[0].mxu0
      %v1249 = vadd.f32 %v1034, %v1248
      %v1250 = vpop.f32.mrb[0].mxu0
      %v1251 = vpop.f32.mrb[0].mxu0
      %v1252 = vadd.f32 %v1037, %v1251
      %v1253 = vpop.f32.mrb[0].mxu0
      %1254 = vmatprep.mubr.bf16.mxu0 0
      %1255 = vmatmul.mubr.bf16.gmra.mrb[0].mxu0 %v884
      %v1256 = vpop.f32.mrb[0].mxu0
      %v1257 = vadd.f32 %v1042, %v1256
      %v1258 = vpop.f32.mrb[0].mxu0
      %v1259 = vpop.f32.mrb[0].mxu0
      %v1260 = vadd.f32 %v1045, %v1259
      %v1261 = vpop.f32.mrb[0].mxu0
      %1262 = vmatprep.mubr.bf16.mxu0 0
      %1263 = vmatmul.mubr.bf16.gmra.mrb[0].mxu0 %v885
      %v1264 = vpop.f32.mrb[0].mxu0
      %v1265 = vadd.f32 %v1050, %v1264
      %v1266 = vpop.f32.mrb[0].mxu0
      %v1267 = vpop.f32.mrb[0].mxu0
      %v1268 = vadd.f32 %v1053, %v1267
      %v1269 = vpop.f32.mrb[0].mxu0
      %1270 = vmatprep.mubr.bf16.mxu0 0
      %1271 = vmatmul.mubr.bf16.gmra.mrb[0].mxu0 %v886
      %v1272 = vpop.f32.mrb[0].mxu0
      %v1273 = vadd.f32 %v1058, %v1272
      %v1274 = vpop.f32.mrb[0].mxu0
      %v1275 = vpop.f32.mrb[0].mxu0
      %v1276 = vadd.f32 %v1061, %v1275
      %v1277 = vpop.f32.mrb[0].mxu0
      %1278 = vmatprep.mubr.bf16.mxu0 0
      %1279 = vmatmul.mubr.bf16.gmra.mrb[0].mxu0 %v887
      %v1280 = vpop.f32.mrb[0].mxu0
      %v1281 = vadd.f32 %v1066, %v1280
      %v1282 = vpop.f32.mrb[0].mxu0
      %v1283 = vpop.f32.mrb[0].mxu0
      %v1284 = vadd.f32 %v1069, %v1283
      %v1285 = vpop.f32.mrb[0].mxu0
      %1286 = vmatprep.mubr.bf16.mxu0 0
      %1287 = vmatmul.mubr.bf16.gmra.mrb[0].mxu0 %v888
      %v1288 = vpop.f32.mrb[0].mxu0
      %v1289 = vadd.f32 %v1074, %v1288
      %v1290 = vpop.f32.mrb[0].mxu0
      %v1291 = vpop.f32.mrb[0].mxu0
      %v1292 = vadd.f32 %v1077, %v1291
      %v1293 = vpop.f32.mrb[0].mxu0
      %1294 = vmatprep.mubr.bf16.mxu0 0
      %1295 = vmatmul.mubr.bf16.gmra.mrb[0].mxu0 %v889
      %v1296 = vpop.f32.mrb[0].mxu0
      %v1297 = vadd.f32 %v1082, %v1296
      %v1298 = vpop.f32.mrb[0].mxu0
      %v1299 = vpop.f32.mrb[0].mxu0
      %v1300 = vadd.f32 %v1085, %v1299
      %v1301 = vpop.f32.mrb[0].mxu0
      %1302 = vmatprep.mubr.bf16.mxu0 0
      %1303 = vmatmul.mubr.bf16.gmra.mrb[0].mxu0 %v890
      %v1304 = vpop.f32.mrb[0].mxu0
      %v1305 = vadd.f32 %v1090, %v1304
      %v1306 = vpop.f32.mrb[0].mxu0
      %v1307 = vpop.f32.mrb[0].mxu0
      %v1308 = vadd.f32 %v1093, %v1307
      %v1309 = vpop.f32.mrb[0].mxu0
      %1310 = vmatprep.mubr.bf16.mxu0 0
      %1311 = vmatmul.mubr.bf16.gmra.mrb[0].mxu0 %v891
      %v1312 = vpop.f32.mrb[0].mxu0
      %v1313 = vadd.f32 %v1098, %v1312
      %v1314 = vpop.f32.mrb[0].mxu0
      %v1315 = vpop.f32.mrb[0].mxu0
      %v1316 = vadd.f32 %v1101, %v1315
      %v1317 = vpop.f32.mrb[0].mxu0
      %1318 = vmatprep.mubr.bf16.mxu0 0
      %1319 = vmatmul.mubr.bf16.gmra.mrb[0].mxu0 %v892
      %v1320 = vpop.f32.mrb[0].mxu0
      %v1321 = vadd.f32 %v1106, %v1320
      %v1322 = vpop.f32.mrb[0].mxu0
      %v1323 = vpop.f32.mrb[0].mxu0
      %v1324 = vadd.f32 %v1109, %v1323
      %v1325 = vpop.f32.mrb[0].mxu0
      %1326 = vmatprep.mubr.bf16.mxu0 0
      %1327 = vmatmul.mubr.bf16.gmra.mrb[0].mxu0 %v893
      %v1328 = vpop.f32.mrb[0].mxu0
      %v1329 = vadd.f32 %v1114, %v1328
      %v1330 = vpop.f32.mrb[0].mxu0
      %v1331 = vpop.f32.mrb[0].mxu0
      %v1332 = vadd.f32 %v1117, %v1331
      %v1333 = vpop.f32.mrb[0].mxu0
      %1334 = vdwg.mxu0
      %s1335 = scalar_lea.vmem %s1, 384
      %v1336 = vld [vmem:[%s1335] sm:$0xf]
      %v1337 = vld [vmem:[%s1335 + $0x4] sm:$0xf]
      %v1338 = vld [vmem:[%s1335 + $0x8] sm:$0xf]
      %v1339 = vld [vmem:[%s1335 + $0xc] sm:$0xf]
      %v1340 = vld [vmem:[%s1335 + $0x10] sm:$0xf]
      %v1341 = vld [vmem:[%s1335 + $0x14] sm:$0xf]
      %v1342 = vld [vmem:[%s1335 + $0x18] sm:$0xf]
      %v1343 = vld [vmem:[%s1335 + $0x1c] sm:$0xf]
      %v1344 = vld [vmem:[%s1335 + $0x20] sm:$0xf]
      %v1345 = vld [vmem:[%s1335 + $0x24] sm:$0xf]
      %v1346 = vld [vmem:[%s1335 + $0x28] sm:$0xf]
      %v1347 = vld [vmem:[%s1335 + $0x2c] sm:$0xf]
      %v1348 = vld [vmem:[%s1335 + $0x30] sm:$0xf]
      %v1349 = vld [vmem:[%s1335 + $0x34] sm:$0xf]
      %v1350 = vld [vmem:[%s1335 + $0x38] sm:$0xf]
      %v1351 = vld [vmem:[%s1335 + $0x3c] sm:$0xf]
      %v1354 = vunpack.c.l.b16 %v780
      %v1355 = vunpack.c.l.b16 %v781
      %v1356 = vpack.c.b16 %v1355, %v1354
      %v1374 = vunpack.c.l.b16 %v1336
      %v1375 = vunpack.c.l.b16 %v1337
      %v1376 = vunpack.c.l.b16 %v1338
      %v1377 = vunpack.c.l.b16 %v1339
      %v1378 = vunpack.c.l.b16 %v1340
      %v1379 = vunpack.c.l.b16 %v1341
      %v1380 = vunpack.c.l.b16 %v1342
      %v1381 = vunpack.c.l.b16 %v1343
      %v1382 = vunpack.c.l.b16 %v1344
      %v1383 = vunpack.c.l.b16 %v1345
      %v1384 = vunpack.c.l.b16 %v1346
      %v1385 = vunpack.c.l.b16 %v1347
      %v1386 = vunpack.c.l.b16 %v1348
      %v1387 = vunpack.c.l.b16 %v1349
      %v1388 = vunpack.c.l.b16 %v1350
      %v1389 = vunpack.c.l.b16 %v1351
      %v1390 = vpack.c.b16 %v1375, %v1374
      %v1391 = vpack.c.b16 %v1377, %v1376
      %v1392 = vpack.c.b16 %v1379, %v1378
      %v1393 = vpack.c.b16 %v1381, %v1380
      %v1394 = vpack.c.b16 %v1383, %v1382
      %v1395 = vpack.c.b16 %v1385, %v1384
      %v1396 = vpack.c.b16 %v1387, %v1386
      %v1397 = vpack.c.b16 %v1389, %v1388
      %1406 = vmatprep.subr.bf16.mxu0 0
      %1407 = vmatpush1.bf16.msra.mxu0 %v1390
      %1408 = vmatprep.subr.bf16.mxu0 0
      %1409 = vmatpush1.bf16.msra.mxu0 %v1391
      %1410 = vmatprep.subr.bf16.mxu0 0
      %1411 = vmatpush1.bf16.msra.mxu0 %v1392
      %1412 = vmatprep.subr.bf16.mxu0 0
      %1413 = vmatpush1.bf16.msra.mxu0 %v1393
      %1414 = vmatprep.subr.bf16.mxu0 0
      %1415 = vmatpush1.bf16.msra.mxu0 %v1394
      %1416 = vmatprep.subr.bf16.mxu0 0
      %1417 = vmatpush1.bf16.msra.mxu0 %v1395
      %1418 = vmatprep.subr.bf16.mxu0 0
      %1419 = vmatpush1.bf16.msra.mxu0 %v1396
      %1420 = vmatprep.subr.bf16.mxu0 0
      %1421 = vmatpush1.bf16.msra.mxu0 %v1397
      %1422 = vmatprep.subr.bf16.mxu0 0
      %1423 = vmatpush1.bf16.msra.mxu0 0
      %1424 = vmatprep.subr.bf16.mxu0 0
      %1425 = vmatpush1.bf16.msra.mxu0 0
      %1426 = vmatprep.subr.bf16.mxu0 0
      %1427 = vmatpush1.bf16.msra.mxu0 0
      %1428 = vmatprep.subr.bf16.mxu0 0
      %1429 = vmatpush1.bf16.msra.mxu0 0
      %1430 = vmatprep.subr.bf16.mxu0 0
      %1431 = vmatpush1.bf16.msra.mxu0 0
      %1432 = vmatprep.subr.bf16.mxu0 0
      %1433 = vmatpush1.bf16.msra.mxu0 0
      %1434 = vmatprep.subr.bf16.mxu0 0
      %1435 = vmatpush1.bf16.msra.mxu0 0
      %1436 = vmatprep.subr.bf16.mxu0 0
      %1437 = vmatpush1.bf16.msra.mxu0 0
      %1438 = vmatprep.mubr.bf16.mxu0 0
      %1439 = vmatmul.mubr.bf16.gmra.mrb[0].mxu0 %v880
      %v1440 = vpop.f32.mrb[0].mxu0
      %v1441 = vadd.f32 0.0, %v1440
      %v1442 = vpop.f32.mrb[0].mxu0
      %v1443 = vpop.f32.mrb[0].mxu0
      %v1444 = vadd.f32 0.0, %v1443
      %v1445 = vpop.f32.mrb[0].mxu0
      %1446 = vmatprep.mubr.bf16.mxu0 0
      %1447 = vmatmul.mubr.bf16.gmra.mrb[0].mxu0 %v881
      %v1448 = vpop.f32.mrb[0].mxu0
      %v1449 = vadd.f32 0.0, %v1448
      %v1450 = vpop.f32.mrb[0].mxu0
      %v1451 = vpop.f32.mrb[0].mxu0
      %v1452 = vadd.f32 0.0, %v1451
      %v1453 = vpop.f32.mrb[0].mxu0
      %1454 = vmatprep.mubr.bf16.mxu0 0
      %1455 = vmatmul.mubr.bf16.gmra.mrb[0].mxu0 %v882
      %v1456 = vpop.f32.mrb[0].mxu0
      %v1457 = vadd.f32 0.0, %v1456
      %v1458 = vpop.f32.mrb[0].mxu0
      %v1459 = vpop.f32.mrb[0].mxu0
      %v1460 = vadd.f32 0.0, %v1459
      %v1461 = vpop.f32.mrb[0].mxu0
      %1462 = vmatprep.mubr.bf16.mxu0 0
      %1463 = vmatmul.mubr.bf16.gmra.mrb[0].mxu0 %v883
      %v1464 = vpop.f32.mrb[0].mxu0
      %v1465 = vadd.f32 0.0, %v1464
      %v1466 = vpop.f32.mrb[0].mxu0
      %v1467 = vpop.f32.mrb[0].mxu0
      %v1468 = vadd.f32 0.0, %v1467
      %v1469 = vpop.f32.mrb[0].mxu0
      %1470 = vmatprep.mubr.bf16.mxu0 0
      %1471 = vmatmul.mubr.bf16.gmra.mrb[0].mxu0 %v884
      %v1472 = vpop.f32.mrb[0].mxu0
      %v1473 = vadd.f32 0.0, %v1472
      %v1474 = vpop.f32.mrb[0].mxu0
      %v1475 = vpop.f32.mrb[0].mxu0
      %v1476 = vadd.f32 0.0, %v1475
      %v1477 = vpop.f32.mrb[0].mxu0
      %1478 = vmatprep.mubr.bf16.mxu0 0
      %1479 = vmatmul.mubr.bf16.gmra.mrb[0].mxu0 %v885
      %v1480 = vpop.f32.mrb[0].mxu0
      %v1481 = vadd.f32 0.0, %v1480
      %v1482 = vpop.f32.mrb[0].mxu0
      %v1483 = vpop.f32.mrb[0].mxu0
      %v1484 = vadd.f32 0.0, %v1483
      %v1485 = vpop.f32.mrb[0].mxu0
      %1486 = vmatprep.mubr.bf16.mxu0 0
      %1487 = vmatmul.mubr.bf16.gmra.mrb[0].mxu0 %v886
      %v1488 = vpop.f32.mrb[0].mxu0
      %v1489 = vadd.f32 0.0, %v1488
      %v1490 = vpop.f32.mrb[0].mxu0
      %v1491 = vpop.f32.mrb[0].mxu0
      %v1492 = vadd.f32 0.0, %v1491
      %v1493 = vpop.f32.mrb[0].mxu0
      %1494 = vmatprep.mubr.bf16.mxu0 0
      %1495 = vmatmul.mubr.bf16.gmra.mrb[0].mxu0 %v887
      %v1496 = vpop.f32.mrb[0].mxu0
      %v1497 = vadd.f32 0.0, %v1496
      %v1498 = vpop.f32.mrb[0].mxu0
      %v1499 = vpop.f32.mrb[0].mxu0
      %v1500 = vadd.f32 0.0, %v1499
      %v1501 = vpop.f32.mrb[0].mxu0
      %1502 = vmatprep.mubr.bf16.mxu0 0
      %1503 = vmatmul.mubr.bf16.gmra.mrb[0].mxu0 %v888
      %v1504 = vpop.f32.mrb[0].mxu0
      %v1505 = vadd.f32 0.0, %v1504
      %v1506 = vpop.f32.mrb[0].mxu0
      %v1507 = vpop.f32.mrb[0].mxu0
      %v1508 = vadd.f32 0.0, %v1507
      %v1509 = vpop.f32.mrb[0].mxu0
      %1510 = vmatprep.mubr.bf16.mxu0 0
      %1511 = vmatmul.mubr.bf16.gmra.mrb[0].mxu0 %v889
      %v1512 = vpop.f32.mrb[0].mxu0
      %v1513 = vadd.f32 0.0, %v1512
      %v1514 = vpop.f32.mrb[0].mxu0
      %v1515 = vpop.f32.mrb[0].mxu0
      %v1516 = vadd.f32 0.0, %v1515
      %v1517 = vpop.f32.mrb[0].mxu0
      %1518 = vmatprep.mubr.bf16.mxu0 0
      %1519 = vmatmul.mubr.bf16.gmra.mrb[0].mxu0 %v890
      %v1520 = vpop.f32.mrb[0].mxu0
      %v1521 = vadd.f32 0.0, %v1520
      %v1522 = vpop.f32.mrb[0].mxu0
      %v1523 = vpop.f32.mrb[0].mxu0
      %v1524 = vadd.f32 0.0, %v1523
      %v1525 = vpop.f32.mrb[0].mxu0
      %1526 = vmatprep.mubr.bf16.mxu0 0
      %1527 = vmatmul.mubr.bf16.gmra.mrb[0].mxu0 %v891
      %v1528 = vpop.f32.mrb[0].mxu0
      %v1529 = vadd.f32 0.0, %v1528
      %v1530 = vpop.f32.mrb[0].mxu0
      %v1531 = vpop.f32.mrb[0].mxu0
      %v1532 = vadd.f32 0.0, %v1531
      %v1533 = vpop.f32.mrb[0].mxu0
      %1534 = vmatprep.mubr.bf16.mxu0 0
      %1535 = vmatmul.mubr.bf16.gmra.mrb[0].mxu0 %v892
      %v1536 = vpop.f32.mrb[0].mxu0
      %v1537 = vadd.f32 0.0, %v1536
      %v1538 = vpop.f32.mrb[0].mxu0
      %v1539 = vpop.f32.mrb[0].mxu0
      %v1540 = vadd.f32 0.0, %v1539
      %v1541 = vpop.f32.mrb[0].mxu0
      %1542 = vmatprep.mubr.bf16.mxu0 0
      %1543 = vmatmul.mubr.bf16.gmra.mrb[0].mxu0 %v893
      %v1544 = vpop.f32.mrb[0].mxu0
      %v1545 = vadd.f32 0.0, %v1544
      %v1546 = vpop.f32.mrb[0].mxu0
      %v1547 = vpop.f32.mrb[0].mxu0
      %v1548 = vadd.f32 0.0, %v1547
      %v1549 = vpop.f32.mrb[0].mxu0
      %1550 = vmatprep.mubr.bf16.mxu0 0
      %1551 = vmatmul.mubr.bf16.gmra.mrb[0].mxu0 %v894
      %v1552 = vpop.f32.mrb[0].mxu0
      %v1553 = vadd.f32 0.0, %v1552
      %v1554 = vpop.f32.mrb[0].mxu0
      %v1555 = vpop.f32.mrb[0].mxu0
      %v1556 = vadd.f32 0.0, %v1555
      %v1557 = vpop.f32.mrb[0].mxu0
      %1558 = vmatprep.mubr.bf16.mxu0 0
      %1559 = vmatmul.mubr.bf16.gmra.mrb[0].mxu0 %v1356
      %v1560 = vpop.f32.mrb[0].mxu0
      %v1561 = vadd.f32 0.0, %v1560
      %v1562 = vpop.f32.mrb[0].mxu0
      %v1563 = vpop.f32.mrb[0].mxu0
      %v1564 = vadd.f32 0.0, %v1563
      %v1565 = vpop.f32.mrb[0].mxu0
      %1566 = vdwg.mxu0
      %v1567 = vadd.f32 %v1209, %v1441
      %v1568 = vadd.f32 %v1212, %v1444
      %v1569 = vadd.f32 %v1217, %v1449
      %v1570 = vadd.f32 %v1220, %v1452
      %v1571 = vadd.f32 %v1225, %v1457
      %v1572 = vadd.f32 %v1228, %v1460
      %v1573 = vadd.f32 %v1233, %v1465
      %v1574 = vadd.f32 %v1236, %v1468
      %v1575 = vadd.f32 %v1241, %v1473
      %v1576 = vadd.f32 %v1244, %v1476
      %v1577 = vadd.f32 %v1249, %v1481
      %v1578 = vadd.f32 %v1252, %v1484
      %v1579 = vadd.f32 %v1257, %v1489
      %v1580 = vadd.f32 %v1260, %v1492
      %v1581 = vadd.f32 %v1265, %v1497
      %v1582 = vadd.f32 %v1268, %v1500
      %v1583 = vadd.f32 %v1273, %v1505
      %v1584 = vadd.f32 %v1276, %v1508
      %v1585 = vadd.f32 %v1281, %v1513
      %v1586 = vadd.f32 %v1284, %v1516
      %v1587 = vadd.f32 %v1289, %v1521
      %v1588 = vadd.f32 %v1292, %v1524
      %v1589 = vadd.f32 %v1297, %v1529
      %v1590 = vadd.f32 %v1300, %v1532
      %v1591 = vadd.f32 %v1305, %v1537
      %v1592 = vadd.f32 %v1308, %v1540
      %v1593 = vadd.f32 %v1313, %v1545
      %v1594 = vadd.f32 %v1316, %v1548
      %v1595 = vadd.f32 %v1321, %v1553
      %v1596 = vadd.f32 %v1324, %v1556
      %v1597 = vadd.f32 %v1329, %v1561
      %v1598 = vadd.f32 %v1332, %v1564
      %v1599 = vld [vmem:[#allocation2] sm:$0xf]
      %v1600 = vld [vmem:[#allocation2 + $0x4] sm:$0xf]
      %v1601 = vld [vmem:[#allocation2 + $0x8] sm:$0x1]
      %v1602 = vld [vmem:[#allocation2 + $0xc] sm:$0xf]
      %v1603 = vld [vmem:[#allocation2 + $0x10] sm:$0xf]
      %v1604 = vld [vmem:[#allocation2 + $0x14] sm:$0x1]
      %v1605 = vld [vmem:[#allocation2 + $0x18] sm:$0xf]
      %v1606 = vld [vmem:[#allocation2 + $0x1c] sm:$0xf]
      %v1607 = vld [vmem:[#allocation2 + $0x20] sm:$0x1]
      %v1608 = vld [vmem:[#allocation2 + $0x24] sm:$0xf]
      %v1609 = vld [vmem:[#allocation2 + $0x28] sm:$0xf]
      %v1610 = vld [vmem:[#allocation2 + $0x2c] sm:$0x1]
      %v1611 = vld [vmem:[#allocation2 + $0x30] sm:$0xf]
      %v1612 = vld [vmem:[#allocation2 + $0x34] sm:$0xf]
      %v1613 = vld [vmem:[#allocation2 + $0x38] sm:$0x1]
      %v1614 = vld [vmem:[#allocation2 + $0x3c] sm:$0xf]
      %v1615 = vld [vmem:[#allocation2 + $0x40] sm:$0xf]
      %v1616 = vld [vmem:[#allocation2 + $0x44] sm:$0x1]
      %v1617 = vld [vmem:[#allocation2 + $0x48] sm:$0xf]
      %v1618 = vld [vmem:[#allocation2 + $0x4c] sm:$0xf]
      %v1619 = vld [vmem:[#allocation2 + $0x50] sm:$0x1]
      %v1620 = vld [vmem:[#allocation2 + $0x54] sm:$0xf]
      %v1621 = vld [vmem:[#allocation2 + $0x58] sm:$0xf]
      %v1622 = vld [vmem:[#allocation2 + $0x5c] sm:$0x1]
      %v1623 = vld [vmem:[#allocation2 + $0x60] sm:$0xf]
      %v1624 = vld [vmem:[#allocation2 + $0x64] sm:$0xf]
      %v1625 = vld [vmem:[#allocation2 + $0x68] sm:$0x1]
      %v1626 = vld [vmem:[#allocation2 + $0x6c] sm:$0xf]
      %v1627 = vld [vmem:[#allocation2 + $0x70] sm:$0xf]
      %v1628 = vld [vmem:[#allocation2 + $0x74] sm:$0x1]
      %v1629 = vld [vmem:[#allocation2 + $0x78] sm:$0xf]
      %v1630 = vld [vmem:[#allocation2 + $0x7c] sm:$0xf]
      %v1631 = vld [vmem:[#allocation2 + $0x80] sm:$0x1]
      %v1632 = vld [vmem:[#allocation2 + $0x84] sm:$0xf]
      %v1633 = vld [vmem:[#allocation2 + $0x88] sm:$0xf]
      %v1634 = vld [vmem:[#allocation2 + $0x8c] sm:$0x1]
      %v1635 = vld [vmem:[#allocation2 + $0x90] sm:$0xf]
      %v1636 = vld [vmem:[#allocation2 + $0x94] sm:$0xf]
      %v1637 = vld [vmem:[#allocation2 + $0x98] sm:$0x1]
      %v1638 = vld [vmem:[#allocation2 + $0x9c] sm:$0xf]
      %v1639 = vld [vmem:[#allocation2 + $0xa0] sm:$0xf]
      %v1640 = vld [vmem:[#allocation2 + $0xa4] sm:$0x1]
      %v1641 = vld [vmem:[#allocation2 + $0xa8] sm:$0xf]
      %v1642 = vld [vmem:[#allocation2 + $0xac] sm:$0xf]
      %v1643 = vld [vmem:[#allocation2 + $0xb0] sm:$0x1]
      %v1644 = vld [vmem:[#allocation2 + $0xb4] sm:$0xf]
      %v1645 = vld [vmem:[#allocation2 + $0xb8] sm:$0xf]
      %v1646 = vld [vmem:[#allocation2 + $0xbc] sm:$0x1]
      %v1647 = vld [vmem:[#allocation2 + $0xc0] sm:$0xf]
      %v1648 = vld [vmem:[#allocation2 + $0xc4] sm:$0xf]
      %v1649 = vld [vmem:[#allocation2 + $0xc8] sm:$0x1]
      %v1650 = vld [vmem:[#allocation2 + $0xcc] sm:$0xf]
      %v1651 = vld [vmem:[#allocation2 + $0xd0] sm:$0xf]
      %v1652 = vld [vmem:[#allocation2 + $0xd4] sm:$0x1]
      %vm1653 = vsmask.f32 3328
      %vm1654 = vsmask.f32 7440
      %vm1655 = vmor %vm1653, %vm1654
      %v1657 = vshrl.u32 %v1599, 16
      %v1659 = vrot.slane %v1657, 4
      %v1660 = vshll.u32 %v1599, 16
      %v1662 = vrot.slane %v1660, 5
      %v1663 = vor.u32 %v1659, %v1662
      %v1664 = vrot.slane %v1663, 4
      %v1666 = vshll.u32 %v1600, 16
      %v1668 = vrot.slane %v1666, 5
      %v1669 = vsel %vm1655, %v1664, %v1668
      %v1670 = vshrl.u32 %v1600, 16
      %v1672 = vrot.slane %v1670, 4
      %v1673 = vor.u32 %v1672, %v1668
      %v1674 = vrot.slane %v1673, 4
      %v1676 = vshll.u32 %v1601, 16
      %v1678 = vrot.slane %v1676, 5
      %v1679 = vsel %vm1655, %v1674, %v1678
      %v1681 = vshrl.u32 %v1602, 16
      %v1683 = vrot.slane %v1681, 4
      %v1684 = vshll.u32 %v1602, 16
      %v1686 = vrot.slane %v1684, 5
      %v1687 = vor.u32 %v1683, %v1686
      %v1688 = vrot.slane %v1687, 4
      %v1690 = vshll.u32 %v1603, 16
      %v1692 = vrot.slane %v1690, 5
      %v1693 = vsel %vm1655, %v1688, %v1692
      %v1694 = vshrl.u32 %v1603, 16
      %v1696 = vrot.slane %v1694, 4
      %v1697 = vor.u32 %v1696, %v1692
      %v1698 = vrot.slane %v1697, 4
      %v1700 = vshll.u32 %v1604, 16
      %v1702 = vrot.slane %v1700, 5
      %v1703 = vsel %vm1655, %v1698, %v1702
      %v1705 = vshrl.u32 %v1605, 16
      %v1707 = vrot.slane %v1705, 4
      %v1708 = vshll.u32 %v1605, 16
      %v1710 = vrot.slane %v1708, 5
      %v1711 = vor.u32 %v1707, %v1710
      %v1712 = vrot.slane %v1711, 4
      %v1714 = vshll.u32 %v1606, 16
      %v1716 = vrot.slane %v1714, 5
      %v1717 = vsel %vm1655, %v1712, %v1716
      %v1718 = vshrl.u32 %v1606, 16
      %v1720 = vrot.slane %v1718, 4
      %v1721 = vor.u32 %v1720, %v1716
      %v1722 = vrot.slane %v1721, 4
      %v1724 = vshll.u32 %v1607, 16
      %v1726 = vrot.slane %v1724, 5
      %v1727 = vsel %vm1655, %v1722, %v1726
      %v1729 = vshrl.u32 %v1608, 16
      %v1731 = vrot.slane %v1729, 4
      %v1732 = vshll.u32 %v1608, 16
      %v1734 = vrot.slane %v1732, 5
      %v1735 = vor.u32 %v1731, %v1734
      %v1736 = vrot.slane %v1735, 4
      %v1738 = vshll.u32 %v1609, 16
      %v1740 = vrot.slane %v1738, 5
      %v1741 = vsel %vm1655, %v1736, %v1740
      %v1742 = vshrl.u32 %v1609, 16
      %v1744 = vrot.slane %v1742, 4
      %v1745 = vor.u32 %v1744, %v1740
      %v1746 = vrot.slane %v1745, 4
      %v1748 = vshll.u32 %v1610, 16
      %v1750 = vrot.slane %v1748, 5
      %v1751 = vsel %vm1655, %v1746, %v1750
      %v1753 = vshrl.u32 %v1611, 16
      %v1755 = vrot.slane %v1753, 4
      %v1756 = vshll.u32 %v1611, 16
      %v1758 = vrot.slane %v1756, 5
      %v1759 = vor.u32 %v1755, %v1758
      %v1760 = vrot.slane %v1759, 4
      %v1762 = vshll.u32 %v1612, 16
      %v1764 = vrot.slane %v1762, 5
      %v1765 = vsel %vm1655, %v1760, %v1764
      %v1766 = vshrl.u32 %v1612, 16
      %v1768 = vrot.slane %v1766, 4
      %v1769 = vor.u32 %v1768, %v1764
      %v1770 = vrot.slane %v1769, 4
      %v1772 = vshll.u32 %v1613, 16
      %v1774 = vrot.slane %v1772, 5
      %v1775 = vsel %vm1655, %v1770, %v1774
      %v1777 = vshrl.u32 %v1614, 16
      %v1779 = vrot.slane %v1777, 4
      %v1780 = vshll.u32 %v1614, 16
      %v1782 = vrot.slane %v1780, 5
      %v1783 = vor.u32 %v1779, %v1782
      %v1784 = vrot.slane %v1783, 4
      %v1786 = vshll.u32 %v1615, 16
      %v1788 = vrot.slane %v1786, 5
      %v1789 = vsel %vm1655, %v1784, %v1788
      %v1790 = vshrl.u32 %v1615, 16
      %v1792 = vrot.slane %v1790, 4
      %v1793 = vor.u32 %v1792, %v1788
      %v1794 = vrot.slane %v1793, 4
      %v1796 = vshll.u32 %v1616, 16
      %v1798 = vrot.slane %v1796, 5
      %v1799 = vsel %vm1655, %v1794, %v1798
      %v1801 = vshrl.u32 %v1617, 16
      %v1803 = vrot.slane %v1801, 4
      %v1804 = vshll.u32 %v1617, 16
      %v1806 = vrot.slane %v1804, 5
      %v1807 = vor.u32 %v1803, %v1806
      %v1808 = vrot.slane %v1807, 4
      %v1810 = vshll.u32 %v1618, 16
      %v1812 = vrot.slane %v1810, 5
      %v1813 = vsel %vm1655, %v1808, %v1812
      %v1814 = vshrl.u32 %v1618, 16
      %v1816 = vrot.slane %v1814, 4
      %v1817 = vor.u32 %v1816, %v1812
      %v1818 = vrot.slane %v1817, 4
      %v1820 = vshll.u32 %v1619, 16
      %v1822 = vrot.slane %v1820, 5
      %v1823 = vsel %vm1655, %v1818, %v1822
      %v1825 = vshrl.u32 %v1620, 16
      %v1827 = vrot.slane %v1825, 4
      %v1828 = vshll.u32 %v1620, 16
      %v1830 = vrot.slane %v1828, 5
      %v1831 = vor.u32 %v1827, %v1830
      %v1832 = vrot.slane %v1831, 4
      %v1834 = vshll.u32 %v1621, 16
      %v1836 = vrot.slane %v1834, 5
      %v1837 = vsel %vm1655, %v1832, %v1836
      %v1838 = vshrl.u32 %v1621, 16
      %v1840 = vrot.slane %v1838, 4
      %v1841 = vor.u32 %v1840, %v1836
      %v1842 = vrot.slane %v1841, 4
      %v1844 = vshll.u32 %v1622, 16
      %v1846 = vrot.slane %v1844, 5
      %v1847 = vsel %vm1655, %v1842, %v1846
      %v1849 = vshrl.u32 %v1623, 16
      %v1851 = vrot.slane %v1849, 4
      %v1852 = vshll.u32 %v1623, 16
      %v1854 = vrot.slane %v1852, 5
      %v1855 = vor.u32 %v1851, %v1854
      %v1856 = vrot.slane %v1855, 4
      %v1858 = vshll.u32 %v1624, 16
      %v1860 = vrot.slane %v1858, 5
      %v1861 = vsel %vm1655, %v1856, %v1860
      %v1862 = vshrl.u32 %v1624, 16
      %v1864 = vrot.slane %v1862, 4
      %v1865 = vor.u32 %v1864, %v1860
      %v1866 = vrot.slane %v1865, 4
      %v1868 = vshll.u32 %v1625, 16
      %v1870 = vrot.slane %v1868, 5
      %v1871 = vsel %vm1655, %v1866, %v1870
      %v1873 = vshrl.u32 %v1626, 16
      %v1875 = vrot.slane %v1873, 4
      %v1876 = vshll.u32 %v1626, 16
      %v1878 = vrot.slane %v1876, 5
      %v1879 = vor.u32 %v1875, %v1878
      %v1880 = vrot.slane %v1879, 4
      %v1882 = vshll.u32 %v1627, 16
      %v1884 = vrot.slane %v1882, 5
      %v1885 = vsel %vm1655, %v1880, %v1884
      %v1886 = vshrl.u32 %v1627, 16
      %v1888 = vrot.slane %v1886, 4
      %v1889 = vor.u32 %v1888, %v1884
      %v1890 = vrot.slane %v1889, 4
      %v1892 = vshll.u32 %v1628, 16
      %v1894 = vrot.slane %v1892, 5
      %v1895 = vsel %vm1655, %v1890, %v1894
      %v1897 = vshrl.u32 %v1629, 16
      %v1899 = vrot.slane %v1897, 4
      %v1900 = vshll.u32 %v1629, 16
      %v1902 = vrot.slane %v1900, 5
      %v1903 = vor.u32 %v1899, %v1902
      %v1904 = vrot.slane %v1903, 4
      %v1906 = vshll.u32 %v1630, 16
      %v1908 = vrot.slane %v1906, 5
      %v1909 = vsel %vm1655, %v1904, %v1908
      %v1910 = vshrl.u32 %v1630, 16
      %v1912 = vrot.slane %v1910, 4
      %v1913 = vor.u32 %v1912, %v1908
      %v1914 = vrot.slane %v1913, 4
      %v1916 = vshll.u32 %v1631, 16
      %v1918 = vrot.slane %v1916, 5
      %v1919 = vsel %vm1655, %v1914, %v1918
      %v1921 = vshrl.u32 %v1632, 16
      %v1923 = vrot.slane %v1921, 4
      %v1924 = vshll.u32 %v1632, 16
      %v1926 = vrot.slane %v1924, 5
      %v1927 = vor.u32 %v1923, %v1926
      %v1928 = vrot.slane %v1927, 4
      %v1930 = vshll.u32 %v1633, 16
      %v1932 = vrot.slane %v1930, 5
      %v1933 = vsel %vm1655, %v1928, %v1932
      %v1934 = vshrl.u32 %v1633, 16
      %v1936 = vrot.slane %v1934, 4
      %v1937 = vor.u32 %v1936, %v1932
      %v1938 = vrot.slane %v1937, 4
      %v1940 = vshll.u32 %v1634, 16
      %v1942 = vrot.slane %v1940, 5
      %v1943 = vsel %vm1655, %v1938, %v1942
      %v1945 = vshrl.u32 %v1635, 16
      %v1947 = vrot.slane %v1945, 4
      %v1948 = vshll.u32 %v1635, 16
      %v1950 = vrot.slane %v1948, 5
      %v1951 = vor.u32 %v1947, %v1950
      %v1952 = vrot.slane %v1951, 4
      %v1954 = vshll.u32 %v1636, 16
      %v1956 = vrot.slane %v1954, 5
      %v1957 = vsel %vm1655, %v1952, %v1956
      %v1958 = vshrl.u32 %v1636, 16
      %v1960 = vrot.slane %v1958, 4
      %v1961 = vor.u32 %v1960, %v1956
      %v1962 = vrot.slane %v1961, 4
      %v1964 = vshll.u32 %v1637, 16
      %v1966 = vrot.slane %v1964, 5
      %v1967 = vsel %vm1655, %v1962, %v1966
      %v1969 = vshrl.u32 %v1638, 16
      %v1971 = vrot.slane %v1969, 4
      %v1972 = vshll.u32 %v1638, 16
      %v1974 = vrot.slane %v1972, 5
      %v1975 = vor.u32 %v1971, %v1974
      %v1976 = vrot.slane %v1975, 4
      %v1978 = vshll.u32 %v1639, 16
      %v1980 = vrot.slane %v1978, 5
      %v1981 = vsel %vm1655, %v1976, %v1980
      %v1982 = vshrl.u32 %v1639, 16
      %v1984 = vrot.slane %v1982, 4
      %v1985 = vor.u32 %v1984, %v1980
      %v1986 = vrot.slane %v1985, 4
      %v1988 = vshll.u32 %v1640, 16
      %v1990 = vrot.slane %v1988, 5
      %v1991 = vsel %vm1655, %v1986, %v1990
      %v1993 = vshrl.u32 %v1641, 16
      %v1995 = vrot.slane %v1993, 4
      %v1996 = vshll.u32 %v1641, 16
      %v1998 = vrot.slane %v1996, 5
      %v1999 = vor.u32 %v1995, %v1998
      %v2000 = vrot.slane %v1999, 4
      %v2002 = vshll.u32 %v1642, 16
      %v2004 = vrot.slane %v2002, 5
      %v2005 = vsel %vm1655, %v2000, %v2004
      %v2006 = vshrl.u32 %v1642, 16
      %v2008 = vrot.slane %v2006, 4
      %v2009 = vor.u32 %v2008, %v2004
      %v2010 = vrot.slane %v2009, 4
      %v2012 = vshll.u32 %v1643, 16
      %v2014 = vrot.slane %v2012, 5
      %v2015 = vsel %vm1655, %v2010, %v2014
      %v2017 = vshrl.u32 %v1644, 16
      %v2019 = vrot.slane %v2017, 4
      %v2020 = vshll.u32 %v1644, 16
      %v2022 = vrot.slane %v2020, 5
      %v2023 = vor.u32 %v2019, %v2022
      %v2024 = vrot.slane %v2023, 4
      %v2026 = vshll.u32 %v1645, 16
      %v2028 = vrot.slane %v2026, 5
      %v2029 = vsel %vm1655, %v2024, %v2028
      %v2030 = vshrl.u32 %v1645, 16
      %v2032 = vrot.slane %v2030, 4
      %v2033 = vor.u32 %v2032, %v2028
      %v2034 = vrot.slane %v2033, 4
      %v2036 = vshll.u32 %v1646, 16
      %v2038 = vrot.slane %v2036, 5
      %v2039 = vsel %vm1655, %v2034, %v2038
      %s2040 = scalar_lea.vmem %s1, 64
      %v2041 = vld [vmem:[%s2040] sm:$0xf]
      %v2042 = vld [vmem:[%s2040 + $0x4] sm:$0xf]
      %v2043 = vld [vmem:[%s2040 + $0x8] sm:$0xf]
      %v2044 = vld [vmem:[%s2040 + $0xc] sm:$0xf]
      %v2045 = vld [vmem:[%s2040 + $0x10] sm:$0xf]
      %v2046 = vld [vmem:[%s2040 + $0x14] sm:$0xf]
      %v2047 = vld [vmem:[%s2040 + $0x18] sm:$0xf]
      %v2048 = vld [vmem:[%s2040 + $0x1c] sm:$0xf]
      %v2049 = vld [vmem:[%s2040 + $0x20] sm:$0xf]
      %v2050 = vld [vmem:[%s2040 + $0x24] sm:$0xf]
      %v2051 = vld [vmem:[%s2040 + $0x28] sm:$0xf]
      %v2052 = vld [vmem:[%s2040 + $0x2c] sm:$0xf]
      %v2053 = vld [vmem:[%s2040 + $0x30] sm:$0xf]
      %v2054 = vld [vmem:[%s2040 + $0x34] sm:$0xf]
      %v2055 = vld [vmem:[%s2040 + $0x38] sm:$0xf]
      %v2056 = vld [vmem:[%s2040 + $0x3c] sm:$0xf]
      %v2057 = vunpack.c.l.b16 %v1669
      %v2058 = vunpack.c.l.b16 %v1679
      %v2059 = vunpack.c.l.b16 %v1693
      %v2060 = vunpack.c.l.b16 %v1703
      %v2061 = vunpack.c.l.b16 %v1717
      %v2062 = vunpack.c.l.b16 %v1727
      %v2063 = vunpack.c.l.b16 %v1741
      %v2064 = vunpack.c.l.b16 %v1751
      %v2065 = vunpack.c.l.b16 %v1765
      %v2066 = vunpack.c.l.b16 %v1775
      %v2067 = vunpack.c.l.b16 %v1789
      %v2068 = vunpack.c.l.b16 %v1799
      %v2069 = vunpack.c.l.b16 %v1813
      %v2070 = vunpack.c.l.b16 %v1823
      %v2071 = vunpack.c.l.b16 %v1837
      %v2072 = vunpack.c.l.b16 %v1847
      %v2073 = vunpack.c.l.b16 %v1861
      %v2074 = vunpack.c.l.b16 %v1871
      %v2075 = vunpack.c.l.b16 %v1885
      %v2076 = vunpack.c.l.b16 %v1895
      %v2077 = vunpack.c.l.b16 %v1909
      %v2078 = vunpack.c.l.b16 %v1919
      %v2079 = vunpack.c.l.b16 %v1933
      %v2080 = vunpack.c.l.b16 %v1943
      %v2081 = vunpack.c.l.b16 %v1957
      %v2082 = vunpack.c.l.b16 %v1967
      %v2083 = vunpack.c.l.b16 %v1981
      %v2084 = vunpack.c.l.b16 %v1991
      %v2085 = vunpack.c.l.b16 %v2005
      %v2086 = vunpack.c.l.b16 %v2015
      %v2087 = vunpack.c.l.b16 %v2029
      %v2088 = vunpack.c.l.b16 %v2039
      %v2089 = vpack.c.b16 %v2058, %v2057
      %v2090 = vpack.c.b16 %v2060, %v2059
      %v2091 = vpack.c.b16 %v2062, %v2061
      %v2092 = vpack.c.b16 %v2064, %v2063
      %v2093 = vpack.c.b16 %v2066, %v2065
      %v2094 = vpack.c.b16 %v2068, %v2067
      %v2095 = vpack.c.b16 %v2070, %v2069
      %v2096 = vpack.c.b16 %v2072, %v2071
      %v2097 = vpack.c.b16 %v2074, %v2073
      %v2098 = vpack.c.b16 %v2076, %v2075
      %v2099 = vpack.c.b16 %v2078, %v2077
      %v2100 = vpack.c.b16 %v2080, %v2079
      %v2101 = vpack.c.b16 %v2082, %v2081
      %v2102 = vpack.c.b16 %v2084, %v2083
      %v2103 = vpack.c.b16 %v2086, %v2085
      %v2104 = vpack.c.b16 %v2088, %v2087
      %v2137 = vunpack.c.l.b16 %v2041
      %v2138 = vunpack.c.l.b16 %v2042
      %v2139 = vunpack.c.l.b16 %v2043
      %v2140 = vunpack.c.l.b16 %v2044
      %v2141 = vunpack.c.l.b16 %v2045
      %v2142 = vunpack.c.l.b16 %v2046
      %v2143 = vunpack.c.l.b16 %v2047
      %v2144 = vunpack.c.l.b16 %v2048
      %v2145 = vunpack.c.l.b16 %v2049
      %v2146 = vunpack.c.l.b16 %v2050
      %v2147 = vunpack.c.l.b16 %v2051
      %v2148 = vunpack.c.l.b16 %v2052
      %v2149 = vunpack.c.l.b16 %v2053
      %v2150 = vunpack.c.l.b16 %v2054
      %v2151 = vunpack.c.l.b16 %v2055
      %v2152 = vunpack.c.l.b16 %v2056
      %v2153 = vpack.c.b16 %v2138, %v2137
      %v2154 = vpack.c.b16 %v2140, %v2139
      %v2155 = vpack.c.b16 %v2142, %v2141
      %v2156 = vpack.c.b16 %v2144, %v2143
      %v2157 = vpack.c.b16 %v2146, %v2145
      %v2158 = vpack.c.b16 %v2148, %v2147
      %v2159 = vpack.c.b16 %v2150, %v2149
      %v2160 = vpack.c.b16 %v2152, %v2151
      %2169 = vmatprep.subr.bf16.mxu0 0
      %2170 = vmatpush1.bf16.msra.mxu0 %v2153
      %2171 = vmatprep.subr.bf16.mxu0 0
      %2172 = vmatpush1.bf16.msra.mxu0 %v2154
      %2173 = vmatprep.subr.bf16.mxu0 0
      %2174 = vmatpush1.bf16.msra.mxu0 %v2155
      %2175 = vmatprep.subr.bf16.mxu0 0
      %2176 = vmatpush1.bf16.msra.mxu0 %v2156
      %2177 = vmatprep.subr.bf16.mxu0 0
      %2178 = vmatpush1.bf16.msra.mxu0 %v2157
      %2179 = vmatprep.subr.bf16.mxu0 0
      %2180 = vmatpush1.bf16.msra.mxu0 %v2158
      %2181 = vmatprep.subr.bf16.mxu0 0
      %2182 = vmatpush1.bf16.msra.mxu0 %v2159
      %2183 = vmatprep.subr.bf16.mxu0 0
      %2184 = vmatpush1.bf16.msra.mxu0 %v2160
      %2185 = vmatprep.subr.bf16.mxu0 0
      %2186 = vmatpush1.bf16.msra.mxu0 0
      %2187 = vmatprep.subr.bf16.mxu0 0
      %2188 = vmatpush1.bf16.msra.mxu0 0
      %2189 = vmatprep.subr.bf16.mxu0 0
      %2190 = vmatpush1.bf16.msra.mxu0 0
      %2191 = vmatprep.subr.bf16.mxu0 0
      %2192 = vmatpush1.bf16.msra.mxu0 0
      %2193 = vmatprep.subr.bf16.mxu0 0
      %2194 = vmatpush1.bf16.msra.mxu0 0
      %2195 = vmatprep.subr.bf16.mxu0 0
      %2196 = vmatpush1.bf16.msra.mxu0 0
      %2197 = vmatprep.subr.bf16.mxu0 0
      %2198 = vmatpush1.bf16.msra.mxu0 0
      %2199 = vmatprep.subr.bf16.mxu0 0
      %2200 = vmatpush1.bf16.msra.mxu0 0
      %2201 = vmatprep.mubr.bf16.mxu0 0
      %2202 = vmatmul.mubr.bf16.gmra.mrb[0].mxu0 %v2089
      %v2203 = vpop.f32.mrb[0].mxu0
      %v2204 = vadd.f32 0.0, %v2203
      %v2205 = vpop.f32.mrb[0].mxu0
      %v2206 = vpop.f32.mrb[0].mxu0
      %v2207 = vadd.f32 0.0, %v2206
      %v2208 = vpop.f32.mrb[0].mxu0
      %2209 = vmatprep.mubr.bf16.mxu0 0
      %2210 = vmatmul.mubr.bf16.gmra.mrb[0].mxu0 %v2090
      %v2211 = vpop.f32.mrb[0].mxu0
      %v2212 = vadd.f32 0.0, %v2211
      %v2213 = vpop.f32.mrb[0].mxu0
      %v2214 = vpop.f32.mrb[0].mxu0
      %v2215 = vadd.f32 0.0, %v2214
      %v2216 = vpop.f32.mrb[0].mxu0
      %2217 = vmatprep.mubr.bf16.mxu0 0
      %2218 = vmatmul.mubr.bf16.gmra.mrb[0].mxu0 %v2091
      %v2219 = vpop.f32.mrb[0].mxu0
      %v2220 = vadd.f32 0.0, %v2219
      %v2221 = vpop.f32.mrb[0].mxu0
      %v2222 = vpop.f32.mrb[0].mxu0
      %v2223 = vadd.f32 0.0, %v2222
      %v2224 = vpop.f32.mrb[0].mxu0
      %2225 = vmatprep.mubr.bf16.mxu0 0
      %2226 = vmatmul.mubr.bf16.gmra.mrb[0].mxu0 %v2092
      %v2227 = vpop.f32.mrb[0].mxu0
      %v2228 = vadd.f32 0.0, %v2227
      %v2229 = vpop.f32.mrb[0].mxu0
      %v2230 = vpop.f32.mrb[0].mxu0
      %v2231 = vadd.f32 0.0, %v2230
      %v2232 = vpop.f32.mrb[0].mxu0
      %2233 = vmatprep.mubr.bf16.mxu0 0
      %2234 = vmatmul.mubr.bf16.gmra.mrb[0].mxu0 %v2093
      %v2235 = vpop.f32.mrb[0].mxu0
      %v2236 = vadd.f32 0.0, %v2235
      %v2237 = vpop.f32.mrb[0].mxu0
      %v2238 = vpop.f32.mrb[0].mxu0
      %v2239 = vadd.f32 0.0, %v2238
      %v2240 = vpop.f32.mrb[0].mxu0
      %2241 = vmatprep.mubr.bf16.mxu0 0
      %2242 = vmatmul.mubr.bf16.gmra.mrb[0].mxu0 %v2094
      %v2243 = vpop.f32.mrb[0].mxu0
      %v2244 = vadd.f32 0.0, %v2243
      %v2245 = vpop.f32.mrb[0].mxu0
      %v2246 = vpop.f32.mrb[0].mxu0
      %v2247 = vadd.f32 0.0, %v2246
      %v2248 = vpop.f32.mrb[0].mxu0
      %2249 = vmatprep.mubr.bf16.mxu0 0
      %2250 = vmatmul.mubr.bf16.gmra.mrb[0].mxu0 %v2095
      %v2251 = vpop.f32.mrb[0].mxu0
      %v2252 = vadd.f32 0.0, %v2251
      %v2253 = vpop.f32.mrb[0].mxu0
      %v2254 = vpop.f32.mrb[0].mxu0
      %v2255 = vadd.f32 0.0, %v2254
      %v2256 = vpop.f32.mrb[0].mxu0
      %2257 = vmatprep.mubr.bf16.mxu0 0
      %2258 = vmatmul.mubr.bf16.gmra.mrb[0].mxu0 %v2096
      %v2259 = vpop.f32.mrb[0].mxu0
      %v2260 = vadd.f32 0.0, %v2259
      %v2261 = vpop.f32.mrb[0].mxu0
      %v2262 = vpop.f32.mrb[0].mxu0
      %v2263 = vadd.f32 0.0, %v2262
      %v2264 = vpop.f32.mrb[0].mxu0
      %2265 = vmatprep.mubr.bf16.mxu0 0
      %2266 = vmatmul.mubr.bf16.gmra.mrb[0].mxu0 %v2097
      %v2267 = vpop.f32.mrb[0].mxu0
      %v2268 = vadd.f32 0.0, %v2267
      %v2269 = vpop.f32.mrb[0].mxu0
      %v2270 = vpop.f32.mrb[0].mxu0
      %v2271 = vadd.f32 0.0, %v2270
      %v2272 = vpop.f32.mrb[0].mxu0
      %2273 = vmatprep.mubr.bf16.mxu0 0
      %2274 = vmatmul.mubr.bf16.gmra.mrb[0].mxu0 %v2098
      %v2275 = vpop.f32.mrb[0].mxu0
      %v2276 = vadd.f32 0.0, %v2275
      %v2277 = vpop.f32.mrb[0].mxu0
      %v2278 = vpop.f32.mrb[0].mxu0
      %v2279 = vadd.f32 0.0, %v2278
      %v2280 = vpop.f32.mrb[0].mxu0
      %2281 = vmatprep.mubr.bf16.mxu0 0
      %2282 = vmatmul.mubr.bf16.gmra.mrb[0].mxu0 %v2099
      %v2283 = vpop.f32.mrb[0].mxu0
      %v2284 = vadd.f32 0.0, %v2283
      %v2285 = vpop.f32.mrb[0].mxu0
      %v2286 = vpop.f32.mrb[0].mxu0
      %v2287 = vadd.f32 0.0, %v2286
      %v2288 = vpop.f32.mrb[0].mxu0
      %2289 = vmatprep.mubr.bf16.mxu0 0
      %2290 = vmatmul.mubr.bf16.gmra.mrb[0].mxu0 %v2100
      %v2291 = vpop.f32.mrb[0].mxu0
      %v2292 = vadd.f32 0.0, %v2291
      %v2293 = vpop.f32.mrb[0].mxu0
      %v2294 = vpop.f32.mrb[0].mxu0
      %v2295 = vadd.f32 0.0, %v2294
      %v2296 = vpop.f32.mrb[0].mxu0
      %2297 = vmatprep.mubr.bf16.mxu0 0
      %2298 = vmatmul.mubr.bf16.gmra.mrb[0].mxu0 %v2101
      %v2299 = vpop.f32.mrb[0].mxu0
      %v2300 = vadd.f32 0.0, %v2299
      %v2301 = vpop.f32.mrb[0].mxu0
      %v2302 = vpop.f32.mrb[0].mxu0
      %v2303 = vadd.f32 0.0, %v2302
      %v2304 = vpop.f32.mrb[0].mxu0
      %2305 = vmatprep.mubr.bf16.mxu0 0
      %2306 = vmatmul.mubr.bf16.gmra.mrb[0].mxu0 %v2102
      %v2307 = vpop.f32.mrb[0].mxu0
      %v2308 = vadd.f32 0.0, %v2307
      %v2309 = vpop.f32.mrb[0].mxu0
      %v2310 = vpop.f32.mrb[0].mxu0
      %v2311 = vadd.f32 0.0, %v2310
      %v2312 = vpop.f32.mrb[0].mxu0
      %2313 = vmatprep.mubr.bf16.mxu0 0
      %2314 = vmatmul.mubr.bf16.gmra.mrb[0].mxu0 %v2103
      %v2315 = vpop.f32.mrb[0].mxu0
      %v2316 = vadd.f32 0.0, %v2315
      %v2317 = vpop.f32.mrb[0].mxu0
      %v2318 = vpop.f32.mrb[0].mxu0
      %v2319 = vadd.f32 0.0, %v2318
      %v2320 = vpop.f32.mrb[0].mxu0
      %2321 = vmatprep.mubr.bf16.mxu0 0
      %2322 = vmatmul.mubr.bf16.gmra.mrb[0].mxu0 %v2104
      %v2323 = vpop.f32.mrb[0].mxu0
      %v2324 = vadd.f32 0.0, %v2323
      %v2325 = vpop.f32.mrb[0].mxu0
      %v2326 = vpop.f32.mrb[0].mxu0
      %v2327 = vadd.f32 0.0, %v2326
      %v2328 = vpop.f32.mrb[0].mxu0
      %2329 = vdwg.mxu0
      %v2330 = vadd.f32 %v1567, %v2204
      %v2331 = vadd.f32 %v1568, %v2207
      %v2332 = vadd.f32 %v1569, %v2212
      %v2333 = vadd.f32 %v1570, %v2215
      %v2334 = vadd.f32 %v1571, %v2220
      %v2335 = vadd.f32 %v1572, %v2223
      %v2336 = vadd.f32 %v1573, %v2228
      %v2337 = vadd.f32 %v1574, %v2231
      %v2338 = vadd.f32 %v1575, %v2236
      %v2339 = vadd.f32 %v1576, %v2239
      %v2340 = vadd.f32 %v1577, %v2244
      %v2341 = vadd.f32 %v1578, %v2247
      %v2342 = vadd.f32 %v1579, %v2252
      %v2343 = vadd.f32 %v1580, %v2255
      %v2344 = vadd.f32 %v1581, %v2260
      %v2345 = vadd.f32 %v1582, %v2263
      %v2346 = vadd.f32 %v1583, %v2268
      %v2347 = vadd.f32 %v1584, %v2271
      %v2348 = vadd.f32 %v1585, %v2276
      %v2349 = vadd.f32 %v1586, %v2279
      %v2350 = vadd.f32 %v1587, %v2284
      %v2351 = vadd.f32 %v1588, %v2287
      %v2352 = vadd.f32 %v1589, %v2292
      %v2353 = vadd.f32 %v1590, %v2295
      %v2354 = vadd.f32 %v1591, %v2300
      %v2355 = vadd.f32 %v1592, %v2303
      %v2356 = vadd.f32 %v1593, %v2308
      %v2357 = vadd.f32 %v1594, %v2311
      %v2358 = vadd.f32 %v1595, %v2316
      %v2359 = vadd.f32 %v1596, %v2319
      %v2360 = vadd.f32 %v1597, %v2324
      %v2361 = vadd.f32 %v1598, %v2327
      %v2363 = vshrl.u32 %v1647, 16
      %v2365 = vrot.slane %v2363, 4
      %v2366 = vshll.u32 %v1647, 16
      %v2368 = vrot.slane %v2366, 5
      %v2369 = vor.u32 %v2365, %v2368
      %v2370 = vrot.slane %v2369, 4
      %v2372 = vshll.u32 %v1648, 16
      %v2374 = vrot.slane %v2372, 5
      %v2375 = vsel %vm1655, %v2370, %v2374
      %v2376 = vshrl.u32 %v1648, 16
      %v2378 = vrot.slane %v2376, 4
      %v2379 = vor.u32 %v2378, %v2374
      %v2380 = vrot.slane %v2379, 4
      %v2382 = vshll.u32 %v1649, 16
      %v2384 = vrot.slane %v2382, 5
      %v2385 = vsel %vm1655, %v2380, %v2384
      %s2386 = scalar_lea.vmem %s1, 256
      %v2387 = vld [vmem:[%s2386] sm:$0xf]
      %v2388 = vld [vmem:[%s2386 + $0x4] sm:$0xf]
      %v2389 = vld [vmem:[%s2386 + $0x8] sm:$0xf]
      %v2390 = vld [vmem:[%s2386 + $0xc] sm:$0xf]
      %v2391 = vld [vmem:[%s2386 + $0x10] sm:$0xf]
      %v2392 = vld [vmem:[%s2386 + $0x14] sm:$0xf]
      %v2393 = vld [vmem:[%s2386 + $0x18] sm:$0xf]
      %v2394 = vld [vmem:[%s2386 + $0x1c] sm:$0xf]
      %v2395 = vld [vmem:[%s2386 + $0x20] sm:$0xf]
      %v2396 = vld [vmem:[%s2386 + $0x24] sm:$0xf]
      %v2397 = vld [vmem:[%s2386 + $0x28] sm:$0xf]
      %v2398 = vld [vmem:[%s2386 + $0x2c] sm:$0xf]
      %v2399 = vld [vmem:[%s2386 + $0x30] sm:$0xf]
      %v2400 = vld [vmem:[%s2386 + $0x34] sm:$0xf]
      %v2401 = vld [vmem:[%s2386 + $0x38] sm:$0xf]
      %v2402 = vld [vmem:[%s2386 + $0x3c] sm:$0xf]
      %v2403 = vunpack.c.l.b16 %v2375
      %v2404 = vunpack.c.l.b16 %v2385
      %v2405 = vpack.c.b16 %v2404, %v2403
      %v2423 = vunpack.c.l.b16 %v2387
      %v2424 = vunpack.c.l.b16 %v2388
      %v2425 = vunpack.c.l.b16 %v2389
      %v2426 = vunpack.c.l.b16 %v2390
      %v2427 = vunpack.c.l.b16 %v2391
      %v2428 = vunpack.c.l.b16 %v2392
      %v2429 = vunpack.c.l.b16 %v2393
      %v2430 = vunpack.c.l.b16 %v2394
      %v2431 = vunpack.c.l.b16 %v2395
      %v2432 = vunpack.c.l.b16 %v2396
      %v2433 = vunpack.c.l.b16 %v2397
      %v2434 = vunpack.c.l.b16 %v2398
      %v2435 = vunpack.c.l.b16 %v2399
      %v2436 = vunpack.c.l.b16 %v2400
      %v2437 = vunpack.c.l.b16 %v2401
      %v2438 = vunpack.c.l.b16 %v2402
      %v2439 = vpack.c.b16 %v2424, %v2423
      %v2440 = vpack.c.b16 %v2426, %v2425
      %v2441 = vpack.c.b16 %v2428, %v2427
      %v2442 = vpack.c.b16 %v2430, %v2429
      %v2443 = vpack.c.b16 %v2432, %v2431
      %v2444 = vpack.c.b16 %v2434, %v2433
      %v2445 = vpack.c.b16 %v2436, %v2435
      %v2446 = vpack.c.b16 %v2438, %v2437
      %2455 = vmatprep.subr.bf16.mxu0 0
      %2456 = vmatpush1.bf16.msra.mxu0 %v2439
      %2457 = vmatprep.subr.bf16.mxu0 0
      %2458 = vmatpush1.bf16.msra.mxu0 %v2440
      %2459 = vmatprep.subr.bf16.mxu0 0
      %2460 = vmatpush1.bf16.msra.mxu0 %v2441
      %2461 = vmatprep.subr.bf16.mxu0 0
      %2462 = vmatpush1.bf16.msra.mxu0 %v2442
      %2463 = vmatprep.subr.bf16.mxu0 0
      %2464 = vmatpush1.bf16.msra.mxu0 %v2443
      %2465 = vmatprep.subr.bf16.mxu0 0
      %2466 = vmatpush1.bf16.msra.mxu0 %v2444
      %2467 = vmatprep.subr.bf16.mxu0 0
      %2468 = vmatpush1.bf16.msra.mxu0 %v2445
      %2469 = vmatprep.subr.bf16.mxu0 0
      %2470 = vmatpush1.bf16.msra.mxu0 %v2446
      %2471 = vmatprep.subr.bf16.mxu0 0
      %2472 = vmatpush1.bf16.msra.mxu0 0
      %2473 = vmatprep.subr.bf16.mxu0 0
      %2474 = vmatpush1.bf16.msra.mxu0 0
      %2475 = vmatprep.subr.bf16.mxu0 0
      %2476 = vmatpush1.bf16.msra.mxu0 0
      %2477 = vmatprep.subr.bf16.mxu0 0
      %2478 = vmatpush1.bf16.msra.mxu0 0
      %2479 = vmatprep.subr.bf16.mxu0 0
      %2480 = vmatpush1.bf16.msra.mxu0 0
      %2481 = vmatprep.subr.bf16.mxu0 0
      %2482 = vmatpush1.bf16.msra.mxu0 0
      %2483 = vmatprep.subr.bf16.mxu0 0
      %2484 = vmatpush1.bf16.msra.mxu0 0
      %2485 = vmatprep.subr.bf16.mxu0 0
      %2486 = vmatpush1.bf16.msra.mxu0 0
      %2487 = vmatprep.mubr.bf16.mxu0 0
      %2488 = vmatmul.mubr.bf16.gmra.mrb[0].mxu0 %v2090
      %v2489 = vpop.f32.mrb[0].mxu0
      %v2490 = vadd.f32 0.0, %v2489
      %v2491 = vpop.f32.mrb[0].mxu0
      %v2492 = vpop.f32.mrb[0].mxu0
      %v2493 = vadd.f32 0.0, %v2492
      %v2494 = vpop.f32.mrb[0].mxu0
      %2495 = vmatprep.mubr.bf16.mxu0 0
      %2496 = vmatmul.mubr.bf16.gmra.mrb[0].mxu0 %v2091
      %v2497 = vpop.f32.mrb[0].mxu0
      %v2498 = vadd.f32 0.0, %v2497
      %v2499 = vpop.f32.mrb[0].mxu0
      %v2500 = vpop.f32.mrb[0].mxu0
      %v2501 = vadd.f32 0.0, %v2500
      %v2502 = vpop.f32.mrb[0].mxu0
      %2503 = vmatprep.mubr.bf16.mxu0 0
      %2504 = vmatmul.mubr.bf16.gmra.mrb[0].mxu0 %v2092
      %v2505 = vpop.f32.mrb[0].mxu0
      %v2506 = vadd.f32 0.0, %v2505
      %v2507 = vpop.f32.mrb[0].mxu0
      %v2508 = vpop.f32.mrb[0].mxu0
      %v2509 = vadd.f32 0.0, %v2508
      %v2510 = vpop.f32.mrb[0].mxu0
      %2511 = vmatprep.mubr.bf16.mxu0 0
      %2512 = vmatmul.mubr.bf16.gmra.mrb[0].mxu0 %v2093
      %v2513 = vpop.f32.mrb[0].mxu0
      %v2514 = vadd.f32 0.0, %v2513
      %v2515 = vpop.f32.mrb[0].mxu0
      %v2516 = vpop.f32.mrb[0].mxu0
      %v2517 = vadd.f32 0.0, %v2516
      %v2518 = vpop.f32.mrb[0].mxu0
      %2519 = vmatprep.mubr.bf16.mxu0 0
      %2520 = vmatmul.mubr.bf16.gmra.mrb[0].mxu0 %v2094
      %v2521 = vpop.f32.mrb[0].mxu0
      %v2522 = vadd.f32 0.0, %v2521
      %v2523 = vpop.f32.mrb[0].mxu0
      %v2524 = vpop.f32.mrb[0].mxu0
      %v2525 = vadd.f32 0.0, %v2524
      %v2526 = vpop.f32.mrb[0].mxu0
      %2527 = vmatprep.mubr.bf16.mxu0 0
      %2528 = vmatmul.mubr.bf16.gmra.mrb[0].mxu0 %v2095
      %v2529 = vpop.f32.mrb[0].mxu0
      %v2530 = vadd.f32 0.0, %v2529
      %v2531 = vpop.f32.mrb[0].mxu0
      %v2532 = vpop.f32.mrb[0].mxu0
      %v2533 = vadd.f32 0.0, %v2532
      %v2534 = vpop.f32.mrb[0].mxu0
      %2535 = vmatprep.mubr.bf16.mxu0 0
      %2536 = vmatmul.mubr.bf16.gmra.mrb[0].mxu0 %v2096
      %v2537 = vpop.f32.mrb[0].mxu0
      %v2538 = vadd.f32 0.0, %v2537
      %v2539 = vpop.f32.mrb[0].mxu0
      %v2540 = vpop.f32.mrb[0].mxu0
      %v2541 = vadd.f32 0.0, %v2540
      %v2542 = vpop.f32.mrb[0].mxu0
      %2543 = vmatprep.mubr.bf16.mxu0 0
      %2544 = vmatmul.mubr.bf16.gmra.mrb[0].mxu0 %v2097
      %v2545 = vpop.f32.mrb[0].mxu0
      %v2546 = vadd.f32 0.0, %v2545
      %v2547 = vpop.f32.mrb[0].mxu0
      %v2548 = vpop.f32.mrb[0].mxu0
      %v2549 = vadd.f32 0.0, %v2548
      %v2550 = vpop.f32.mrb[0].mxu0
      %2551 = vmatprep.mubr.bf16.mxu0 0
      %2552 = vmatmul.mubr.bf16.gmra.mrb[0].mxu0 %v2098
      %v2553 = vpop.f32.mrb[0].mxu0
      %v2554 = vadd.f32 0.0, %v2553
      %v2555 = vpop.f32.mrb[0].mxu0
      %v2556 = vpop.f32.mrb[0].mxu0
      %v2557 = vadd.f32 0.0, %v2556
      %v2558 = vpop.f32.mrb[0].mxu0
      %2559 = vmatprep.mubr.bf16.mxu0 0
      %2560 = vmatmul.mubr.bf16.gmra.mrb[0].mxu0 %v2099
      %v2561 = vpop.f32.mrb[0].mxu0
      %v2562 = vadd.f32 0.0, %v2561
      %v2563 = vpop.f32.mrb[0].mxu0
      %v2564 = vpop.f32.mrb[0].mxu0
      %v2565 = vadd.f32 0.0, %v2564
      %v2566 = vpop.f32.mrb[0].mxu0
      %2567 = vmatprep.mubr.bf16.mxu0 0
      %2568 = vmatmul.mubr.bf16.gmra.mrb[0].mxu0 %v2100
      %v2569 = vpop.f32.mrb[0].mxu0
      %v2570 = vadd.f32 0.0, %v2569
      %v2571 = vpop.f32.mrb[0].mxu0
      %v2572 = vpop.f32.mrb[0].mxu0
      %v2573 = vadd.f32 0.0, %v2572
      %v2574 = vpop.f32.mrb[0].mxu0
      %2575 = vmatprep.mubr.bf16.mxu0 0
      %2576 = vmatmul.mubr.bf16.gmra.mrb[0].mxu0 %v2101
      %v2577 = vpop.f32.mrb[0].mxu0
      %v2578 = vadd.f32 0.0, %v2577
      %v2579 = vpop.f32.mrb[0].mxu0
      %v2580 = vpop.f32.mrb[0].mxu0
      %v2581 = vadd.f32 0.0, %v2580
      %v2582 = vpop.f32.mrb[0].mxu0
      %2583 = vmatprep.mubr.bf16.mxu0 0
      %2584 = vmatmul.mubr.bf16.gmra.mrb[0].mxu0 %v2102
      %v2585 = vpop.f32.mrb[0].mxu0
      %v2586 = vadd.f32 0.0, %v2585
      %v2587 = vpop.f32.mrb[0].mxu0
      %v2588 = vpop.f32.mrb[0].mxu0
      %v2589 = vadd.f32 0.0, %v2588
      %v2590 = vpop.f32.mrb[0].mxu0
      %2591 = vmatprep.mubr.bf16.mxu0 0
      %2592 = vmatmul.mubr.bf16.gmra.mrb[0].mxu0 %v2103
      %v2593 = vpop.f32.mrb[0].mxu0
      %v2594 = vadd.f32 0.0, %v2593
      %v2595 = vpop.f32.mrb[0].mxu0
      %v2596 = vpop.f32.mrb[0].mxu0
      %v2597 = vadd.f32 0.0, %v2596
      %v2598 = vpop.f32.mrb[0].mxu0
      %2599 = vmatprep.mubr.bf16.mxu0 0
      %2600 = vmatmul.mubr.bf16.gmra.mrb[0].mxu0 %v2104
      %v2601 = vpop.f32.mrb[0].mxu0
      %v2602 = vadd.f32 0.0, %v2601
      %v2603 = vpop.f32.mrb[0].mxu0
      %v2604 = vpop.f32.mrb[0].mxu0
      %v2605 = vadd.f32 0.0, %v2604
      %v2606 = vpop.f32.mrb[0].mxu0
      %2607 = vmatprep.mubr.bf16.mxu0 0
      %2608 = vmatmul.mubr.bf16.gmra.mrb[0].mxu0 %v2405
      %v2609 = vpop.f32.mrb[0].mxu0
      %v2610 = vadd.f32 0.0, %v2609
      %v2611 = vpop.f32.mrb[0].mxu0
      %v2612 = vpop.f32.mrb[0].mxu0
      %v2613 = vadd.f32 0.0, %v2612
      %v2614 = vpop.f32.mrb[0].mxu0
      %2615 = vdwg.mxu0
      %v2616 = vadd.f32 %v2330, %v2490
      %v2617 = vadd.f32 %v2331, %v2493
      %v2618 = vadd.f32 %v2332, %v2498
      %v2619 = vadd.f32 %v2333, %v2501
      %v2620 = vadd.f32 %v2334, %v2506
      %v2621 = vadd.f32 %v2335, %v2509
      %v2622 = vadd.f32 %v2336, %v2514
      %v2623 = vadd.f32 %v2337, %v2517
      %v2624 = vadd.f32 %v2338, %v2522
      %v2625 = vadd.f32 %v2339, %v2525
      %v2626 = vadd.f32 %v2340, %v2530
      %v2627 = vadd.f32 %v2341, %v2533
      %v2628 = vadd.f32 %v2342, %v2538
      %v2629 = vadd.f32 %v2343, %v2541
      %v2630 = vadd.f32 %v2344, %v2546
      %v2631 = vadd.f32 %v2345, %v2549
      %v2632 = vadd.f32 %v2346, %v2554
      %v2633 = vadd.f32 %v2347, %v2557
      %v2634 = vadd.f32 %v2348, %v2562
      %v2635 = vadd.f32 %v2349, %v2565
      %v2636 = vadd.f32 %v2350, %v2570
      %v2637 = vadd.f32 %v2351, %v2573
      %v2638 = vadd.f32 %v2352, %v2578
      %v2639 = vadd.f32 %v2353, %v2581
      %v2640 = vadd.f32 %v2354, %v2586
      %v2641 = vadd.f32 %v2355, %v2589
      %v2642 = vadd.f32 %v2356, %v2594
      %v2643 = vadd.f32 %v2357, %v2597
      %v2644 = vadd.f32 %v2358, %v2602
      %v2645 = vadd.f32 %v2359, %v2605
      %v2646 = vadd.f32 %v2360, %v2610
      %v2647 = vadd.f32 %v2361, %v2613
      %v2649 = vshrl.u32 %v1650, 16
      %v2651 = vrot.slane %v2649, 4
      %v2652 = vshll.u32 %v1650, 16
      %v2654 = vrot.slane %v2652, 5
      %v2655 = vor.u32 %v2651, %v2654
      %v2656 = vrot.slane %v2655, 4
      %v2658 = vshll.u32 %v1651, 16
      %v2660 = vrot.slane %v2658, 5
      %v2661 = vsel %vm1655, %v2656, %v2660
      %v2662 = vshrl.u32 %v1651, 16
      %v2664 = vrot.slane %v2662, 4
      %v2665 = vor.u32 %v2664, %v2660
      %v2666 = vrot.slane %v2665, 4
      %v2668 = vshll.u32 %v1652, 16
      %v2670 = vrot.slane %v2668, 5
      %v2671 = vsel %vm1655, %v2666, %v2670
      %s2672 = scalar_lea.vmem %s1, 448
      %v2673 = vld [vmem:[%s2672] sm:$0xf]
      %v2674 = vld [vmem:[%s2672 + $0x4] sm:$0xf]
      %v2675 = vld [vmem:[%s2672 + $0x8] sm:$0xf]
      %v2676 = vld [vmem:[%s2672 + $0xc] sm:$0xf]
      %v2677 = vld [vmem:[%s2672 + $0x10] sm:$0xf]
      %v2678 = vld [vmem:[%s2672 + $0x14] sm:$0xf]
      %v2679 = vld [vmem:[%s2672 + $0x18] sm:$0xf]
      %v2680 = vld [vmem:[%s2672 + $0x1c] sm:$0xf]
      %v2681 = vld [vmem:[%s2672 + $0x20] sm:$0xf]
      %v2682 = vld [vmem:[%s2672 + $0x24] sm:$0xf]
      %v2683 = vld [vmem:[%s2672 + $0x28] sm:$0xf]
      %v2684 = vld [vmem:[%s2672 + $0x2c] sm:$0xf]
      %v2685 = vld [vmem:[%s2672 + $0x30] sm:$0xf]
      %v2686 = vld [vmem:[%s2672 + $0x34] sm:$0xf]
      %v2687 = vld [vmem:[%s2672 + $0x38] sm:$0xf]
      %v2688 = vld [vmem:[%s2672 + $0x3c] sm:$0xf]
      %v2689 = vunpack.c.l.b16 %v2661
      %v2690 = vunpack.c.l.b16 %v2671
      %v2691 = vpack.c.b16 %v2690, %v2689
      %v2709 = vunpack.c.l.b16 %v2673
      %v2710 = vunpack.c.l.b16 %v2674
      %v2711 = vunpack.c.l.b16 %v2675
      %v2712 = vunpack.c.l.b16 %v2676
      %v2713 = vunpack.c.l.b16 %v2677
      %v2714 = vunpack.c.l.b16 %v2678
      %v2715 = vunpack.c.l.b16 %v2679
      %v2716 = vunpack.c.l.b16 %v2680
      %v2717 = vunpack.c.l.b16 %v2681
      %v2718 = vunpack.c.l.b16 %v2682
      %v2719 = vunpack.c.l.b16 %v2683
      %v2720 = vunpack.c.l.b16 %v2684
      %v2721 = vunpack.c.l.b16 %v2685
      %v2722 = vunpack.c.l.b16 %v2686
      %v2723 = vunpack.c.l.b16 %v2687
      %v2724 = vunpack.c.l.b16 %v2688
      %v2725 = vpack.c.b16 %v2710, %v2709
      %v2726 = vpack.c.b16 %v2712, %v2711
      %v2727 = vpack.c.b16 %v2714, %v2713
      %v2728 = vpack.c.b16 %v2716, %v2715
      %v2729 = vpack.c.b16 %v2718, %v2717
      %v2730 = vpack.c.b16 %v2720, %v2719
      %v2731 = vpack.c.b16 %v2722, %v2721
      %v2732 = vpack.c.b16 %v2724, %v2723
      %2741 = vmatprep.subr.bf16.mxu0 0
      %2742 = vmatpush1.bf16.msra.mxu0 %v2725
      %2743 = vmatprep.subr.bf16.mxu0 0
      %2744 = vmatpush1.bf16.msra.mxu0 %v2726
      %2745 = vmatprep.subr.bf16.mxu0 0
      %2746 = vmatpush1.bf16.msra.mxu0 %v2727
      %2747 = vmatprep.subr.bf16.mxu0 0
      %2748 = vmatpush1.bf16.msra.mxu0 %v2728
      %2749 = vmatprep.subr.bf16.mxu0 0
      %2750 = vmatpush1.bf16.msra.mxu0 %v2729
      %2751 = vmatprep.subr.bf16.mxu0 0
      %2752 = vmatpush1.bf16.msra.mxu0 %v2730
      %2753 = vmatprep.subr.bf16.mxu0 0
      %2754 = vmatpush1.bf16.msra.mxu0 %v2731
      %2755 = vmatprep.subr.bf16.mxu0 0
      %2756 = vmatpush1.bf16.msra.mxu0 %v2732
      %2757 = vmatprep.subr.bf16.mxu0 0
      %2758 = vmatpush1.bf16.msra.mxu0 0
      %2759 = vmatprep.subr.bf16.mxu0 0
      %2760 = vmatpush1.bf16.msra.mxu0 0
      %2761 = vmatprep.subr.bf16.mxu0 0
      %2762 = vmatpush1.bf16.msra.mxu0 0
      %2763 = vmatprep.subr.bf16.mxu0 0
      %2764 = vmatpush1.bf16.msra.mxu0 0
      %2765 = vmatprep.subr.bf16.mxu0 0
      %2766 = vmatpush1.bf16.msra.mxu0 0
      %2767 = vmatprep.subr.bf16.mxu0 0
      %2768 = vmatpush1.bf16.msra.mxu0 0
      %2769 = vmatprep.subr.bf16.mxu0 0
      %2770 = vmatpush1.bf16.msra.mxu0 0
      %2771 = vmatprep.subr.bf16.mxu0 0
      %2772 = vmatpush1.bf16.msra.mxu0 0
      %2773 = vmatprep.mubr.bf16.mxu0 0
      %2774 = vmatmul.mubr.bf16.gmra.mrb[0].mxu0 %v2091
      %v2775 = vpop.f32.mrb[0].mxu0
      %v2776 = vadd.f32 0.0, %v2775
      %v2777 = vpop.f32.mrb[0].mxu0
      %v2778 = vpop.f32.mrb[0].mxu0
      %v2779 = vadd.f32 0.0, %v2778
      %v2780 = vpop.f32.mrb[0].mxu0
      %2781 = vmatprep.mubr.bf16.mxu0 0
      %2782 = vmatmul.mubr.bf16.gmra.mrb[0].mxu0 %v2092
      %v2783 = vpop.f32.mrb[0].mxu0
      %v2784 = vadd.f32 0.0, %v2783
      %v2785 = vpop.f32.mrb[0].mxu0
      %v2786 = vpop.f32.mrb[0].mxu0
      %v2787 = vadd.f32 0.0, %v2786
      %v2788 = vpop.f32.mrb[0].mxu0
      %2789 = vmatprep.mubr.bf16.mxu0 0
      %2790 = vmatmul.mubr.bf16.gmra.mrb[0].mxu0 %v2093
      %v2791 = vpop.f32.mrb[0].mxu0
      %v2792 = vadd.f32 0.0, %v2791
      %v2793 = vpop.f32.mrb[0].mxu0
      %v2794 = vpop.f32.mrb[0].mxu0
      %v2795 = vadd.f32 0.0, %v2794
      %v2796 = vpop.f32.mrb[0].mxu0
      %2797 = vmatprep.mubr.bf16.mxu0 0
      %2798 = vmatmul.mubr.bf16.gmra.mrb[0].mxu0 %v2094
      %v2799 = vpop.f32.mrb[0].mxu0
      %v2800 = vadd.f32 0.0, %v2799
      %v2801 = vpop.f32.mrb[0].mxu0
      %v2802 = vpop.f32.mrb[0].mxu0
      %v2803 = vadd.f32 0.0, %v2802
      %v2804 = vpop.f32.mrb[0].mxu0
      %2805 = vmatprep.mubr.bf16.mxu0 0
      %2806 = vmatmul.mubr.bf16.gmra.mrb[0].mxu0 %v2095
      %v2807 = vpop.f32.mrb[0].mxu0
      %v2808 = vadd.f32 0.0, %v2807
      %v2809 = vpop.f32.mrb[0].mxu0
      %v2810 = vpop.f32.mrb[0].mxu0
      %v2811 = vadd.f32 0.0, %v2810
      %v2812 = vpop.f32.mrb[0].mxu0
      %2813 = vmatprep.mubr.bf16.mxu0 0
      %2814 = vmatmul.mubr.bf16.gmra.mrb[0].mxu0 %v2096
      %v2815 = vpop.f32.mrb[0].mxu0
      %v2816 = vadd.f32 0.0, %v2815
      %v2817 = vpop.f32.mrb[0].mxu0
      %v2818 = vpop.f32.mrb[0].mxu0
      %v2819 = vadd.f32 0.0, %v2818
      %v2820 = vpop.f32.mrb[0].mxu0
      %2821 = vmatprep.mubr.bf16.mxu0 0
      %2822 = vmatmul.mubr.bf16.gmra.mrb[0].mxu0 %v2097
      %v2823 = vpop.f32.mrb[0].mxu0
      %v2824 = vadd.f32 0.0, %v2823
      %v2825 = vpop.f32.mrb[0].mxu0
      %v2826 = vpop.f32.mrb[0].mxu0
      %v2827 = vadd.f32 0.0, %v2826
      %v2828 = vpop.f32.mrb[0].mxu0
      %2829 = vmatprep.mubr.bf16.mxu0 0
      %2830 = vmatmul.mubr.bf16.gmra.mrb[0].mxu0 %v2098
      %v2831 = vpop.f32.mrb[0].mxu0
      %v2832 = vadd.f32 0.0, %v2831
      %v2833 = vpop.f32.mrb[0].mxu0
      %v2834 = vpop.f32.mrb[0].mxu0
      %v2835 = vadd.f32 0.0, %v2834
      %v2836 = vpop.f32.mrb[0].mxu0
      %2837 = vmatprep.mubr.bf16.mxu0 0
      %2838 = vmatmul.mubr.bf16.gmra.mrb[0].mxu0 %v2099
      %v2839 = vpop.f32.mrb[0].mxu0
      %v2840 = vadd.f32 0.0, %v2839
      %v2841 = vpop.f32.mrb[0].mxu0
      %v2842 = vpop.f32.mrb[0].mxu0
      %v2843 = vadd.f32 0.0, %v2842
      %v2844 = vpop.f32.mrb[0].mxu0
      %2845 = vmatprep.mubr.bf16.mxu0 0
      %2846 = vmatmul.mubr.bf16.gmra.mrb[0].mxu0 %v2100
      %v2847 = vpop.f32.mrb[0].mxu0
      %v2848 = vadd.f32 0.0, %v2847
      %v2849 = vpop.f32.mrb[0].mxu0
      %v2850 = vpop.f32.mrb[0].mxu0
      %v2851 = vadd.f32 0.0, %v2850
      %v2852 = vpop.f32.mrb[0].mxu0
      %2853 = vmatprep.mubr.bf16.mxu0 0
      %2854 = vmatmul.mubr.bf16.gmra.mrb[0].mxu0 %v2101
      %v2855 = vpop.f32.mrb[0].mxu0
      %v2856 = vadd.f32 0.0, %v2855
      %v2857 = vpop.f32.mrb[0].mxu0
      %v2858 = vpop.f32.mrb[0].mxu0
      %v2859 = vadd.f32 0.0, %v2858
      %v2860 = vpop.f32.mrb[0].mxu0
      %2861 = vmatprep.mubr.bf16.mxu0 0
      %2862 = vmatmul.mubr.bf16.gmra.mrb[0].mxu0 %v2102
      %v2863 = vpop.f32.mrb[0].mxu0
      %v2864 = vadd.f32 0.0, %v2863
      %v2865 = vpop.f32.mrb[0].mxu0
      %v2866 = vpop.f32.mrb[0].mxu0
      %v2867 = vadd.f32 0.0, %v2866
      %v2868 = vpop.f32.mrb[0].mxu0
      %2869 = vmatprep.mubr.bf16.mxu0 0
      %2870 = vmatmul.mubr.bf16.gmra.mrb[0].mxu0 %v2103
      %v2871 = vpop.f32.mrb[0].mxu0
      %v2872 = vadd.f32 0.0, %v2871
      %v2873 = vpop.f32.mrb[0].mxu0
      %v2874 = vpop.f32.mrb[0].mxu0
      %v2875 = vadd.f32 0.0, %v2874
      %v2876 = vpop.f32.mrb[0].mxu0
      %2877 = vmatprep.mubr.bf16.mxu0 0
      %2878 = vmatmul.mubr.bf16.gmra.mrb[0].mxu0 %v2104
      %v2879 = vpop.f32.mrb[0].mxu0
      %v2880 = vadd.f32 0.0, %v2879
      %v2881 = vpop.f32.mrb[0].mxu0
      %v2882 = vpop.f32.mrb[0].mxu0
      %v2883 = vadd.f32 0.0, %v2882
      %v2884 = vpop.f32.mrb[0].mxu0
      %2885 = vmatprep.mubr.bf16.mxu0 0
      %2886 = vmatmul.mubr.bf16.gmra.mrb[0].mxu0 %v2405
      %v2887 = vpop.f32.mrb[0].mxu0
      %v2888 = vadd.f32 0.0, %v2887
      %v2889 = vpop.f32.mrb[0].mxu0
      %v2890 = vpop.f32.mrb[0].mxu0
      %v2891 = vadd.f32 0.0, %v2890
      %v2892 = vpop.f32.mrb[0].mxu0
      %2893 = vmatprep.mubr.bf16.mxu0 0
      %2894 = vmatmul.mubr.bf16.gmra.mrb[0].mxu0 %v2691
      %v2895 = vpop.f32.mrb[0].mxu0
      %v2896 = vadd.f32 0.0, %v2895
      %v2897 = vpop.f32.mrb[0].mxu0
      %v2898 = vpop.f32.mrb[0].mxu0
      %v2899 = vadd.f32 0.0, %v2898
      %v2900 = vpop.f32.mrb[0].mxu0
      %2901 = vdwg.mxu0
      %v2902 = vadd.f32 %v2616, %v2776
      %v2903 = vadd.f32 %v2617, %v2779
      %v2904 = vadd.f32 %v2618, %v2784
      %v2905 = vadd.f32 %v2619, %v2787
      %v2906 = vadd.f32 %v2620, %v2792
      %v2907 = vadd.f32 %v2621, %v2795
      %v2908 = vadd.f32 %v2622, %v2800
      %v2909 = vadd.f32 %v2623, %v2803
      %v2910 = vadd.f32 %v2624, %v2808
      %v2911 = vadd.f32 %v2625, %v2811
      %v2912 = vadd.f32 %v2626, %v2816
      %v2913 = vadd.f32 %v2627, %v2819
      %v2914 = vadd.f32 %v2628, %v2824
      %v2915 = vadd.f32 %v2629, %v2827
      %v2916 = vadd.f32 %v2630, %v2832
      %v2917 = vadd.f32 %v2631, %v2835
      %v2918 = vadd.f32 %v2632, %v2840
      %v2919 = vadd.f32 %v2633, %v2843
      %v2920 = vadd.f32 %v2634, %v2848
      %v2921 = vadd.f32 %v2635, %v2851
      %v2922 = vadd.f32 %v2636, %v2856
      %v2923 = vadd.f32 %v2637, %v2859
      %v2924 = vadd.f32 %v2638, %v2864
      %v2925 = vadd.f32 %v2639, %v2867
      %v2926 = vadd.f32 %v2640, %v2872
      %v2927 = vadd.f32 %v2641, %v2875
      %v2928 = vadd.f32 %v2642, %v2880
      %v2929 = vadd.f32 %v2643, %v2883
      %v2930 = vadd.f32 %v2644, %v2888
      %v2931 = vadd.f32 %v2645, %v2891
      %v2932 = vadd.f32 %v2646, %v2896
      %v2933 = vadd.f32 %v2647, %v2899
      %v2934 = vld [vmem:[#allocation2] sm:$0xe]
      %v2935 = vld [vmem:[#allocation2 + $0xc] sm:$0xe]
      %v2936 = vld [vmem:[#allocation2 + $0x18] sm:$0xe]
      %v2937 = vld [vmem:[#allocation2 + $0x24] sm:$0xe]
      %v2938 = vld [vmem:[#allocation2 + $0x30] sm:$0xe]
      %v2939 = vld [vmem:[#allocation2 + $0x3c] sm:$0xe]
      %v2940 = vld [vmem:[#allocation2 + $0x48] sm:$0xe]
      %v2941 = vld [vmem:[#allocation2 + $0x54] sm:$0xe]
      %v2942 = vld [vmem:[#allocation2 + $0x60] sm:$0xe]
      %v2943 = vld [vmem:[#allocation2 + $0x6c] sm:$0xe]
      %v2944 = vld [vmem:[#allocation2 + $0x78] sm:$0xe]
      %v2945 = vld [vmem:[#allocation2 + $0x84] sm:$0xe]
      %v2946 = vld [vmem:[#allocation2 + $0x90] sm:$0xe]
      %v2947 = vld [vmem:[#allocation2 + $0x9c] sm:$0xe]
      %v2948 = vld [vmem:[#allocation2 + $0xa8] sm:$0xe]
      %v2949 = vld [vmem:[#allocation2 + $0xb4] sm:$0xe]
      %v2950 = vld [vmem:[#allocation2 + $0xc0] sm:$0xe]
      %v2951 = vld [vmem:[#allocation2 + $0xcc] sm:$0xe]
      %vm3000 = vcmask 1042432
      %vm3001 = vcmask 1046532
      %vm3002 = vmor %vm3000, %vm3001
      %v3003 = vrot.slane %v2934, 5
      %v3004 = vrot.slane %v3003, 4
      %v3005 = vrot.slane %v1600, 5
      %v3006 = vsel %vm3002, %v3004, %v3005
      %v3007 = vrot.slane %v3005, 4
      %v3008 = vrot.slane %v1601, 5
      %v3009 = vsel %vm3002, %v3007, %v3008
      %v3010 = vrot.slane %v2935, 5
      %v3011 = vrot.slane %v3010, 4
      %v3012 = vrot.slane %v1603, 5
      %v3013 = vsel %vm3002, %v3011, %v3012
      %v3014 = vrot.slane %v3012, 4
      %v3015 = vrot.slane %v1604, 5
      %v3016 = vsel %vm3002, %v3014, %v3015
      %v3017 = vrot.slane %v2936, 5
      %v3018 = vrot.slane %v3017, 4
      %v3019 = vrot.slane %v1606, 5
      %v3020 = vsel %vm3002, %v3018, %v3019
      %v3021 = vrot.slane %v3019, 4
      %v3022 = vrot.slane %v1607, 5
      %v3023 = vsel %vm3002, %v3021, %v3022
      %v3024 = vrot.slane %v2937, 5
      %v3025 = vrot.slane %v3024, 4
      %v3026 = vrot.slane %v1609, 5
      %v3027 = vsel %vm3002, %v3025, %v3026
      %v3028 = vrot.slane %v3026, 4
      %v3029 = vrot.slane %v1610, 5
      %v3030 = vsel %vm3002, %v3028, %v3029
      %v3031 = vrot.slane %v2938, 5
      %v3032 = vrot.slane %v3031, 4
      %v3033 = vrot.slane %v1612, 5
      %v3034 = vsel %vm3002, %v3032, %v3033
      %v3035 = vrot.slane %v3033, 4
      %v3036 = vrot.slane %v1613, 5
      %v3037 = vsel %vm3002, %v3035, %v3036
      %v3038 = vrot.slane %v2939, 5
      %v3039 = vrot.slane %v3038, 4
      %v3040 = vrot.slane %v1615, 5
      %v3041 = vsel %vm3002, %v3039, %v3040
      %v3042 = vrot.slane %v3040, 4
      %v3043 = vrot.slane %v1616, 5
      %v3044 = vsel %vm3002, %v3042, %v3043
      %v3045 = vrot.slane %v2940, 5
      %v3046 = vrot.slane %v3045, 4
      %v3047 = vrot.slane %v1618, 5
      %v3048 = vsel %vm3002, %v3046, %v3047
      %v3049 = vrot.slane %v3047, 4
      %v3050 = vrot.slane %v1619, 5
      %v3051 = vsel %vm3002, %v3049, %v3050
      %v3052 = vrot.slane %v2941, 5
      %v3053 = vrot.slane %v3052, 4
      %v3054 = vrot.slane %v1621, 5
      %v3055 = vsel %vm3002, %v3053, %v3054
      %v3056 = vrot.slane %v3054, 4
      %v3057 = vrot.slane %v1622, 5
      %v3058 = vsel %vm3002, %v3056, %v3057
      %v3059 = vrot.slane %v2942, 5
      %v3060 = vrot.slane %v3059, 4
      %v3061 = vrot.slane %v1624, 5
      %v3062 = vsel %vm3002, %v3060, %v3061
      %v3063 = vrot.slane %v3061, 4
      %v3064 = vrot.slane %v1625, 5
      %v3065 = vsel %vm3002, %v3063, %v3064
      %v3066 = vrot.slane %v2943, 5
      %v3067 = vrot.slane %v3066, 4
      %v3068 = vrot.slane %v1627, 5
      %v3069 = vsel %vm3002, %v3067, %v3068
      %v3070 = vrot.slane %v3068, 4
      %v3071 = vrot.slane %v1628, 5
      %v3072 = vsel %vm3002, %v3070, %v3071
      %v3073 = vrot.slane %v2944, 5
      %v3074 = vrot.slane %v3073, 4
      %v3075 = vrot.slane %v1630, 5
      %v3076 = vsel %vm3002, %v3074, %v3075
      %v3077 = vrot.slane %v3075, 4
      %v3078 = vrot.slane %v1631, 5
      %v3079 = vsel %vm3002, %v3077, %v3078
      %v3080 = vrot.slane %v2945, 5
      %v3081 = vrot.slane %v3080, 4
      %v3082 = vrot.slane %v1633, 5
      %v3083 = vsel %vm3002, %v3081, %v3082
      %v3084 = vrot.slane %v3082, 4
      %v3085 = vrot.slane %v1634, 5
      %v3086 = vsel %vm3002, %v3084, %v3085
      %v3087 = vrot.slane %v2946, 5
      %v3088 = vrot.slane %v3087, 4
      %v3089 = vrot.slane %v1636, 5
      %v3090 = vsel %vm3002, %v3088, %v3089
      %v3091 = vrot.slane %v3089, 4
      %v3092 = vrot.slane %v1637, 5
      %v3093 = vsel %vm3002, %v3091, %v3092
      %v3094 = vrot.slane %v2947, 5
      %v3095 = vrot.slane %v3094, 4
      %v3096 = vrot.slane %v1639, 5
      %v3097 = vsel %vm3002, %v3095, %v3096
      %v3098 = vrot.slane %v3096, 4
      %v3099 = vrot.slane %v1640, 5
      %v3100 = vsel %vm3002, %v3098, %v3099
      %v3101 = vrot.slane %v2948, 5
      %v3102 = vrot.slane %v3101, 4
      %v3103 = vrot.slane %v1642, 5
      %v3104 = vsel %vm3002, %v3102, %v3103
      %v3105 = vrot.slane %v3103, 4
      %v3106 = vrot.slane %v1643, 5
      %v3107 = vsel %vm3002, %v3105, %v3106
      %v3108 = vrot.slane %v2949, 5
      %v3109 = vrot.slane %v3108, 4
      %v3110 = vrot.slane %v1645, 5
      %v3111 = vsel %vm3002, %v3109, %v3110
      %v3112 = vrot.slane %v3110, 4
      %v3113 = vrot.slane %v1646, 5
      %v3114 = vsel %vm3002, %v3112, %v3113
      %s3115 = scalar_lea.vmem %s1, 128
      %v3116 = vld [vmem:[%s3115] sm:$0xf]
      %v3117 = vld [vmem:[%s3115 + $0x4] sm:$0xf]
      %v3118 = vld [vmem:[%s3115 + $0x8] sm:$0xf]
      %v3119 = vld [vmem:[%s3115 + $0xc] sm:$0xf]
      %v3120 = vld [vmem:[%s3115 + $0x10] sm:$0xf]
      %v3121 = vld [vmem:[%s3115 + $0x14] sm:$0xf]
      %v3122 = vld [vmem:[%s3115 + $0x18] sm:$0xf]
      %v3123 = vld [vmem:[%s3115 + $0x1c] sm:$0xf]
      %v3124 = vld [vmem:[%s3115 + $0x20] sm:$0xf]
      %v3125 = vld [vmem:[%s3115 + $0x24] sm:$0xf]
      %v3126 = vld [vmem:[%s3115 + $0x28] sm:$0xf]
      %v3127 = vld [vmem:[%s3115 + $0x2c] sm:$0xf]
      %v3128 = vld [vmem:[%s3115 + $0x30] sm:$0xf]
      %v3129 = vld [vmem:[%s3115 + $0x34] sm:$0xf]
      %v3130 = vld [vmem:[%s3115 + $0x38] sm:$0xf]
      %v3131 = vld [vmem:[%s3115 + $0x3c] sm:$0xf]
      %v3132 = vunpack.c.l.b16 %v3006
      %v3133 = vunpack.c.l.b16 %v3009
      %v3134 = vunpack.c.l.b16 %v3013
      %v3135 = vunpack.c.l.b16 %v3016
      %v3136 = vunpack.c.l.b16 %v3020
      %v3137 = vunpack.c.l.b16 %v3023
      %v3138 = vunpack.c.l.b16 %v3027
      %v3139 = vunpack.c.l.b16 %v3030
      %v3140 = vunpack.c.l.b16 %v3034
      %v3141 = vunpack.c.l.b16 %v3037
      %v3142 = vunpack.c.l.b16 %v3041
      %v3143 = vunpack.c.l.b16 %v3044
      %v3144 = vunpack.c.l.b16 %v3048
      %v3145 = vunpack.c.l.b16 %v3051
      %v3146 = vunpack.c.l.b16 %v3055
      %v3147 = vunpack.c.l.b16 %v3058
      %v3148 = vunpack.c.l.b16 %v3062
      %v3149 = vunpack.c.l.b16 %v3065
      %v3150 = vunpack.c.l.b16 %v3069
      %v3151 = vunpack.c.l.b16 %v3072
      %v3152 = vunpack.c.l.b16 %v3076
      %v3153 = vunpack.c.l.b16 %v3079
      %v3154 = vunpack.c.l.b16 %v3083
      %v3155 = vunpack.c.l.b16 %v3086
      %v3156 = vunpack.c.l.b16 %v3090
      %v3157 = vunpack.c.l.b16 %v3093
      %v3158 = vunpack.c.l.b16 %v3097
      %v3159 = vunpack.c.l.b16 %v3100
      %v3160 = vunpack.c.l.b16 %v3104
      %v3161 = vunpack.c.l.b16 %v3107
      %v3162 = vunpack.c.l.b16 %v3111
      %v3163 = vunpack.c.l.b16 %v3114
      %v3164 = vpack.c.b16 %v3133, %v3132
      %v3165 = vpack.c.b16 %v3135, %v3134
      %v3166 = vpack.c.b16 %v3137, %v3136
      %v3167 = vpack.c.b16 %v3139, %v3138
      %v3168 = vpack.c.b16 %v3141, %v3140
      %v3169 = vpack.c.b16 %v3143, %v3142
      %v3170 = vpack.c.b16 %v3145, %v3144
      %v3171 = vpack.c.b16 %v3147, %v3146
      %v3172 = vpack.c.b16 %v3149, %v3148
      %v3173 = vpack.c.b16 %v3151, %v3150
      %v3174 = vpack.c.b16 %v3153, %v3152
      %v3175 = vpack.c.b16 %v3155, %v3154
      %v3176 = vpack.c.b16 %v3157, %v3156
      %v3177 = vpack.c.b16 %v3159, %v3158
      %v3178 = vpack.c.b16 %v3161, %v3160
      %v3179 = vpack.c.b16 %v3163, %v3162
      %v3212 = vunpack.c.l.b16 %v3116
      %v3213 = vunpack.c.l.b16 %v3117
      %v3214 = vunpack.c.l.b16 %v3118
      %v3215 = vunpack.c.l.b16 %v3119
      %v3216 = vunpack.c.l.b16 %v3120
      %v3217 = vunpack.c.l.b16 %v3121
      %v3218 = vunpack.c.l.b16 %v3122
      %v3219 = vunpack.c.l.b16 %v3123
      %v3220 = vunpack.c.l.b16 %v3124
      %v3221 = vunpack.c.l.b16 %v3125
      %v3222 = vunpack.c.l.b16 %v3126
      %v3223 = vunpack.c.l.b16 %v3127
      %v3224 = vunpack.c.l.b16 %v3128
      %v3225 = vunpack.c.l.b16 %v3129
      %v3226 = vunpack.c.l.b16 %v3130
      %v3227 = vunpack.c.l.b16 %v3131
      %v3228 = vpack.c.b16 %v3213, %v3212
      %v3229 = vpack.c.b16 %v3215, %v3214
      %v3230 = vpack.c.b16 %v3217, %v3216
      %v3231 = vpack.c.b16 %v3219, %v3218
      %v3232 = vpack.c.b16 %v3221, %v3220
      %v3233 = vpack.c.b16 %v3223, %v3222
      %v3234 = vpack.c.b16 %v3225, %v3224
      %v3235 = vpack.c.b16 %v3227, %v3226
      %3244 = vmatprep.subr.bf16.mxu0 0
      %3245 = vmatpush1.bf16.msra.mxu0 %v3228
      %3246 = vmatprep.subr.bf16.mxu0 0
      %3247 = vmatpush1.bf16.msra.mxu0 %v3229
      %3248 = vmatprep.subr.bf16.mxu0 0
      %3249 = vmatpush1.bf16.msra.mxu0 %v3230
      %3250 = vmatprep.subr.bf16.mxu0 0
      %3251 = vmatpush1.bf16.msra.mxu0 %v3231
      %3252 = vmatprep.subr.bf16.mxu0 0
      %3253 = vmatpush1.bf16.msra.mxu0 %v3232
      %3254 = vmatprep.subr.bf16.mxu0 0
      %3255 = vmatpush1.bf16.msra.mxu0 %v3233
      %3256 = vmatprep.subr.bf16.mxu0 0
      %3257 = vmatpush1.bf16.msra.mxu0 %v3234
      %3258 = vmatprep.subr.bf16.mxu0 0
      %3259 = vmatpush1.bf16.msra.mxu0 %v3235
      %3260 = vmatprep.subr.bf16.mxu0 0
      %3261 = vmatpush1.bf16.msra.mxu0 0
      %3262 = vmatprep.subr.bf16.mxu0 0
      %3263 = vmatpush1.bf16.msra.mxu0 0
      %3264 = vmatprep.subr.bf16.mxu0 0
      %3265 = vmatpush1.bf16.msra.mxu0 0
      %3266 = vmatprep.subr.bf16.mxu0 0
      %3267 = vmatpush1.bf16.msra.mxu0 0
      %3268 = vmatprep.subr.bf16.mxu0 0
      %3269 = vmatpush1.bf16.msra.mxu0 0
      %3270 = vmatprep.subr.bf16.mxu0 0
      %3271 = vmatpush1.bf16.msra.mxu0 0
      %3272 = vmatprep.subr.bf16.mxu0 0
      %3273 = vmatpush1.bf16.msra.mxu0 0
      %3274 = vmatprep.subr.bf16.mxu0 0
      %3275 = vmatpush1.bf16.msra.mxu0 0
      %3276 = vmatprep.mubr.bf16.mxu0 0
      %3277 = vmatmul.mubr.bf16.gmra.mrb[0].mxu0 %v3164
      %v3278 = vpop.f32.mrb[0].mxu0
      %v3279 = vadd.f32 0.0, %v3278
      %v3280 = vpop.f32.mrb[0].mxu0
      %v3281 = vpop.f32.mrb[0].mxu0
      %v3282 = vadd.f32 0.0, %v3281
      %v3283 = vpop.f32.mrb[0].mxu0
      %3284 = vmatprep.mubr.bf16.mxu0 0
      %3285 = vmatmul.mubr.bf16.gmra.mrb[0].mxu0 %v3165
      %v3286 = vpop.f32.mrb[0].mxu0
      %v3287 = vadd.f32 0.0, %v3286
      %v3288 = vpop.f32.mrb[0].mxu0
      %v3289 = vpop.f32.mrb[0].mxu0
      %v3290 = vadd.f32 0.0, %v3289
      %v3291 = vpop.f32.mrb[0].mxu0
      %3292 = vmatprep.mubr.bf16.mxu0 0
      %3293 = vmatmul.mubr.bf16.gmra.mrb[0].mxu0 %v3166
      %v3294 = vpop.f32.mrb[0].mxu0
      %v3295 = vadd.f32 0.0, %v3294
      %v3296 = vpop.f32.mrb[0].mxu0
      %v3297 = vpop.f32.mrb[0].mxu0
      %v3298 = vadd.f32 0.0, %v3297
      %v3299 = vpop.f32.mrb[0].mxu0
      %3300 = vmatprep.mubr.bf16.mxu0 0
      %3301 = vmatmul.mubr.bf16.gmra.mrb[0].mxu0 %v3167
      %v3302 = vpop.f32.mrb[0].mxu0
      %v3303 = vadd.f32 0.0, %v3302
      %v3304 = vpop.f32.mrb[0].mxu0
      %v3305 = vpop.f32.mrb[0].mxu0
      %v3306 = vadd.f32 0.0, %v3305
      %v3307 = vpop.f32.mrb[0].mxu0
      %3308 = vmatprep.mubr.bf16.mxu0 0
      %3309 = vmatmul.mubr.bf16.gmra.mrb[0].mxu0 %v3168
      %v3310 = vpop.f32.mrb[0].mxu0
      %v3311 = vadd.f32 0.0, %v3310
      %v3312 = vpop.f32.mrb[0].mxu0
      %v3313 = vpop.f32.mrb[0].mxu0
      %v3314 = vadd.f32 0.0, %v3313
      %v3315 = vpop.f32.mrb[0].mxu0
      %3316 = vmatprep.mubr.bf16.mxu0 0
      %3317 = vmatmul.mubr.bf16.gmra.mrb[0].mxu0 %v3169
      %v3318 = vpop.f32.mrb[0].mxu0
      %v3319 = vadd.f32 0.0, %v3318
      %v3320 = vpop.f32.mrb[0].mxu0
      %v3321 = vpop.f32.mrb[0].mxu0
      %v3322 = vadd.f32 0.0, %v3321
      %v3323 = vpop.f32.mrb[0].mxu0
      %3324 = vmatprep.mubr.bf16.mxu0 0
      %3325 = vmatmul.mubr.bf16.gmra.mrb[0].mxu0 %v3170
      %v3326 = vpop.f32.mrb[0].mxu0
      %v3327 = vadd.f32 0.0, %v3326
      %v3328 = vpop.f32.mrb[0].mxu0
      %v3329 = vpop.f32.mrb[0].mxu0
      %v3330 = vadd.f32 0.0, %v3329
      %v3331 = vpop.f32.mrb[0].mxu0
      %3332 = vmatprep.mubr.bf16.mxu0 0
      %3333 = vmatmul.mubr.bf16.gmra.mrb[0].mxu0 %v3171
      %v3334 = vpop.f32.mrb[0].mxu0
      %v3335 = vadd.f32 0.0, %v3334
      %v3336 = vpop.f32.mrb[0].mxu0
      %v3337 = vpop.f32.mrb[0].mxu0
      %v3338 = vadd.f32 0.0, %v3337
      %v3339 = vpop.f32.mrb[0].mxu0
      %3340 = vmatprep.mubr.bf16.mxu0 0
      %3341 = vmatmul.mubr.bf16.gmra.mrb[0].mxu0 %v3172
      %v3342 = vpop.f32.mrb[0].mxu0
      %v3343 = vadd.f32 0.0, %v3342
      %v3344 = vpop.f32.mrb[0].mxu0
      %v3345 = vpop.f32.mrb[0].mxu0
      %v3346 = vadd.f32 0.0, %v3345
      %v3347 = vpop.f32.mrb[0].mxu0
      %3348 = vmatprep.mubr.bf16.mxu0 0
      %3349 = vmatmul.mubr.bf16.gmra.mrb[0].mxu0 %v3173
      %v3350 = vpop.f32.mrb[0].mxu0
      %v3351 = vadd.f32 0.0, %v3350
      %v3352 = vpop.f32.mrb[0].mxu0
      %v3353 = vpop.f32.mrb[0].mxu0
      %v3354 = vadd.f32 0.0, %v3353
      %v3355 = vpop.f32.mrb[0].mxu0
      %3356 = vmatprep.mubr.bf16.mxu0 0
      %3357 = vmatmul.mubr.bf16.gmra.mrb[0].mxu0 %v3174
      %v3358 = vpop.f32.mrb[0].mxu0
      %v3359 = vadd.f32 0.0, %v3358
      %v3360 = vpop.f32.mrb[0].mxu0
      %v3361 = vpop.f32.mrb[0].mxu0
      %v3362 = vadd.f32 0.0, %v3361
      %v3363 = vpop.f32.mrb[0].mxu0
      %3364 = vmatprep.mubr.bf16.mxu0 0
      %3365 = vmatmul.mubr.bf16.gmra.mrb[0].mxu0 %v3175
      %v3366 = vpop.f32.mrb[0].mxu0
      %v3367 = vadd.f32 0.0, %v3366
      %v3368 = vpop.f32.mrb[0].mxu0
      %v3369 = vpop.f32.mrb[0].mxu0
      %v3370 = vadd.f32 0.0, %v3369
      %v3371 = vpop.f32.mrb[0].mxu0
      %3372 = vmatprep.mubr.bf16.mxu0 0
      %3373 = vmatmul.mubr.bf16.gmra.mrb[0].mxu0 %v3176
      %v3374 = vpop.f32.mrb[0].mxu0
      %v3375 = vadd.f32 0.0, %v3374
      %v3376 = vpop.f32.mrb[0].mxu0
      %v3377 = vpop.f32.mrb[0].mxu0
      %v3378 = vadd.f32 0.0, %v3377
      %v3379 = vpop.f32.mrb[0].mxu0
      %3380 = vmatprep.mubr.bf16.mxu0 0
      %3381 = vmatmul.mubr.bf16.gmra.mrb[0].mxu0 %v3177
      %v3382 = vpop.f32.mrb[0].mxu0
      %v3383 = vadd.f32 0.0, %v3382
      %v3384 = vpop.f32.mrb[0].mxu0
      %v3385 = vpop.f32.mrb[0].mxu0
      %v3386 = vadd.f32 0.0, %v3385
      %v3387 = vpop.f32.mrb[0].mxu0
      %3388 = vmatprep.mubr.bf16.mxu0 0
      %3389 = vmatmul.mubr.bf16.gmra.mrb[0].mxu0 %v3178
      %v3390 = vpop.f32.mrb[0].mxu0
      %v3391 = vadd.f32 0.0, %v3390
      %v3392 = vpop.f32.mrb[0].mxu0
      %v3393 = vpop.f32.mrb[0].mxu0
      %v3394 = vadd.f32 0.0, %v3393
      %v3395 = vpop.f32.mrb[0].mxu0
      %3396 = vmatprep.mubr.bf16.mxu0 0
      %3397 = vmatmul.mubr.bf16.gmra.mrb[0].mxu0 %v3179
      %v3398 = vpop.f32.mrb[0].mxu0
      %v3399 = vadd.f32 0.0, %v3398
      %v3400 = vpop.f32.mrb[0].mxu0
      %v3401 = vpop.f32.mrb[0].mxu0
      %v3402 = vadd.f32 0.0, %v3401
      %v3403 = vpop.f32.mrb[0].mxu0
      %3404 = vdwg.mxu0
      %v3405 = vadd.f32 %v2902, %v3279
      %v3406 = vadd.f32 %v2903, %v3282
      %v3407 = vadd.f32 %v2904, %v3287
      %v3408 = vadd.f32 %v2905, %v3290
      %v3409 = vadd.f32 %v2906, %v3295
      %v3410 = vadd.f32 %v2907, %v3298
      %v3411 = vadd.f32 %v2908, %v3303
      %v3412 = vadd.f32 %v2909, %v3306
      %v3413 = vadd.f32 %v2910, %v3311
      %v3414 = vadd.f32 %v2911, %v3314
      %v3415 = vadd.f32 %v2912, %v3319
      %v3416 = vadd.f32 %v2913, %v3322
      %v3417 = vadd.f32 %v2914, %v3327
      %v3418 = vadd.f32 %v2915, %v3330
      %v3419 = vadd.f32 %v2916, %v3335
      %v3420 = vadd.f32 %v2917, %v3338
      %v3421 = vadd.f32 %v2918, %v3343
      %v3422 = vadd.f32 %v2919, %v3346
      %v3423 = vadd.f32 %v2920, %v3351
      %v3424 = vadd.f32 %v2921, %v3354
      %v3425 = vadd.f32 %v2922, %v3359
      %v3426 = vadd.f32 %v2923, %v3362
      %v3427 = vadd.f32 %v2924, %v3367
      %v3428 = vadd.f32 %v2925, %v3370
      %v3429 = vadd.f32 %v2926, %v3375
      %v3430 = vadd.f32 %v2927, %v3378
      %v3431 = vadd.f32 %v2928, %v3383
      %v3432 = vadd.f32 %v2929, %v3386
      %v3433 = vadd.f32 %v2930, %v3391
      %v3434 = vadd.f32 %v2931, %v3394
      %v3435 = vadd.f32 %v2932, %v3399
      %v3436 = vadd.f32 %v2933, %v3402
      %v3440 = vrot.slane %v2950, 5
      %v3441 = vrot.slane %v3440, 4
      %v3442 = vrot.slane %v1648, 5
      %v3443 = vsel %vm3002, %v3441, %v3442
      %v3444 = vrot.slane %v3442, 4
      %v3445 = vrot.slane %v1649, 5
      %v3446 = vsel %vm3002, %v3444, %v3445
      %s3447 = scalar_lea.vmem %s1, 320
      %v3448 = vld [vmem:[%s3447] sm:$0xf]
      %v3449 = vld [vmem:[%s3447 + $0x4] sm:$0xf]
      %v3450 = vld [vmem:[%s3447 + $0x8] sm:$0xf]
      %v3451 = vld [vmem:[%s3447 + $0xc] sm:$0xf]
      %v3452 = vld [vmem:[%s3447 + $0x10] sm:$0xf]
      %v3453 = vld [vmem:[%s3447 + $0x14] sm:$0xf]
      %v3454 = vld [vmem:[%s3447 + $0x18] sm:$0xf]
      %v3455 = vld [vmem:[%s3447 + $0x1c] sm:$0xf]
      %v3456 = vld [vmem:[%s3447 + $0x20] sm:$0xf]
      %v3457 = vld [vmem:[%s3447 + $0x24] sm:$0xf]
      %v3458 = vld [vmem:[%s3447 + $0x28] sm:$0xf]
      %v3459 = vld [vmem:[%s3447 + $0x2c] sm:$0xf]
      %v3460 = vld [vmem:[%s3447 + $0x30] sm:$0xf]
      %v3461 = vld [vmem:[%s3447 + $0x34] sm:$0xf]
      %v3462 = vld [vmem:[%s3447 + $0x38] sm:$0xf]
      %v3463 = vld [vmem:[%s3447 + $0x3c] sm:$0xf]
      %v3464 = vunpack.c.l.b16 %v3443
      %v3465 = vunpack.c.l.b16 %v3446
      %v3466 = vpack.c.b16 %v3465, %v3464
      %v3484 = vunpack.c.l.b16 %v3448
      %v3485 = vunpack.c.l.b16 %v3449
      %v3486 = vunpack.c.l.b16 %v3450
      %v3487 = vunpack.c.l.b16 %v3451
      %v3488 = vunpack.c.l.b16 %v3452
      %v3489 = vunpack.c.l.b16 %v3453
      %v3490 = vunpack.c.l.b16 %v3454
      %v3491 = vunpack.c.l.b16 %v3455
      %v3492 = vunpack.c.l.b16 %v3456
      %v3493 = vunpack.c.l.b16 %v3457
      %v3494 = vunpack.c.l.b16 %v3458
      %v3495 = vunpack.c.l.b16 %v3459
      %v3496 = vunpack.c.l.b16 %v3460
      %v3497 = vunpack.c.l.b16 %v3461
      %v3498 = vunpack.c.l.b16 %v3462
      %v3499 = vunpack.c.l.b16 %v3463
      %v3500 = vpack.c.b16 %v3485, %v3484
      %v3501 = vpack.c.b16 %v3487, %v3486
      %v3502 = vpack.c.b16 %v3489, %v3488
      %v3503 = vpack.c.b16 %v3491, %v3490
      %v3504 = vpack.c.b16 %v3493, %v3492
      %v3505 = vpack.c.b16 %v3495, %v3494
      %v3506 = vpack.c.b16 %v3497, %v3496
      %v3507 = vpack.c.b16 %v3499, %v3498
      %3516 = vmatprep.subr.bf16.mxu0 0
      %3517 = vmatpush1.bf16.msra.mxu0 %v3500
      %3518 = vmatprep.subr.bf16.mxu0 0
      %3519 = vmatpush1.bf16.msra.mxu0 %v3501
      %3520 = vmatprep.subr.bf16.mxu0 0
      %3521 = vmatpush1.bf16.msra.mxu0 %v3502
      %3522 = vmatprep.subr.bf16.mxu0 0
      %3523 = vmatpush1.bf16.msra.mxu0 %v3503
      %3524 = vmatprep.subr.bf16.mxu0 0
      %3525 = vmatpush1.bf16.msra.mxu0 %v3504
      %3526 = vmatprep.subr.bf16.mxu0 0
      %3527 = vmatpush1.bf16.msra.mxu0 %v3505
      %3528 = vmatprep.subr.bf16.mxu0 0
      %3529 = vmatpush1.bf16.msra.mxu0 %v3506
      %3530 = vmatprep.subr.bf16.mxu0 0
      %3531 = vmatpush1.bf16.msra.mxu0 %v3507
      %3532 = vmatprep.subr.bf16.mxu0 0
      %3533 = vmatpush1.bf16.msra.mxu0 0
      %3534 = vmatprep.subr.bf16.mxu0 0
      %3535 = vmatpush1.bf16.msra.mxu0 0
      %3536 = vmatprep.subr.bf16.mxu0 0
      %3537 = vmatpush1.bf16.msra.mxu0 0
      %3538 = vmatprep.subr.bf16.mxu0 0
      %3539 = vmatpush1.bf16.msra.mxu0 0
      %3540 = vmatprep.subr.bf16.mxu0 0
      %3541 = vmatpush1.bf16.msra.mxu0 0
      %3542 = vmatprep.subr.bf16.mxu0 0
      %3543 = vmatpush1.bf16.msra.mxu0 0
      %3544 = vmatprep.subr.bf16.mxu0 0
      %3545 = vmatpush1.bf16.msra.mxu0 0
      %3546 = vmatprep.subr.bf16.mxu0 0
      %3547 = vmatpush1.bf16.msra.mxu0 0
      %3548 = vmatprep.mubr.bf16.mxu0 0
      %3549 = vmatmul.mubr.bf16.gmra.mrb[0].mxu0 %v3165
      %v3550 = vpop.f32.mrb[0].mxu0
      %v3551 = vadd.f32 0.0, %v3550
      %v3552 = vpop.f32.mrb[0].mxu0
      %v3553 = vpop.f32.mrb[0].mxu0
      %v3554 = vadd.f32 0.0, %v3553
      %v3555 = vpop.f32.mrb[0].mxu0
      %3556 = vmatprep.mubr.bf16.mxu0 0
      %3557 = vmatmul.mubr.bf16.gmra.mrb[0].mxu0 %v3166
      %v3558 = vpop.f32.mrb[0].mxu0
      %v3559 = vadd.f32 0.0, %v3558
      %v3560 = vpop.f32.mrb[0].mxu0
      %v3561 = vpop.f32.mrb[0].mxu0
      %v3562 = vadd.f32 0.0, %v3561
      %v3563 = vpop.f32.mrb[0].mxu0
      %3564 = vmatprep.mubr.bf16.mxu0 0
      %3565 = vmatmul.mubr.bf16.gmra.mrb[0].mxu0 %v3167
      %v3566 = vpop.f32.mrb[0].mxu0
      %v3567 = vadd.f32 0.0, %v3566
      %v3568 = vpop.f32.mrb[0].mxu0
      %v3569 = vpop.f32.mrb[0].mxu0
      %v3570 = vadd.f32 0.0, %v3569
      %v3571 = vpop.f32.mrb[0].mxu0
      %3572 = vmatprep.mubr.bf16.mxu0 0
      %3573 = vmatmul.mubr.bf16.gmra.mrb[0].mxu0 %v3168
      %v3574 = vpop.f32.mrb[0].mxu0
      %v3575 = vadd.f32 0.0, %v3574
      %v3576 = vpop.f32.mrb[0].mxu0
      %v3577 = vpop.f32.mrb[0].mxu0
      %v3578 = vadd.f32 0.0, %v3577
      %v3579 = vpop.f32.mrb[0].mxu0
      %3580 = vmatprep.mubr.bf16.mxu0 0
      %3581 = vmatmul.mubr.bf16.gmra.mrb[0].mxu0 %v3169
      %v3582 = vpop.f32.mrb[0].mxu0
      %v3583 = vadd.f32 0.0, %v3582
      %v3584 = vpop.f32.mrb[0].mxu0
      %v3585 = vpop.f32.mrb[0].mxu0
      %v3586 = vadd.f32 0.0, %v3585
      %v3587 = vpop.f32.mrb[0].mxu0
      %3588 = vmatprep.mubr.bf16.mxu0 0
      %3589 = vmatmul.mubr.bf16.gmra.mrb[0].mxu0 %v3170
      %v3590 = vpop.f32.mrb[0].mxu0
      %v3591 = vadd.f32 0.0, %v3590
      %v3592 = vpop.f32.mrb[0].mxu0
      %v3593 = vpop.f32.mrb[0].mxu0
      %v3594 = vadd.f32 0.0, %v3593
      %v3595 = vpop.f32.mrb[0].mxu0
      %3596 = vmatprep.mubr.bf16.mxu0 0
      %3597 = vmatmul.mubr.bf16.gmra.mrb[0].mxu0 %v3171
      %v3598 = vpop.f32.mrb[0].mxu0
      %v3599 = vadd.f32 0.0, %v3598
      %v3600 = vpop.f32.mrb[0].mxu0
      %v3601 = vpop.f32.mrb[0].mxu0
      %v3602 = vadd.f32 0.0, %v3601
      %v3603 = vpop.f32.mrb[0].mxu0
      %3604 = vmatprep.mubr.bf16.mxu0 0
      %3605 = vmatmul.mubr.bf16.gmra.mrb[0].mxu0 %v3172
      %v3606 = vpop.f32.mrb[0].mxu0
      %v3607 = vadd.f32 0.0, %v3606
      %v3608 = vpop.f32.mrb[0].mxu0
      %v3609 = vpop.f32.mrb[0].mxu0
      %v3610 = vadd.f32 0.0, %v3609
      %v3611 = vpop.f32.mrb[0].mxu0
      %3612 = vmatprep.mubr.bf16.mxu0 0
      %3613 = vmatmul.mubr.bf16.gmra.mrb[0].mxu0 %v3173
      %v3614 = vpop.f32.mrb[0].mxu0
      %v3615 = vadd.f32 0.0, %v3614
      %v3616 = vpop.f32.mrb[0].mxu0
      %v3617 = vpop.f32.mrb[0].mxu0
      %v3618 = vadd.f32 0.0, %v3617
      %v3619 = vpop.f32.mrb[0].mxu0
      %3620 = vmatprep.mubr.bf16.mxu0 0
      %3621 = vmatmul.mubr.bf16.gmra.mrb[0].mxu0 %v3174
      %v3622 = vpop.f32.mrb[0].mxu0
      %v3623 = vadd.f32 0.0, %v3622
      %v3624 = vpop.f32.mrb[0].mxu0
      %v3625 = vpop.f32.mrb[0].mxu0
      %v3626 = vadd.f32 0.0, %v3625
      %v3627 = vpop.f32.mrb[0].mxu0
      %3628 = vmatprep.mubr.bf16.mxu0 0
      %3629 = vmatmul.mubr.bf16.gmra.mrb[0].mxu0 %v3175
      %v3630 = vpop.f32.mrb[0].mxu0
      %v3631 = vadd.f32 0.0, %v3630
      %v3632 = vpop.f32.mrb[0].mxu0
      %v3633 = vpop.f32.mrb[0].mxu0
      %v3634 = vadd.f32 0.0, %v3633
      %v3635 = vpop.f32.mrb[0].mxu0
      %3636 = vmatprep.mubr.bf16.mxu0 0
      %3637 = vmatmul.mubr.bf16.gmra.mrb[0].mxu0 %v3176
      %v3638 = vpop.f32.mrb[0].mxu0
      %v3639 = vadd.f32 0.0, %v3638
      %v3640 = vpop.f32.mrb[0].mxu0
      %v3641 = vpop.f32.mrb[0].mxu0
      %v3642 = vadd.f32 0.0, %v3641
      %v3643 = vpop.f32.mrb[0].mxu0
      %3644 = vmatprep.mubr.bf16.mxu0 0
      %3645 = vmatmul.mubr.bf16.gmra.mrb[0].mxu0 %v3177
      %v3646 = vpop.f32.mrb[0].mxu0
      %v3647 = vadd.f32 0.0, %v3646
      %v3648 = vpop.f32.mrb[0].mxu0
      %v3649 = vpop.f32.mrb[0].mxu0
      %v3650 = vadd.f32 0.0, %v3649
      %v3651 = vpop.f32.mrb[0].mxu0
      %3652 = vmatprep.mubr.bf16.mxu0 0
      %3653 = vmatmul.mubr.bf16.gmra.mrb[0].mxu0 %v3178
      %v3654 = vpop.f32.mrb[0].mxu0
      %v3655 = vadd.f32 0.0, %v3654
      %v3656 = vpop.f32.mrb[0].mxu0
      %v3657 = vpop.f32.mrb[0].mxu0
      %v3658 = vadd.f32 0.0, %v3657
      %v3659 = vpop.f32.mrb[0].mxu0
      %3660 = vmatprep.mubr.bf16.mxu0 0
      %3661 = vmatmul.mubr.bf16.gmra.mrb[0].mxu0 %v3179
      %v3662 = vpop.f32.mrb[0].mxu0
      %v3663 = vadd.f32 0.0, %v3662
      %v3664 = vpop.f32.mrb[0].mxu0
      %v3665 = vpop.f32.mrb[0].mxu0
      %v3666 = vadd.f32 0.0, %v3665
      %v3667 = vpop.f32.mrb[0].mxu0
      %3668 = vmatprep.mubr.bf16.mxu0 0
      %3669 = vmatmul.mubr.bf16.gmra.mrb[0].mxu0 %v3466
      %v3670 = vpop.f32.mrb[0].mxu0
      %v3671 = vadd.f32 0.0, %v3670
      %v3672 = vpop.f32.mrb[0].mxu0
      %v3673 = vpop.f32.mrb[0].mxu0
      %v3674 = vadd.f32 0.0, %v3673
      %v3675 = vpop.f32.mrb[0].mxu0
      %3676 = vdwg.mxu0
      %v3677 = vadd.f32 %v3405, %v3551
      %v3678 = vadd.f32 %v3406, %v3554
      %v3679 = vadd.f32 %v3407, %v3559
      %v3680 = vadd.f32 %v3408, %v3562
      %v3681 = vadd.f32 %v3409, %v3567
      %v3682 = vadd.f32 %v3410, %v3570
      %v3683 = vadd.f32 %v3411, %v3575
      %v3684 = vadd.f32 %v3412, %v3578
      %v3685 = vadd.f32 %v3413, %v3583
      %v3686 = vadd.f32 %v3414, %v3586
      %v3687 = vadd.f32 %v3415, %v3591
      %v3688 = vadd.f32 %v3416, %v3594
      %v3689 = vadd.f32 %v3417, %v3599
      %v3690 = vadd.f32 %v3418, %v3602
      %v3691 = vadd.f32 %v3419, %v3607
      %v3692 = vadd.f32 %v3420, %v3610
      %v3693 = vadd.f32 %v3421, %v3615
      %v3694 = vadd.f32 %v3422, %v3618
      %v3695 = vadd.f32 %v3423, %v3623
      %v3696 = vadd.f32 %v3424, %v3626
      %v3697 = vadd.f32 %v3425, %v3631
      %v3698 = vadd.f32 %v3426, %v3634
      %v3699 = vadd.f32 %v3427, %v3639
      %v3700 = vadd.f32 %v3428, %v3642
      %v3701 = vadd.f32 %v3429, %v3647
      %v3702 = vadd.f32 %v3430, %v3650
      %v3703 = vadd.f32 %v3431, %v3655
      %v3704 = vadd.f32 %v3432, %v3658
      %v3705 = vadd.f32 %v3433, %v3663
      %v3706 = vadd.f32 %v3434, %v3666
      %v3707 = vadd.f32 %v3435, %v3671
      %v3708 = vadd.f32 %v3436, %v3674
      %v3712 = vrot.slane %v2951, 5
      %v3713 = vrot.slane %v3712, 4
      %v3714 = vrot.slane %v1651, 5
      %v3715 = vsel %vm3002, %v3713, %v3714
      %v3716 = vrot.slane %v3714, 4
      %v3717 = vrot.slane %v1652, 5
      %v3718 = vsel %vm3002, %v3716, %v3717
      %s3719 = scalar_lea.vmem %s1, 512
      %v3720 = vld [vmem:[%s3719] sm:$0xf]
      %v3721 = vld [vmem:[%s3719 + $0x4] sm:$0xf]
      %v3722 = vld [vmem:[%s3719 + $0x8] sm:$0xf]
      %v3723 = vld [vmem:[%s3719 + $0xc] sm:$0xf]
      %v3724 = vld [vmem:[%s3719 + $0x10] sm:$0xf]
      %v3725 = vld [vmem:[%s3719 + $0x14] sm:$0xf]
      %v3726 = vld [vmem:[%s3719 + $0x18] sm:$0xf]
      %v3727 = vld [vmem:[%s3719 + $0x1c] sm:$0xf]
      %v3728 = vld [vmem:[%s3719 + $0x20] sm:$0xf]
      %v3729 = vld [vmem:[%s3719 + $0x24] sm:$0xf]
      %v3730 = vld [vmem:[%s3719 + $0x28] sm:$0xf]
      %v3731 = vld [vmem:[%s3719 + $0x2c] sm:$0xf]
      %v3732 = vld [vmem:[%s3719 + $0x30] sm:$0xf]
      %v3733 = vld [vmem:[%s3719 + $0x34] sm:$0xf]
      %v3734 = vld [vmem:[%s3719 + $0x38] sm:$0xf]
      %v3735 = vld [vmem:[%s3719 + $0x3c] sm:$0xf]
      %v3736 = vunpack.c.l.b16 %v3715
      %v3737 = vunpack.c.l.b16 %v3718
      %v3738 = vpack.c.b16 %v3737, %v3736
      %v3756 = vunpack.c.l.b16 %v3720
      %v3757 = vunpack.c.l.b16 %v3721
      %v3758 = vunpack.c.l.b16 %v3722
      %v3759 = vunpack.c.l.b16 %v3723
      %v3760 = vunpack.c.l.b16 %v3724
      %v3761 = vunpack.c.l.b16 %v3725
      %v3762 = vunpack.c.l.b16 %v3726
      %v3763 = vunpack.c.l.b16 %v3727
      %v3764 = vunpack.c.l.b16 %v3728
      %v3765 = vunpack.c.l.b16 %v3729
      %v3766 = vunpack.c.l.b16 %v3730
      %v3767 = vunpack.c.l.b16 %v3731
      %v3768 = vunpack.c.l.b16 %v3732
      %v3769 = vunpack.c.l.b16 %v3733
      %v3770 = vunpack.c.l.b16 %v3734
      %v3771 = vunpack.c.l.b16 %v3735
      %v3772 = vpack.c.b16 %v3757, %v3756
      %v3773 = vpack.c.b16 %v3759, %v3758
      %v3774 = vpack.c.b16 %v3761, %v3760
      %v3775 = vpack.c.b16 %v3763, %v3762
      %v3776 = vpack.c.b16 %v3765, %v3764
      %v3777 = vpack.c.b16 %v3767, %v3766
      %v3778 = vpack.c.b16 %v3769, %v3768
      %v3779 = vpack.c.b16 %v3771, %v3770
      %3788 = vmatprep.subr.bf16.mxu0 0
      %3789 = vmatpush1.bf16.msra.mxu0 %v3772
      %3790 = vmatprep.subr.bf16.mxu0 0
      %3791 = vmatpush1.bf16.msra.mxu0 %v3773
      %3792 = vmatprep.subr.bf16.mxu0 0
      %3793 = vmatpush1.bf16.msra.mxu0 %v3774
      %3794 = vmatprep.subr.bf16.mxu0 0
      %3795 = vmatpush1.bf16.msra.mxu0 %v3775
      %3796 = vmatprep.subr.bf16.mxu0 0
      %3797 = vmatpush1.bf16.msra.mxu0 %v3776
      %3798 = vmatprep.subr.bf16.mxu0 0
      %3799 = vmatpush1.bf16.msra.mxu0 %v3777
      %3800 = vmatprep.subr.bf16.mxu0 0
      %3801 = vmatpush1.bf16.msra.mxu0 %v3778
      %3802 = vmatprep.subr.bf16.mxu0 0
      %3803 = vmatpush1.bf16.msra.mxu0 %v3779
      %3804 = vmatprep.subr.bf16.mxu0 0
      %3805 = vmatpush1.bf16.msra.mxu0 0
      %3806 = vmatprep.subr.bf16.mxu0 0
      %3807 = vmatpush1.bf16.msra.mxu0 0
      %3808 = vmatprep.subr.bf16.mxu0 0
      %3809 = vmatpush1.bf16.msra.mxu0 0
      %3810 = vmatprep.subr.bf16.mxu0 0
      %3811 = vmatpush1.bf16.msra.mxu0 0
      %3812 = vmatprep.subr.bf16.mxu0 0
      %3813 = vmatpush1.bf16.msra.mxu0 0
      %3814 = vmatprep.subr.bf16.mxu0 0
      %3815 = vmatpush1.bf16.msra.mxu0 0
      %3816 = vmatprep.subr.bf16.mxu0 0
      %3817 = vmatpush1.bf16.msra.mxu0 0
      %3818 = vmatprep.subr.bf16.mxu0 0
      %3819 = vmatpush1.bf16.msra.mxu0 0
      %3820 = vmatprep.mubr.bf16.mxu0 0
      %3821 = vmatmul.mubr.bf16.gmra.mrb[0].mxu0 %v3166
      %v3822 = vpop.f32.mrb[0].mxu0
      %v3823 = vadd.f32 0.0, %v3822
      %v3824 = vpop.f32.mrb[0].mxu0
      %v3825 = vpop.f32.mrb[0].mxu0
      %v3826 = vadd.f32 0.0, %v3825
      %v3827 = vpop.f32.mrb[0].mxu0
      %3828 = vmatprep.mubr.bf16.mxu0 0
      %3829 = vmatmul.mubr.bf16.gmra.mrb[0].mxu0 %v3167
      %v3830 = vpop.f32.mrb[0].mxu0
      %v3831 = vadd.f32 0.0, %v3830
      %v3832 = vpop.f32.mrb[0].mxu0
      %v3833 = vpop.f32.mrb[0].mxu0
      %v3834 = vadd.f32 0.0, %v3833
      %v3835 = vpop.f32.mrb[0].mxu0
      %3836 = vmatprep.mubr.bf16.mxu0 0
      %3837 = vmatmul.mubr.bf16.gmra.mrb[0].mxu0 %v3168
      %v3838 = vpop.f32.mrb[0].mxu0
      %v3839 = vadd.f32 0.0, %v3838
      %v3840 = vpop.f32.mrb[0].mxu0
      %v3841 = vpop.f32.mrb[0].mxu0
      %v3842 = vadd.f32 0.0, %v3841
      %v3843 = vpop.f32.mrb[0].mxu0
      %3844 = vmatprep.mubr.bf16.mxu0 0
      %3845 = vmatmul.mubr.bf16.gmra.mrb[0].mxu0 %v3169
      %v3846 = vpop.f32.mrb[0].mxu0
      %v3847 = vadd.f32 0.0, %v3846
      %v3848 = vpop.f32.mrb[0].mxu0
      %v3849 = vpop.f32.mrb[0].mxu0
      %v3850 = vadd.f32 0.0, %v3849
      %v3851 = vpop.f32.mrb[0].mxu0
      %3852 = vmatprep.mubr.bf16.mxu0 0
      %3853 = vmatmul.mubr.bf16.gmra.mrb[0].mxu0 %v3170
      %v3854 = vpop.f32.mrb[0].mxu0
      %v3855 = vadd.f32 0.0, %v3854
      %v3856 = vpop.f32.mrb[0].mxu0
      %v3857 = vpop.f32.mrb[0].mxu0
      %v3858 = vadd.f32 0.0, %v3857
      %v3859 = vpop.f32.mrb[0].mxu0
      %3860 = vmatprep.mubr.bf16.mxu0 0
      %3861 = vmatmul.mubr.bf16.gmra.mrb[0].mxu0 %v3171
      %v3862 = vpop.f32.mrb[0].mxu0
      %v3863 = vadd.f32 0.0, %v3862
      %v3864 = vpop.f32.mrb[0].mxu0
      %v3865 = vpop.f32.mrb[0].mxu0
      %v3866 = vadd.f32 0.0, %v3865
      %v3867 = vpop.f32.mrb[0].mxu0
      %3868 = vmatprep.mubr.bf16.mxu0 0
      %3869 = vmatmul.mubr.bf16.gmra.mrb[0].mxu0 %v3172
      %v3870 = vpop.f32.mrb[0].mxu0
      %v3871 = vadd.f32 0.0, %v3870
      %v3872 = vpop.f32.mrb[0].mxu0
      %v3873 = vpop.f32.mrb[0].mxu0
      %v3874 = vadd.f32 0.0, %v3873
      %v3875 = vpop.f32.mrb[0].mxu0
      %3876 = vmatprep.mubr.bf16.mxu0 0
      %3877 = vmatmul.mubr.bf16.gmra.mrb[0].mxu0 %v3173
      %v3878 = vpop.f32.mrb[0].mxu0
      %v3879 = vadd.f32 0.0, %v3878
      %v3880 = vpop.f32.mrb[0].mxu0
      %v3881 = vpop.f32.mrb[0].mxu0
      %v3882 = vadd.f32 0.0, %v3881
      %v3883 = vpop.f32.mrb[0].mxu0
      %3884 = vmatprep.mubr.bf16.mxu0 0
      %3885 = vmatmul.mubr.bf16.gmra.mrb[0].mxu0 %v3174
      %v3886 = vpop.f32.mrb[0].mxu0
      %v3887 = vadd.f32 0.0, %v3886
      %v3888 = vpop.f32.mrb[0].mxu0
      %v3889 = vpop.f32.mrb[0].mxu0
      %v3890 = vadd.f32 0.0, %v3889
      %v3891 = vpop.f32.mrb[0].mxu0
      %3892 = vmatprep.mubr.bf16.mxu0 0
      %3893 = vmatmul.mubr.bf16.gmra.mrb[0].mxu0 %v3175
      %v3894 = vpop.f32.mrb[0].mxu0
      %v3895 = vadd.f32 0.0, %v3894
      %v3896 = vpop.f32.mrb[0].mxu0
      %v3897 = vpop.f32.mrb[0].mxu0
      %v3898 = vadd.f32 0.0, %v3897
      %v3899 = vpop.f32.mrb[0].mxu0
      %3900 = vmatprep.mubr.bf16.mxu0 0
      %3901 = vmatmul.mubr.bf16.gmra.mrb[0].mxu0 %v3176
      %v3902 = vpop.f32.mrb[0].mxu0
      %v3903 = vadd.f32 0.0, %v3902
      %v3904 = vpop.f32.mrb[0].mxu0
      %v3905 = vpop.f32.mrb[0].mxu0
      %v3906 = vadd.f32 0.0, %v3905
      %v3907 = vpop.f32.mrb[0].mxu0
      %3908 = vmatprep.mubr.bf16.mxu0 0
      %3909 = vmatmul.mubr.bf16.gmra.mrb[0].mxu0 %v3177
      %v3910 = vpop.f32.mrb[0].mxu0
      %v3911 = vadd.f32 0.0, %v3910
      %v3912 = vpop.f32.mrb[0].mxu0
      %v3913 = vpop.f32.mrb[0].mxu0
      %v3914 = vadd.f32 0.0, %v3913
      %v3915 = vpop.f32.mrb[0].mxu0
      %3916 = vmatprep.mubr.bf16.mxu0 0
      %3917 = vmatmul.mubr.bf16.gmra.mrb[0].mxu0 %v3178
      %v3918 = vpop.f32.mrb[0].mxu0
      %v3919 = vadd.f32 0.0, %v3918
      %v3920 = vpop.f32.mrb[0].mxu0
      %v3921 = vpop.f32.mrb[0].mxu0
      %v3922 = vadd.f32 0.0, %v3921
      %v3923 = vpop.f32.mrb[0].mxu0
      %3924 = vmatprep.mubr.bf16.mxu0 0
      %3925 = vmatmul.mubr.bf16.gmra.mrb[0].mxu0 %v3179
      %v3926 = vpop.f32.mrb[0].mxu0
      %v3927 = vadd.f32 0.0, %v3926
      %v3928 = vpop.f32.mrb[0].mxu0
      %v3929 = vpop.f32.mrb[0].mxu0
      %v3930 = vadd.f32 0.0, %v3929
      %v3931 = vpop.f32.mrb[0].mxu0
      %3932 = vmatprep.mubr.bf16.mxu0 0
      %3933 = vmatmul.mubr.bf16.gmra.mrb[0].mxu0 %v3466
      %v3934 = vpop.f32.mrb[0].mxu0
      %v3935 = vadd.f32 0.0, %v3934
      %v3936 = vpop.f32.mrb[0].mxu0
      %v3937 = vpop.f32.mrb[0].mxu0
      %v3938 = vadd.f32 0.0, %v3937
      %v3939 = vpop.f32.mrb[0].mxu0
      %3940 = vmatprep.mubr.bf16.mxu0 0
      %3941 = vmatmul.mubr.bf16.gmra.mrb[0].mxu0 %v3738
      %v3942 = vpop.f32.mrb[0].mxu0
      %v3943 = vadd.f32 0.0, %v3942
      %v3944 = vpop.f32.mrb[0].mxu0
      %v3945 = vpop.f32.mrb[0].mxu0
      %v3946 = vadd.f32 0.0, %v3945
      %v3947 = vpop.f32.mrb[0].mxu0
      %3948 = vdwg.mxu0
      %v3949 = vadd.f32 %v3677, %v3823
      %v3950 = vadd.f32 %v3678, %v3826
      %v3951 = vadd.f32 %v3679, %v3831
      %v3952 = vadd.f32 %v3680, %v3834
      %v3953 = vadd.f32 %v3681, %v3839
      %v3954 = vadd.f32 %v3682, %v3842
      %v3955 = vadd.f32 %v3683, %v3847
      %v3956 = vadd.f32 %v3684, %v3850
      %v3957 = vadd.f32 %v3685, %v3855
      %v3958 = vadd.f32 %v3686, %v3858
      %v3959 = vadd.f32 %v3687, %v3863
      %v3960 = vadd.f32 %v3688, %v3866
      %v3961 = vadd.f32 %v3689, %v3871
      %v3962 = vadd.f32 %v3690, %v3874
      %v3963 = vadd.f32 %v3691, %v3879
      %v3964 = vadd.f32 %v3692, %v3882
      %v3965 = vadd.f32 %v3693, %v3887
      %v3966 = vadd.f32 %v3694, %v3890
      %v3967 = vadd.f32 %v3695, %v3895
      %v3968 = vadd.f32 %v3696, %v3898
      %v3969 = vadd.f32 %v3697, %v3903
      %v3970 = vadd.f32 %v3698, %v3906
      %v3971 = vadd.f32 %v3699, %v3911
      %v3972 = vadd.f32 %v3700, %v3914
      %v3973 = vadd.f32 %v3701, %v3919
      %v3974 = vadd.f32 %v3702, %v3922
      %v3975 = vadd.f32 %v3703, %v3927
      %v3976 = vadd.f32 %v3704, %v3930
      %v3977 = vadd.f32 %v3705, %v3935
      %v3978 = vadd.f32 %v3706, %v3938
      %v3979 = vadd.f32 %v3707, %v3943
      %v3980 = vadd.f32 %v3708, %v3946
      %v3981 = vld [vmem:[%s2] sm:$0x1]
      %v3983 = vlaneseq
      %v3984 = vshrl.u32 %v3983, 7
      %v3985 = vsub.s32 0, %v3984
      %v3986 = vrot.slane %v3981, %v3985
      %v3988 = vadd.f32 %v3949, %v3986
      %v3989 = vadd.f32 %v3950, %v3986
      %v3990 = vadd.f32 %v3951, %v3986
      %v3991 = vadd.f32 %v3952, %v3986
      %v3992 = vadd.f32 %v3953, %v3986
      %v3993 = vadd.f32 %v3954, %v3986
      %v3994 = vadd.f32 %v3955, %v3986
      %v3995 = vadd.f32 %v3956, %v3986
      %v3996 = vadd.f32 %v3957, %v3986
      %v3997 = vadd.f32 %v3958, %v3986
      %v3998 = vadd.f32 %v3959, %v3986
      %v3999 = vadd.f32 %v3960, %v3986
      %v4000 = vadd.f32 %v3961, %v3986
      %v4001 = vadd.f32 %v3962, %v3986
      %v4002 = vadd.f32 %v3963, %v3986
      %v4003 = vadd.f32 %v3964, %v3986
      %v4004 = vadd.f32 %v3965, %v3986
      %v4005 = vadd.f32 %v3966, %v3986
      %v4006 = vadd.f32 %v3967, %v3986
      %v4007 = vadd.f32 %v3968, %v3986
      %v4008 = vadd.f32 %v3969, %v3986
      %v4009 = vadd.f32 %v3970, %v3986
      %v4010 = vadd.f32 %v3971, %v3986
      %v4011 = vadd.f32 %v3972, %v3986
      %v4012 = vadd.f32 %v3973, %v3986
      %v4013 = vadd.f32 %v3974, %v3986
      %v4014 = vadd.f32 %v3975, %v3986
      %v4015 = vadd.f32 %v3976, %v3986
      %v4016 = vadd.f32 %v3977, %v3986
      %v4017 = vadd.f32 %v3978, %v3986
      %v4018 = vadd.f32 %v3979, %v3986
      %v4019 = vadd.f32 %v3980, %v3986
      %v4020 = vmax.f32 %v3988, 0.0
      %v4021 = vmax.f32 %v3989, 0.0
      %v4022 = vmax.f32 %v3990, 0.0
      %v4023 = vmax.f32 %v3991, 0.0
      %v4024 = vmax.f32 %v3992, 0.0
      %v4025 = vmax.f32 %v3993, 0.0
      %v4026 = vmax.f32 %v3994, 0.0
      %v4027 = vmax.f32 %v3995, 0.0
      %v4028 = vmax.f32 %v3996, 0.0
      %v4029 = vmax.f32 %v3997, 0.0
      %v4030 = vmax.f32 %v3998, 0.0
      %v4031 = vmax.f32 %v3999, 0.0
      %v4032 = vmax.f32 %v4000, 0.0
      %v4033 = vmax.f32 %v4001, 0.0
      %v4034 = vmax.f32 %v4002, 0.0
      %v4035 = vmax.f32 %v4003, 0.0
      %v4036 = vmax.f32 %v4004, 0.0
      %v4037 = vmax.f32 %v4005, 0.0
      %v4038 = vmax.f32 %v4006, 0.0
      %v4039 = vmax.f32 %v4007, 0.0
      %v4040 = vmax.f32 %v4008, 0.0
      %v4041 = vmax.f32 %v4009, 0.0
      %v4042 = vmax.f32 %v4010, 0.0
      %v4043 = vmax.f32 %v4011, 0.0
      %v4044 = vmax.f32 %v4012, 0.0
      %v4045 = vmax.f32 %v4013, 0.0
      %v4046 = vmax.f32 %v4014, 0.0
      %v4047 = vmax.f32 %v4015, 0.0
      %v4048 = vmax.f32 %v4016, 0.0
      %v4049 = vmax.f32 %v4017, 0.0
      %v4050 = vmax.f32 %v4018, 0.0
      %v4051 = vmax.f32 %v4019, 0.0
      %v4052 = vld [vmem:[%s212] sm:$0xff]
      %v4053 = vld [vmem:[%s212 + $0x8] sm:$0xff]
      %v4054 = vld [vmem:[%s212 + $0x10] sm:$0xff]
      %v4055 = vld [vmem:[%s212 + $0x18] sm:$0xff]
      %v4056 = vld [vmem:[%s212 + $0x20] sm:$0xff]
      %v4057 = vld [vmem:[%s212 + $0x28] sm:$0xff]
      %v4058 = vld [vmem:[%s212 + $0x30] sm:$0xff]
      %v4059 = vld [vmem:[%s212 + $0x38] sm:$0xff]
      %v4060 = vld [vmem:[%s212 + $0x40] sm:$0xff]
      %v4061 = vld [vmem:[%s212 + $0x48] sm:$0xff]
      %v4062 = vld [vmem:[%s212 + $0x50] sm:$0xff]
      %v4063 = vld [vmem:[%s212 + $0x58] sm:$0xff]
      %v4064 = vld [vmem:[%s212 + $0x60] sm:$0xff]
      %v4065 = vld [vmem:[%s212 + $0x68] sm:$0xff]
      %v4066 = vld [vmem:[%s212 + $0x70] sm:$0xff]
      %v4067 = vld [vmem:[%s212 + $0x78] sm:$0xff]
      %v4068 = vld [vmem:[%s212 + $0x80] sm:$0xff]
      %v4069 = vld [vmem:[%s212 + $0x88] sm:$0xff]
      %v4070 = vld [vmem:[%s212 + $0x90] sm:$0xff]
      %v4071 = vld [vmem:[%s212 + $0x98] sm:$0xff]
      %v4072 = vld [vmem:[%s212 + $0xa0] sm:$0xff]
      %v4073 = vld [vmem:[%s212 + $0xa8] sm:$0xff]
      %v4074 = vld [vmem:[%s212 + $0xb0] sm:$0xff]
      %v4075 = vld [vmem:[%s212 + $0xb8] sm:$0xff]
      %v4076 = vld [vmem:[%s212 + $0xc0] sm:$0xff]
      %v4077 = vld [vmem:[%s212 + $0xc8] sm:$0xff]
      %v4078 = vld [vmem:[%s212 + $0xd0] sm:$0xff]
      %v4079 = vld [vmem:[%s212 + $0xd8] sm:$0xff]
      %v4080 = vld [vmem:[%s212 + $0xe0] sm:$0xff]
      %v4081 = vld [vmem:[%s212 + $0xe8] sm:$0xff]
      %v4082 = vld [vmem:[%s212 + $0xf0] sm:$0xff]
      %v4083 = vld [vmem:[%s212 + $0xf8] sm:$0xff]
      %v4084 = vlaneseq
      %v4085 = vshrl.u32 %v4084, 7
      %v4086 = vadd.s32 %v4085, 8
      %v4087 = vmul.u32 %v4085, 2
      %v4088 = vmul.u32 %v4086, 2
      %v4089 = vadd.s32 %v4087, 64
      %v4090 = vadd.s32 %v4088, 64
      %v4091 = vadd.s32 %v4087, 128
      %v4092 = vadd.s32 %v4088, 128
      %v4093 = vadd.s32 %v4087, 192
      %v4094 = vadd.s32 %v4088, 192
      %v4095 = vadd.s32 %v4087, 256
      %v4096 = vadd.s32 %v4088, 256
      %v4097 = vadd.s32 %v4087, 320
      %v4098 = vadd.s32 %v4088, 320
      %v4099 = vadd.s32 %v4087, 384
      %v4100 = vadd.s32 %v4088, 384
      %v4101 = vadd.s32 %v4087, 448
      %v4102 = vadd.s32 %v4088, 448
      %v4103 = vadd.s32 %v4087, 512
      %v4104 = vadd.s32 %v4088, 512
      %v4105 = vadd.s32 %v4087, 576
      %v4106 = vadd.s32 %v4088, 576
      %v4107 = vadd.s32 %v4087, 640
      %v4108 = vadd.s32 %v4088, 640
      %v4109 = vadd.s32 %v4087, 704
      %v4110 = vadd.s32 %v4088, 704
      %v4111 = vadd.s32 %v4087, 768
      %v4112 = vadd.s32 %v4088, 768
      %v4113 = vadd.s32 %v4087, 832
      %v4114 = vadd.s32 %v4088, 832
      %v4115 = vadd.s32 %v4087, 896
      %v4116 = vadd.s32 %v4088, 896
      %v4117 = vadd.s32 %v4087, 960
      %v4118 = vadd.s32 %v4088, 960
      %v4119 = vsub.s32 %v4052, %v4087
      %v4120 = vsub.s32 %v4053, %v4088
      %v4121 = vsub.s32 %v4054, %v4089
      %v4122 = vsub.s32 %v4055, %v4090
      %v4123 = vsub.s32 %v4056, %v4091
      %v4124 = vsub.s32 %v4057, %v4092
      %v4125 = vsub.s32 %v4058, %v4093
      %v4126 = vsub.s32 %v4059, %v4094
      %v4127 = vsub.s32 %v4060, %v4095
      %v4128 = vsub.s32 %v4061, %v4096
      %v4129 = vsub.s32 %v4062, %v4097
      %v4130 = vsub.s32 %v4063, %v4098
      %v4131 = vsub.s32 %v4064, %v4099
      %v4132 = vsub.s32 %v4065, %v4100
      %v4133 = vsub.s32 %v4066, %v4101
      %v4134 = vsub.s32 %v4067, %v4102
      %v4135 = vsub.s32 %v4068, %v4103
      %v4136 = vsub.s32 %v4069, %v4104
      %v4137 = vsub.s32 %v4070, %v4105
      %v4138 = vsub.s32 %v4071, %v4106
      %v4139 = vsub.s32 %v4072, %v4107
      %v4140 = vsub.s32 %v4073, %v4108
      %v4141 = vsub.s32 %v4074, %v4109
      %v4142 = vsub.s32 %v4075, %v4110
      %v4143 = vsub.s32 %v4076, %v4111
      %v4144 = vsub.s32 %v4077, %v4112
      %v4145 = vsub.s32 %v4078, %v4113
      %v4146 = vsub.s32 %v4079, %v4114
      %v4147 = vsub.s32 %v4080, %v4115
      %v4148 = vsub.s32 %v4081, %v4116
      %v4149 = vsub.s32 %v4082, %v4117
      %v4150 = vsub.s32 %v4083, %v4118
      %vm4151 = vcmp.eq.s32.totalorder %v4119, 0
      %vm4152 = vcmp.eq.s32.totalorder %v4120, 0
      %vm4153 = vcmp.eq.s32.totalorder %v4121, 0
      %vm4154 = vcmp.eq.s32.totalorder %v4122, 0
      %vm4155 = vcmp.eq.s32.totalorder %v4123, 0
      %vm4156 = vcmp.eq.s32.totalorder %v4124, 0
      %vm4157 = vcmp.eq.s32.totalorder %v4125, 0
      %vm4158 = vcmp.eq.s32.totalorder %v4126, 0
      %vm4159 = vcmp.eq.s32.totalorder %v4127, 0
      %vm4160 = vcmp.eq.s32.totalorder %v4128, 0
      %vm4161 = vcmp.eq.s32.totalorder %v4129, 0
      %vm4162 = vcmp.eq.s32.totalorder %v4130, 0
      %vm4163 = vcmp.eq.s32.totalorder %v4131, 0
      %vm4164 = vcmp.eq.s32.totalorder %v4132, 0
      %vm4165 = vcmp.eq.s32.totalorder %v4133, 0
      %vm4166 = vcmp.eq.s32.totalorder %v4134, 0
      %vm4167 = vcmp.eq.s32.totalorder %v4135, 0
      %vm4168 = vcmp.eq.s32.totalorder %v4136, 0
      %vm4169 = vcmp.eq.s32.totalorder %v4137, 0
      %vm4170 = vcmp.eq.s32.totalorder %v4138, 0
      %vm4171 = vcmp.eq.s32.totalorder %v4139, 0
      %vm4172 = vcmp.eq.s32.totalorder %v4140, 0
      %vm4173 = vcmp.eq.s32.totalorder %v4141, 0
      %vm4174 = vcmp.eq.s32.totalorder %v4142, 0
      %vm4175 = vcmp.eq.s32.totalorder %v4143, 0
      %vm4176 = vcmp.eq.s32.totalorder %v4144, 0
      %vm4177 = vcmp.eq.s32.totalorder %v4145, 0
      %vm4178 = vcmp.eq.s32.totalorder %v4146, 0
      %vm4179 = vcmp.eq.s32.totalorder %v4147, 0
      %vm4180 = vcmp.eq.s32.totalorder %v4148, 0
      %vm4181 = vcmp.eq.s32.totalorder %v4149, 0
      %vm4182 = vcmp.eq.s32.totalorder %v4150, 0
      %v4183 = vsel %vm4151, %v4020, 0.0
      %v4184 = vsel %vm4152, %v4021, 0.0
      %v4185 = vsel %vm4153, %v4022, 0.0
      %v4186 = vsel %vm4154, %v4023, 0.0
      %v4187 = vsel %vm4155, %v4024, 0.0
      %v4188 = vsel %vm4156, %v4025, 0.0
      %v4189 = vsel %vm4157, %v4026, 0.0
      %v4190 = vsel %vm4158, %v4027, 0.0
      %v4191 = vsel %vm4159, %v4028, 0.0
      %v4192 = vsel %vm4160, %v4029, 0.0
      %v4193 = vsel %vm4161, %v4030, 0.0
      %v4194 = vsel %vm4162, %v4031, 0.0
      %v4195 = vsel %vm4163, %v4032, 0.0
      %v4196 = vsel %vm4164, %v4033, 0.0
      %v4197 = vsel %vm4165, %v4034, 0.0
      %v4198 = vsel %vm4166, %v4035, 0.0
      %v4199 = vsel %vm4167, %v4036, 0.0
      %v4200 = vsel %vm4168, %v4037, 0.0
      %v4201 = vsel %vm4169, %v4038, 0.0
      %v4202 = vsel %vm4170, %v4039, 0.0
      %v4203 = vsel %vm4171, %v4040, 0.0
      %v4204 = vsel %vm4172, %v4041, 0.0
      %v4205 = vsel %vm4173, %v4042, 0.0
      %v4206 = vsel %vm4174, %v4043, 0.0
      %v4207 = vsel %vm4175, %v4044, 0.0
      %v4208 = vsel %vm4176, %v4045, 0.0
      %v4209 = vsel %vm4177, %v4046, 0.0
      %v4210 = vsel %vm4178, %v4047, 0.0
      %v4211 = vsel %vm4179, %v4048, 0.0
      %v4212 = vsel %vm4180, %v4049, 0.0
      %v4213 = vsel %vm4181, %v4050, 0.0
      %v4214 = vsel %vm4182, %v4051, 0.0
      %4215 = vst [vmem:[%s217] sm:$0xff] %v4183
      %4216 = vst [vmem:[%s217 + $0x10] sm:$0xff] %v4184
      %4217 = vst [vmem:[%s217 + $0x40] sm:$0xff] %v4185
      %4218 = vst [vmem:[%s217 + $0x50] sm:$0xff] %v4186
      %4219 = vst [vmem:[%s217 + $0x80] sm:$0xff] %v4187
      %4220 = vst [vmem:[%s217 + $0x90] sm:$0xff] %v4188
      %4221 = vst [vmem:[%s217 + $0xc0] sm:$0xff] %v4189
      %4222 = vst [vmem:[%s217 + $0xd0] sm:$0xff] %v4190
      %4223 = vst [vmem:[%s217 + $0x100] sm:$0xff] %v4191
      %4224 = vst [vmem:[%s217 + $0x110] sm:$0xff] %v4192
      %4225 = vst [vmem:[%s217 + $0x140] sm:$0xff] %v4193
      %4226 = vst [vmem:[%s217 + $0x150] sm:$0xff] %v4194
      %4227 = vst [vmem:[%s217 + $0x180] sm:$0xff] %v4195
      %4228 = vst [vmem:[%s217 + $0x190] sm:$0xff] %v4196
      %4229 = vst [vmem:[%s217 + $0x1c0] sm:$0xff] %v4197
      %4230 = vst [vmem:[%s217 + $0x1d0] sm:$0xff] %v4198
      %4231 = vst [vmem:[%s217 + $0x200] sm:$0xff] %v4199
      %4232 = vst [vmem:[%s217 + $0x210] sm:$0xff] %v4200
      %4233 = vst [vmem:[%s217 + $0x240] sm:$0xff] %v4201
      %4234 = vst [vmem:[%s217 + $0x250] sm:$0xff] %v4202
      %4235 = vst [vmem:[%s217 + $0x280] sm:$0xff] %v4203
      %4236 = vst [vmem:[%s217 + $0x290] sm:$0xff] %v4204
      %4237 = vst [vmem:[%s217 + $0x2c0] sm:$0xff] %v4205
      %4238 = vst [vmem:[%s217 + $0x2d0] sm:$0xff] %v4206
      %4239 = vst [vmem:[%s217 + $0x300] sm:$0xff] %v4207
      %4240 = vst [vmem:[%s217 + $0x310] sm:$0xff] %v4208
      %4241 = vst [vmem:[%s217 + $0x340] sm:$0xff] %v4209
      %4242 = vst [vmem:[%s217 + $0x350] sm:$0xff] %v4210
      %4243 = vst [vmem:[%s217 + $0x380] sm:$0xff] %v4211
      %4244 = vst [vmem:[%s217 + $0x390] sm:$0xff] %v4212
      %4245 = vst [vmem:[%s217 + $0x3c0] sm:$0xff] %v4213
      %4246 = vst [vmem:[%s217 + $0x3d0] sm:$0xff] %v4214
      %vm4247 = vcmp.eq.s32.totalorder %v4119, 1
      %vm4248 = vcmp.eq.s32.totalorder %v4120, 1
      %vm4249 = vcmp.eq.s32.totalorder %v4121, 1
      %vm4250 = vcmp.eq.s32.totalorder %v4122, 1
      %vm4251 = vcmp.eq.s32.totalorder %v4123, 1
      %vm4252 = vcmp.eq.s32.totalorder %v4124, 1
      %vm4253 = vcmp.eq.s32.totalorder %v4125, 1
      %vm4254 = vcmp.eq.s32.totalorder %v4126, 1
      %vm4255 = vcmp.eq.s32.totalorder %v4127, 1
      %vm4256 = vcmp.eq.s32.totalorder %v4128, 1
      %vm4257 = vcmp.eq.s32.totalorder %v4129, 1
      %vm4258 = vcmp.eq.s32.totalorder %v4130, 1
      %vm4259 = vcmp.eq.s32.totalorder %v4131, 1
      %vm4260 = vcmp.eq.s32.totalorder %v4132, 1
      %vm4261 = vcmp.eq.s32.totalorder %v4133, 1
      %vm4262 = vcmp.eq.s32.totalorder %v4134, 1
      %vm4263 = vcmp.eq.s32.totalorder %v4135, 1
      %vm4264 = vcmp.eq.s32.totalorder %v4136, 1
      %vm4265 = vcmp.eq.s32.totalorder %v4137, 1
      %vm4266 = vcmp.eq.s32.totalorder %v4138, 1
      %vm4267 = vcmp.eq.s32.totalorder %v4139, 1
      %vm4268 = vcmp.eq.s32.totalorder %v4140, 1
      %vm4269 = vcmp.eq.s32.totalorder %v4141, 1
      %vm4270 = vcmp.eq.s32.totalorder %v4142, 1
      %vm4271 = vcmp.eq.s32.totalorder %v4143, 1
      %vm4272 = vcmp.eq.s32.totalorder %v4144, 1
      %vm4273 = vcmp.eq.s32.totalorder %v4145, 1
      %vm4274 = vcmp.eq.s32.totalorder %v4146, 1
      %vm4275 = vcmp.eq.s32.totalorder %v4147, 1
      %vm4276 = vcmp.eq.s32.totalorder %v4148, 1
      %vm4277 = vcmp.eq.s32.totalorder %v4149, 1
      %vm4278 = vcmp.eq.s32.totalorder %v4150, 1
      %v4279 = vsel %vm4247, %v4020, 0.0
      %v4280 = vsel %vm4248, %v4021, 0.0
      %v4281 = vsel %vm4249, %v4022, 0.0
      %v4282 = vsel %vm4250, %v4023, 0.0
      %v4283 = vsel %vm4251, %v4024, 0.0
      %v4284 = vsel %vm4252, %v4025, 0.0
      %v4285 = vsel %vm4253, %v4026, 0.0
      %v4286 = vsel %vm4254, %v4027, 0.0
      %v4287 = vsel %vm4255, %v4028, 0.0
      %v4288 = vsel %vm4256, %v4029, 0.0
      %v4289 = vsel %vm4257, %v4030, 0.0
      %v4290 = vsel %vm4258, %v4031, 0.0
      %v4291 = vsel %vm4259, %v4032, 0.0
      %v4292 = vsel %vm4260, %v4033, 0.0
      %v4293 = vsel %vm4261, %v4034, 0.0
      %v4294 = vsel %vm4262, %v4035, 0.0
      %v4295 = vsel %vm4263, %v4036, 0.0
      %v4296 = vsel %vm4264, %v4037, 0.0
      %v4297 = vsel %vm4265, %v4038, 0.0
      %v4298 = vsel %vm4266, %v4039, 0.0
      %v4299 = vsel %vm4267, %v4040, 0.0
      %v4300 = vsel %vm4268, %v4041, 0.0
      %v4301 = vsel %vm4269, %v4042, 0.0
      %v4302 = vsel %vm4270, %v4043, 0.0
      %v4303 = vsel %vm4271, %v4044, 0.0
      %v4304 = vsel %vm4272, %v4045, 0.0
      %v4305 = vsel %vm4273, %v4046, 0.0
      %v4306 = vsel %vm4274, %v4047, 0.0
      %v4307 = vsel %vm4275, %v4048, 0.0
      %v4308 = vsel %vm4276, %v4049, 0.0
      %v4309 = vsel %vm4277, %v4050, 0.0
      %v4310 = vsel %vm4278, %v4051, 0.0
      %4311 = vst [vmem:[%s217 + $0x8] sm:$0xff] %v4279
      %4312 = vst [vmem:[%s217 + $0x18] sm:$0xff] %v4280
      %4313 = vst [vmem:[%s217 + $0x48] sm:$0xff] %v4281
      %4314 = vst [vmem:[%s217 + $0x58] sm:$0xff] %v4282
      %4315 = vst [vmem:[%s217 + $0x88] sm:$0xff] %v4283
      %4316 = vst [vmem:[%s217 + $0x98] sm:$0xff] %v4284
      %4317 = vst [vmem:[%s217 + $0xc8] sm:$0xff] %v4285
      %4318 = vst [vmem:[%s217 + $0xd8] sm:$0xff] %v4286
      %4319 = vst [vmem:[%s217 + $0x108] sm:$0xff] %v4287
      %4320 = vst [vmem:[%s217 + $0x118] sm:$0xff] %v4288
      %4321 = vst [vmem:[%s217 + $0x148] sm:$0xff] %v4289
      %4322 = vst [vmem:[%s217 + $0x158] sm:$0xff] %v4290
      %4323 = vst [vmem:[%s217 + $0x188] sm:$0xff] %v4291
      %4324 = vst [vmem:[%s217 + $0x198] sm:$0xff] %v4292
      %4325 = vst [vmem:[%s217 + $0x1c8] sm:$0xff] %v4293
      %4326 = vst [vmem:[%s217 + $0x1d8] sm:$0xff] %v4294
      %4327 = vst [vmem:[%s217 + $0x208] sm:$0xff] %v4295
      %4328 = vst [vmem:[%s217 + $0x218] sm:$0xff] %v4296
      %4329 = vst [vmem:[%s217 + $0x248] sm:$0xff] %v4297
      %4330 = vst [vmem:[%s217 + $0x258] sm:$0xff] %v4298
      %4331 = vst [vmem:[%s217 + $0x288] sm:$0xff] %v4299
      %4332 = vst [vmem:[%s217 + $0x298] sm:$0xff] %v4300
      %4333 = vst [vmem:[%s217 + $0x2c8] sm:$0xff] %v4301
      %4334 = vst [vmem:[%s217 + $0x2d8] sm:$0xff] %v4302
      %4335 = vst [vmem:[%s217 + $0x308] sm:$0xff] %v4303
      %4336 = vst [vmem:[%s217 + $0x318] sm:$0xff] %v4304
      %4337 = vst [vmem:[%s217 + $0x348] sm:$0xff] %v4305
      %4338 = vst [vmem:[%s217 + $0x358] sm:$0xff] %v4306
      %4339 = vst [vmem:[%s217 + $0x388] sm:$0xff] %v4307
      %4340 = vst [vmem:[%s217 + $0x398] sm:$0xff] %v4308
      %4341 = vst [vmem:[%s217 + $0x3c8] sm:$0xff] %v4309
      %4342 = vst [vmem:[%s217 + $0x3d8] sm:$0xff] %v4310
      %vm4343 = vcmp.eq.s32.totalorder %v4119, 32
      %vm4344 = vcmp.eq.s32.totalorder %v4120, 32
      %vm4345 = vcmp.eq.s32.totalorder %v4121, 32
      %vm4346 = vcmp.eq.s32.totalorder %v4122, 32
      %vm4347 = vcmp.eq.s32.totalorder %v4123, 32
      %vm4348 = vcmp.eq.s32.totalorder %v4124, 32
      %vm4349 = vcmp.eq.s32.totalorder %v4125, 32
      %vm4350 = vcmp.eq.s32.totalorder %v4126, 32
      %vm4351 = vcmp.eq.s32.totalorder %v4127, 32
      %vm4352 = vcmp.eq.s32.totalorder %v4128, 32
      %vm4353 = vcmp.eq.s32.totalorder %v4129, 32
      %vm4354 = vcmp.eq.s32.totalorder %v4130, 32
      %vm4355 = vcmp.eq.s32.totalorder %v4131, 32
      %vm4356 = vcmp.eq.s32.totalorder %v4132, 32
      %vm4357 = vcmp.eq.s32.totalorder %v4133, 32
      %vm4358 = vcmp.eq.s32.totalorder %v4134, 32
      %vm4359 = vcmp.eq.s32.totalorder %v4135, 32
      %vm4360 = vcmp.eq.s32.totalorder %v4136, 32
      %vm4361 = vcmp.eq.s32.totalorder %v4137, 32
      %vm4362 = vcmp.eq.s32.totalorder %v4138, 32
      %vm4363 = vcmp.eq.s32.totalorder %v4139, 32
      %vm4364 = vcmp.eq.s32.totalorder %v4140, 32
      %vm4365 = vcmp.eq.s32.totalorder %v4141, 32
      %vm4366 = vcmp.eq.s32.totalorder %v4142, 32
      %vm4367 = vcmp.eq.s32.totalorder %v4143, 32
      %vm4368 = vcmp.eq.s32.totalorder %v4144, 32
      %vm4369 = vcmp.eq.s32.totalorder %v4145, 32
      %vm4370 = vcmp.eq.s32.totalorder %v4146, 32
      %vm4371 = vcmp.eq.s32.totalorder %v4147, 32
      %vm4372 = vcmp.eq.s32.totalorder %v4148, 32
      %vm4373 = vcmp.eq.s32.totalorder %v4149, 32
      %vm4374 = vcmp.eq.s32.totalorder %v4150, 32
      %v4375 = vsel %vm4343, %v4020, 0.0
      %v4376 = vsel %vm4344, %v4021, 0.0
      %v4377 = vsel %vm4345, %v4022, 0.0
      %v4378 = vsel %vm4346, %v4023, 0.0
      %v4379 = vsel %vm4347, %v4024, 0.0
      %v4380 = vsel %vm4348, %v4025, 0.0
      %v4381 = vsel %vm4349, %v4026, 0.0
      %v4382 = vsel %vm4350, %v4027, 0.0
      %v4383 = vsel %vm4351, %v4028, 0.0
      %v4384 = vsel %vm4352, %v4029, 0.0
      %v4385 = vsel %vm4353, %v4030, 0.0
      %v4386 = vsel %vm4354, %v4031, 0.0
      %v4387 = vsel %vm4355, %v4032, 0.0
      %v4388 = vsel %vm4356, %v4033, 0.0
      %v4389 = vsel %vm4357, %v4034, 0.0
      %v4390 = vsel %vm4358, %v4035, 0.0
      %v4391 = vsel %vm4359, %v4036, 0.0
      %v4392 = vsel %vm4360, %v4037, 0.0
      %v4393 = vsel %vm4361, %v4038, 0.0
      %v4394 = vsel %vm4362, %v4039, 0.0
      %v4395 = vsel %vm4363, %v4040, 0.0
      %v4396 = vsel %vm4364, %v4041, 0.0
      %v4397 = vsel %vm4365, %v4042, 0.0
      %v4398 = vsel %vm4366, %v4043, 0.0
      %v4399 = vsel %vm4367, %v4044, 0.0
      %v4400 = vsel %vm4368, %v4045, 0.0
      %v4401 = vsel %vm4369, %v4046, 0.0
      %v4402 = vsel %vm4370, %v4047, 0.0
      %v4403 = vsel %vm4371, %v4048, 0.0
      %v4404 = vsel %vm4372, %v4049, 0.0
      %v4405 = vsel %vm4373, %v4050, 0.0
      %v4406 = vsel %vm4374, %v4051, 0.0
      %s4407 = scalar_lea.vmem %s217, 32
      %4408 = vst [vmem:[%s4407] sm:$0xff] %v4375
      %4409 = vst [vmem:[%s4407 + $0x10] sm:$0xff] %v4376
      %4410 = vst [vmem:[%s4407 + $0x40] sm:$0xff] %v4377
      %4411 = vst [vmem:[%s4407 + $0x50] sm:$0xff] %v4378
      %4412 = vst [vmem:[%s4407 + $0x80] sm:$0xff] %v4379
      %4413 = vst [vmem:[%s4407 + $0x90] sm:$0xff] %v4380
      %4414 = vst [vmem:[%s4407 + $0xc0] sm:$0xff] %v4381
      %4415 = vst [vmem:[%s4407 + $0xd0] sm:$0xff] %v4382
      %4416 = vst [vmem:[%s4407 + $0x100] sm:$0xff] %v4383
      %4417 = vst [vmem:[%s4407 + $0x110] sm:$0xff] %v4384
      %4418 = vst [vmem:[%s4407 + $0x140] sm:$0xff] %v4385
      %4419 = vst [vmem:[%s4407 + $0x150] sm:$0xff] %v4386
      %4420 = vst [vmem:[%s4407 + $0x180] sm:$0xff] %v4387
      %4421 = vst [vmem:[%s4407 + $0x190] sm:$0xff] %v4388
      %4422 = vst [vmem:[%s4407 + $0x1c0] sm:$0xff] %v4389
      %4423 = vst [vmem:[%s4407 + $0x1d0] sm:$0xff] %v4390
      %4424 = vst [vmem:[%s4407 + $0x200] sm:$0xff] %v4391
      %4425 = vst [vmem:[%s4407 + $0x210] sm:$0xff] %v4392
      %4426 = vst [vmem:[%s4407 + $0x240] sm:$0xff] %v4393
      %4427 = vst [vmem:[%s4407 + $0x250] sm:$0xff] %v4394
      %4428 = vst [vmem:[%s4407 + $0x280] sm:$0xff] %v4395
      %4429 = vst [vmem:[%s4407 + $0x290] sm:$0xff] %v4396
      %4430 = vst [vmem:[%s4407 + $0x2c0] sm:$0xff] %v4397
      %4431 = vst [vmem:[%s4407 + $0x2d0] sm:$0xff] %v4398
      %4432 = vst [vmem:[%s4407 + $0x300] sm:$0xff] %v4399
      %4433 = vst [vmem:[%s4407 + $0x310] sm:$0xff] %v4400
      %4434 = vst [vmem:[%s4407 + $0x340] sm:$0xff] %v4401
      %4435 = vst [vmem:[%s4407 + $0x350] sm:$0xff] %v4402
      %4436 = vst [vmem:[%s4407 + $0x380] sm:$0xff] %v4403
      %4437 = vst [vmem:[%s4407 + $0x390] sm:$0xff] %v4404
      %4438 = vst [vmem:[%s4407 + $0x3c0] sm:$0xff] %v4405
      %4439 = vst [vmem:[%s4407 + $0x3d0] sm:$0xff] %v4406
      %vm4440 = vcmp.eq.s32.totalorder %v4119, 33
      %vm4441 = vcmp.eq.s32.totalorder %v4120, 33
      %vm4442 = vcmp.eq.s32.totalorder %v4121, 33
      %vm4443 = vcmp.eq.s32.totalorder %v4122, 33
      %vm4444 = vcmp.eq.s32.totalorder %v4123, 33
      %vm4445 = vcmp.eq.s32.totalorder %v4124, 33
      %vm4446 = vcmp.eq.s32.totalorder %v4125, 33
      %vm4447 = vcmp.eq.s32.totalorder %v4126, 33
      %vm4448 = vcmp.eq.s32.totalorder %v4127, 33
      %vm4449 = vcmp.eq.s32.totalorder %v4128, 33
      %vm4450 = vcmp.eq.s32.totalorder %v4129, 33
      %vm4451 = vcmp.eq.s32.totalorder %v4130, 33
      %vm4452 = vcmp.eq.s32.totalorder %v4131, 33
      %vm4453 = vcmp.eq.s32.totalorder %v4132, 33
      %vm4454 = vcmp.eq.s32.totalorder %v4133, 33
      %vm4455 = vcmp.eq.s32.totalorder %v4134, 33
      %vm4456 = vcmp.eq.s32.totalorder %v4135, 33
      %vm4457 = vcmp.eq.s32.totalorder %v4136, 33
      %vm4458 = vcmp.eq.s32.totalorder %v4137, 33
      %vm4459 = vcmp.eq.s32.totalorder %v4138, 33
      %vm4460 = vcmp.eq.s32.totalorder %v4139, 33
      %vm4461 = vcmp.eq.s32.totalorder %v4140, 33
      %vm4462 = vcmp.eq.s32.totalorder %v4141, 33
      %vm4463 = vcmp.eq.s32.totalorder %v4142, 33
      %vm4464 = vcmp.eq.s32.totalorder %v4143, 33
      %vm4465 = vcmp.eq.s32.totalorder %v4144, 33
      %vm4466 = vcmp.eq.s32.totalorder %v4145, 33
      %vm4467 = vcmp.eq.s32.totalorder %v4146, 33
      %vm4468 = vcmp.eq.s32.totalorder %v4147, 33
      %vm4469 = vcmp.eq.s32.totalorder %v4148, 33
      %vm4470 = vcmp.eq.s32.totalorder %v4149, 33
      %vm4471 = vcmp.eq.s32.totalorder %v4150, 33
      %v4472 = vsel %vm4440, %v4020, 0.0
      %v4473 = vsel %vm4441, %v4021, 0.0
      %v4474 = vsel %vm4442, %v4022, 0.0
      %v4475 = vsel %vm4443, %v4023, 0.0
      %v4476 = vsel %vm4444, %v4024, 0.0
      %v4477 = vsel %vm4445, %v4025, 0.0
      %v4478 = vsel %vm4446, %v4026, 0.0
      %v4479 = vsel %vm4447, %v4027, 0.0
      %v4480 = vsel %vm4448, %v4028, 0.0
      %v4481 = vsel %vm4449, %v4029, 0.0
      %v4482 = vsel %vm4450, %v4030, 0.0
      %v4483 = vsel %vm4451, %v4031, 0.0
      %v4484 = vsel %vm4452, %v4032, 0.0
      %v4485 = vsel %vm4453, %v4033, 0.0
      %v4486 = vsel %vm4454, %v4034, 0.0
      %v4487 = vsel %vm4455, %v4035, 0.0
      %v4488 = vsel %vm4456, %v4036, 0.0
      %v4489 = vsel %vm4457, %v4037, 0.0
      %v4490 = vsel %vm4458, %v4038, 0.0
      %v4491 = vsel %vm4459, %v4039, 0.0
      %v4492 = vsel %vm4460, %v4040, 0.0
      %v4493 = vsel %vm4461, %v4041, 0.0
      %v4494 = vsel %vm4462, %v4042, 0.0
      %v4495 = vsel %vm4463, %v4043, 0.0
      %v4496 = vsel %vm4464, %v4044, 0.0
      %v4497 = vsel %vm4465, %v4045, 0.0
      %v4498 = vsel %vm4466, %v4046, 0.0
      %v4499 = vsel %vm4467, %v4047, 0.0
      %v4500 = vsel %vm4468, %v4048, 0.0
      %v4501 = vsel %vm4469, %v4049, 0.0
      %v4502 = vsel %vm4470, %v4050, 0.0
      %v4503 = vsel %vm4471, %v4051, 0.0
      %4504 = vst [vmem:[%s4407 + $0x8] sm:$0xff] %v4472
      %4505 = vst [vmem:[%s4407 + $0x18] sm:$0xff] %v4473
      %4506 = vst [vmem:[%s4407 + $0x48] sm:$0xff] %v4474
      %4507 = vst [vmem:[%s4407 + $0x58] sm:$0xff] %v4475
      %4508 = vst [vmem:[%s4407 + $0x88] sm:$0xff] %v4476
      %4509 = vst [vmem:[%s4407 + $0x98] sm:$0xff] %v4477
      %4510 = vst [vmem:[%s4407 + $0xc8] sm:$0xff] %v4478
      %4511 = vst [vmem:[%s4407 + $0xd8] sm:$0xff] %v4479
      %4512 = vst [vmem:[%s4407 + $0x108] sm:$0xff] %v4480
      %4513 = vst [vmem:[%s4407 + $0x118] sm:$0xff] %v4481
      %4514 = vst [vmem:[%s4407 + $0x148] sm:$0xff] %v4482
      %4515 = vst [vmem:[%s4407 + $0x158] sm:$0xff] %v4483
      %4516 = vst [vmem:[%s4407 + $0x188] sm:$0xff] %v4484
      %4517 = vst [vmem:[%s4407 + $0x198] sm:$0xff] %v4485
      %4518 = vst [vmem:[%s4407 + $0x1c8] sm:$0xff] %v4486
      %4519 = vst [vmem:[%s4407 + $0x1d8] sm:$0xff] %v4487
      %4520 = vst [vmem:[%s4407 + $0x208] sm:$0xff] %v4488
      %4521 = vst [vmem:[%s4407 + $0x218] sm:$0xff] %v4489
      %4522 = vst [vmem:[%s4407 + $0x248] sm:$0xff] %v4490
      %4523 = vst [vmem:[%s4407 + $0x258] sm:$0xff] %v4491
      %4524 = vst [vmem:[%s4407 + $0x288] sm:$0xff] %v4492
      %4525 = vst [vmem:[%s4407 + $0x298] sm:$0xff] %v4493
      %4526 = vst [vmem:[%s4407 + $0x2c8] sm:$0xff] %v4494
      %4527 = vst [vmem:[%s4407 + $0x2d8] sm:$0xff] %v4495
      %4528 = vst [vmem:[%s4407 + $0x308] sm:$0xff] %v4496
      %4529 = vst [vmem:[%s4407 + $0x318] sm:$0xff] %v4497
      %4530 = vst [vmem:[%s4407 + $0x348] sm:$0xff] %v4498
      %4531 = vst [vmem:[%s4407 + $0x358] sm:$0xff] %v4499
      %4532 = vst [vmem:[%s4407 + $0x388] sm:$0xff] %v4500
      %4533 = vst [vmem:[%s4407 + $0x398] sm:$0xff] %v4501
      %4534 = vst [vmem:[%s4407 + $0x3c8] sm:$0xff] %v4502
      %4535 = vst [vmem:[%s4407 + $0x3d8] sm:$0xff] %v4503
      %p4536 = scmp.lt.s32.totalorder %s15, 1
      %s4537 = scalar_select %p4536, %s15, 1
      %s4538 = smul.addr %s4537, 128
      %s4539 = smul.addr %s4538, 8
      %s4540 = scalar_lea.vmem %s4, %s4539
      // Predicated region
      $region37: #{upblock_forward.1} parent=35 // pred_check
        %p4541 = pneg %p127
      $region38: #{upblock_forward.1} parent=35 // pred_check_branch
        %4543 = sbr.rel (%p4541) target = $region40
      $region39: #{upblock_forward.1} parent=35 // pred_region
        _
      $region40: #{upblock_forward.1} parent=35 // pred_fallthru
        _
    $region36: #{upblock_forward.1} parent=5 // pred_fallthru
      _
    %p4544 = scmp.le.s32.totalorder 2, %s10
    // Predicated region
    $region41: #{upblock_forward.1} parent=5 // pred_check
      %p4545 = pneg %p4544
    $region42: #{upblock_forward.1} parent=5 // pred_check_branch
      %4547 = sbr.rel (%p4545) target = $region44
    $region43: #{upblock_forward.1} parent=5 // pred_region
      %s4548 = ssub.s32 %s10, 2
      // Predicated region
      $region45: #{upblock_forward.1} parent=43 // pred_check
        %p4549 = pneg %p133
      $region46: #{upblock_forward.1} parent=43 // pred_check_branch
        %4551 = sbr.rel (%p4549) target = $region48
      $region47: #{upblock_forward.1} parent=43 // pred_region
        %p4552 = scmp.lt.s32.totalorder %s16, 1
        %s4553 = scalar_select %p4552, %s16, 1
        %s4554 = smul.addr %s4553, 128
        %s4555 = smul.addr %s4554, 8
        %s4556 = scalar_lea.vmem %s4, %s4555
      $region48: #{upblock_forward.1} parent=43 // pred_fallthru
        _
    $region44: #{upblock_forward.1} parent=5 // pred_fallthru
      _
  $region6: #{upblock_forward.1} parent=0 // loop_footer
    %s14 = sadd.s32 1, %s10
  $region7: #{upblock_forward.1} parent=0 // loop_footer_branch
    %9 = sbr.rel target = $region3
  $region8: #{upblock_forward.1} parent=0 // loop_exit
    _

</llo_original>
